<compile_context>
chip_gen: v7x
topology: tpu7x:2x2x1
jax: 0.10.0
libtpu: 0.0.40
codegen_flags: <defaults>
</compile_context>

<pallas_src>
import functools

import jax
import jax.numpy as jnp
from jax.experimental import pallas as pl
from jax.experimental.pallas import tpu as pltpu


def cnn1_kernel(xp_ref, w_ref, b_ref, o_ref, *, k, eps):
    """Fused direct conv + train-mode BatchNorm2d + ReLU.

    xp_ref: (N, Cin, Hp, Wp) VMEM   spatially zero-padded input
    w_ref:  (Cout*Cin*K*K,)  SMEM   conv weights, flattened OIHW order
    b_ref:  (Cout,)          SMEM   conv bias
    o_ref:  (N, Cout, Ho, Wo) VMEM  NCHW output, written directly
    """
    n, cin, _, _ = xp_ref.shape
    _, cout, ho, wo = o_ref.shape
    inv_m = 1.0 / float(n * ho * wo)

    # ---- direct convolution, fully unrolled (tiny C / K) -------------------
    # accs[co][nb] is a (Ho, Wo) f32 accumulator (2 vregs each).
    accs = [[jnp.zeros((ho, wo), jnp.float32) for _ in range(n)]
            for _ in range(cout)]
    for nb in range(n):
        for ci in range(cin):
            img = xp_ref[nb, ci]                           # (Hp, Wp)
            for kh in range(k):
                for kw in range(k):
                    patch = img[kh:kh + ho, kw:kw + wo]    # (Ho, Wo)
                    for co in range(cout):
                        wv = w_ref[((co * cin + ci) * k + kh) * k + kw]
                        accs[co][nb] = accs[co][nb] + wv * patch

    # ---- per-channel BatchNorm2d (train mode: batch stats, biased var) -----
    for co in range(cout):
        conv = [accs[co][nb] + b_ref[co] for nb in range(n)]   # + conv bias

        s = jnp.zeros((1, 1), jnp.float32)
        for nb in range(n):
            s = s + jnp.sum(jnp.sum(conv[nb], axis=1, keepdims=True),
                            axis=0, keepdims=True)
        mean = s * inv_m                                       # (1, 1)

        cent = [conv[nb] - mean for nb in range(n)]
        s2 = jnp.zeros((1, 1), jnp.float32)
        for nb in range(n):
            s2 = s2 + jnp.sum(jnp.sum(cent[nb] * cent[nb], axis=1,
                                      keepdims=True),
                              axis=0, keepdims=True)
        inv_std = jax.lax.rsqrt(s2 * inv_m + eps)              # (1, 1)

        # ReLU + store straight into the NCHW output block.
        for nb in range(n):
            o_ref[nb, co] = jnp.maximum(cent[nb] * inv_std, 0.0)


def cnn1_forward(x, weight, bias, pad, eps=1e-5):
    """x: (N, C, H, W) f32; weight: (Cout, Cin, K, K); bias: (Cout,)."""
    n, c, h, w = x.shape
    cout, cin, k, _ = weight.shape
    assert cin == c and cout == c

    ho = h + 2 * pad - k + 1
    wo = w + 2 * pad - k + 1

    # Only wrapper-side ops: one tiny spatial zero-pad and a constant-foldable
    # weight flatten.  No im2col, no contraction padding, no output transpose.
    xp = jnp.pad(x.astype(jnp.float32),
                 ((0, 0), (0, 0), (pad, pad), (pad, pad)))
    w_flat = weight.astype(jnp.float32).reshape(-1)        # (Cout*Cin*K*K,)

    return pl.pallas_call(
        functools.partial(cnn1_kernel, k=k, eps=eps),
        out_shape=jax.ShapeDtypeStruct((n, cout, ho, wo), jnp.float32),
        in_specs=[
            pl.BlockSpec(memory_space=pltpu.MemorySpace.VMEM),   # padded x
            pl.BlockSpec(memory_space=pltpu.MemorySpace.SMEM),   # weights
            pl.BlockSpec(memory_space=pltpu.MemorySpace.SMEM),   # bias
        ],
        out_specs=pl.BlockSpec(memory_space=pltpu.MemorySpace.VMEM),
    )(xp, w_flat, bias.astype(jnp.float32))


def cnn1_reference(x, weight, bias, pad, eps=1e-5):
    """Pure-JAX reference mirroring the PyTorch forward (train-mode BN)."""
    out = jax.lax.conv_general_dilated(
        x, weight, window_strides=(1, 1),
        padding=[(pad, pad), (pad, pad)],
        dimension_numbers=("NCHW", "OIHW", "NCHW"),
    )
    out = out + bias.reshape(1, -1, 1, 1)
    mean = jnp.mean(out, axis=(0, 2, 3), keepdims=True)
    var = jnp.mean((out - mean) ** 2, axis=(0, 2, 3), keepdims=True)
    out = (out - mean) * jax.lax.rsqrt(var + eps)
    return jnp.maximum(out, 0.0)


if __name__ == "__main__":
    # CNN1(channel=4, map_size=3, pad=1) on a (2, 4, 16, 16) input.
    channel, map_size, pad = 4, 3, 1
    n, h, w = 2, 16, 16

    key = jax.random.PRNGKey(0)
    x = jax.random.normal(key, (n, channel, h, w), dtype=jnp.float32)

    # Deterministic parameters, exactly as in __init__:
    weight = jnp.ones((channel, channel, map_size, map_size), jnp.float32)
    bias = jnp.zeros((channel,), jnp.float32)

    out = jax.block_until_ready(cnn1_forward(x, weight, bias, pad))
    ref = jax.block_until_ready(cnn1_reference(x, weight, bias, pad))

    assert out.shape == (n, channel, h, w)
    assert jnp.allclose(out, ref, rtol=1e-4, atol=1e-4), (
        float(jnp.max(jnp.abs(out - ref)))
    )

    print("KERNEL_OK")
</pallas_src>

<mosaic_0001>
module attributes {stable_mosaic.version = 11 : i64} {
  func.func @cnn1_kernel(%arg0: memref<2x4x18x18xf32, #tpu.memory_space<vmem>>, %arg1: memref<144xf32, #tpu.memory_space<smem>>, %arg2: memref<4xf32, #tpu.memory_space<smem>>, %arg3: memref<2x4x16x16xf32, #tpu.memory_space<vmem>>) attributes {dimension_semantics = [], scalar_prefetch = 0 : i64, scratch_operands = 0 : i64, tpu.core_type = #tpu.core_type<tc>} {
    %cst = arith.constant 0.000000e+00 : f32
    %0 = vector.broadcast %cst : f32 to vector<16x16xf32>
    %cst_0 = arith.constant 0.000000e+00 : f32
    %1 = vector.broadcast %cst_0 : f32 to vector<16x16xf32>
    %cst_1 = arith.constant 0.000000e+00 : f32
    %2 = vector.broadcast %cst_1 : f32 to vector<16x16xf32>
    %cst_2 = arith.constant 0.000000e+00 : f32
    %3 = vector.broadcast %cst_2 : f32 to vector<16x16xf32>
    %cst_3 = arith.constant 0.000000e+00 : f32
    %4 = vector.broadcast %cst_3 : f32 to vector<16x16xf32>
    %cst_4 = arith.constant 0.000000e+00 : f32
    %5 = vector.broadcast %cst_4 : f32 to vector<16x16xf32>
    %cst_5 = arith.constant 0.000000e+00 : f32
    %6 = vector.broadcast %cst_5 : f32 to vector<16x16xf32>
    %cst_6 = arith.constant 0.000000e+00 : f32
    %7 = vector.broadcast %cst_6 : f32 to vector<16x16xf32>
    %c0 = arith.constant 0 : index
    %c0_7 = arith.constant 0 : index
    %c0_8 = arith.constant 0 : index
    %c0_9 = arith.constant 0 : index
    %8 = vector.load %arg0[%c0, %c0_7, %c0_8, %c0_9] : memref<2x4x18x18xf32, #tpu.memory_space<vmem>>, vector<1x1x18x18xf32>
    %9 = vector.shape_cast %8 : vector<1x1x18x18xf32> to vector<18x18xf32>
    %10 = vector.extract_strided_slice %9 {offsets = [0, 0], sizes = [16, 16], strides = [1, 1]} : vector<18x18xf32> to vector<16x16xf32>
    %c0_10 = arith.constant 0 : index
    %11 = memref.load %arg1[%c0_10] : memref<144xf32, #tpu.memory_space<smem>>
    %12 = vector.broadcast %11 : f32 to vector<16x16xf32>
    %13 = arith.mulf %12, %10 : vector<16x16xf32>
    %14 = arith.addf %0, %13 : vector<16x16xf32>
    %c36 = arith.constant 36 : index
    %15 = memref.load %arg1[%c36] : memref<144xf32, #tpu.memory_space<smem>>
    %16 = vector.broadcast %15 : f32 to vector<16x16xf32>
    %17 = arith.mulf %16, %10 : vector<16x16xf32>
    %18 = arith.addf %2, %17 : vector<16x16xf32>
    %c72 = arith.constant 72 : index
    %19 = memref.load %arg1[%c72] : memref<144xf32, #tpu.memory_space<smem>>
    %20 = vector.broadcast %19 : f32 to vector<16x16xf32>
    %21 = arith.mulf %20, %10 : vector<16x16xf32>
    %22 = arith.addf %4, %21 : vector<16x16xf32>
    %c108 = arith.constant 108 : index
    %23 = memref.load %arg1[%c108] : memref<144xf32, #tpu.memory_space<smem>>
    %24 = vector.broadcast %23 : f32 to vector<16x16xf32>
    %25 = arith.mulf %24, %10 : vector<16x16xf32>
    %26 = arith.addf %6, %25 : vector<16x16xf32>
    %27 = vector.extract_strided_slice %9 {offsets = [0, 1], sizes = [16, 16], strides = [1, 1]} : vector<18x18xf32> to vector<16x16xf32>
    %c1 = arith.constant 1 : index
    %28 = memref.load %arg1[%c1] : memref<144xf32, #tpu.memory_space<smem>>
    %29 = vector.broadcast %28 : f32 to vector<16x16xf32>
    %30 = arith.mulf %29, %27 : vector<16x16xf32>
    %31 = arith.addf %14, %30 : vector<16x16xf32>
    %c37 = arith.constant 37 : index
    %32 = memref.load %arg1[%c37] : memref<144xf32, #tpu.memory_space<smem>>
    %33 = vector.broadcast %32 : f32 to vector<16x16xf32>
    %34 = arith.mulf %33, %27 : vector<16x16xf32>
    %35 = arith.addf %18, %34 : vector<16x16xf32>
    %c73 = arith.constant 73 : index
    %36 = memref.load %arg1[%c73] : memref<144xf32, #tpu.memory_space<smem>>
    %37 = vector.broadcast %36 : f32 to vector<16x16xf32>
    %38 = arith.mulf %37, %27 : vector<16x16xf32>
    %39 = arith.addf %22, %38 : vector<16x16xf32>
    %c109 = arith.constant 109 : index
    %40 = memref.load %arg1[%c109] : memref<144xf32, #tpu.memory_space<smem>>
    %41 = vector.broadcast %40 : f32 to vector<16x16xf32>
    %42 = arith.mulf %41, %27 : vector<16x16xf32>
    %43 = arith.addf %26, %42 : vector<16x16xf32>
    %44 = vector.extract_strided_slice %9 {offsets = [0, 2], sizes = [16, 16], strides = [1, 1]} : vector<18x18xf32> to vector<16x16xf32>
    %c2 = arith.constant 2 : index
    %45 = memref.load %arg1[%c2] : memref<144xf32, #tpu.memory_space<smem>>
    %46 = vector.broadcast %45 : f32 to vector<16x16xf32>
    %47 = arith.mulf %46, %44 : vector<16x16xf32>
    %48 = arith.addf %31, %47 : vector<16x16xf32>
    %c38 = arith.constant 38 : index
    %49 = memref.load %arg1[%c38] : memref<144xf32, #tpu.memory_space<smem>>
    %50 = vector.broadcast %49 : f32 to vector<16x16xf32>
    %51 = arith.mulf %50, %44 : vector<16x16xf32>
    %52 = arith.addf %35, %51 : vector<16x16xf32>
    %c74 = arith.constant 74 : index
    %53 = memref.load %arg1[%c74] : memref<144xf32, #tpu.memory_space<smem>>
    %54 = vector.broadcast %53 : f32 to vector<16x16xf32>
    %55 = arith.mulf %54, %44 : vector<16x16xf32>
    %56 = arith.addf %39, %55 : vector<16x16xf32>
    %c110 = arith.constant 110 : index
    %57 = memref.load %arg1[%c110] : memref<144xf32, #tpu.memory_space<smem>>
    %58 = vector.broadcast %57 : f32 to vector<16x16xf32>
    %59 = arith.mulf %58, %44 : vector<16x16xf32>
    %60 = arith.addf %43, %59 : vector<16x16xf32>
    %61 = vector.extract_strided_slice %9 {offsets = [1, 0], sizes = [16, 16], strides = [1, 1]} : vector<18x18xf32> to vector<16x16xf32>
    %c3 = arith.constant 3 : index
    %62 = memref.load %arg1[%c3] : memref<144xf32, #tpu.memory_space<smem>>
    %63 = vector.broadcast %62 : f32 to vector<16x16xf32>
    %64 = arith.mulf %63, %61 : vector<16x16xf32>
    %65 = arith.addf %48, %64 : vector<16x16xf32>
    %c39 = arith.constant 39 : index
    %66 = memref.load %arg1[%c39] : memref<144xf32, #tpu.memory_space<smem>>
    %67 = vector.broadcast %66 : f32 to vector<16x16xf32>
    %68 = arith.mulf %67, %61 : vector<16x16xf32>
    %69 = arith.addf %52, %68 : vector<16x16xf32>
    %c75 = arith.constant 75 : index
    %70 = memref.load %arg1[%c75] : memref<144xf32, #tpu.memory_space<smem>>
    %71 = vector.broadcast %70 : f32 to vector<16x16xf32>
    %72 = arith.mulf %71, %61 : vector<16x16xf32>
    %73 = arith.addf %56, %72 : vector<16x16xf32>
    %c111 = arith.constant 111 : index
    %74 = memref.load %arg1[%c111] : memref<144xf32, #tpu.memory_space<smem>>
    %75 = vector.broadcast %74 : f32 to vector<16x16xf32>
    %76 = arith.mulf %75, %61 : vector<16x16xf32>
    %77 = arith.addf %60, %76 : vector<16x16xf32>
    %78 = vector.extract_strided_slice %9 {offsets = [1, 1], sizes = [16, 16], strides = [1, 1]} : vector<18x18xf32> to vector<16x16xf32>
    %c4 = arith.constant 4 : index
    %79 = memref.load %arg1[%c4] : memref<144xf32, #tpu.memory_space<smem>>
    %80 = vector.broadcast %79 : f32 to vector<16x16xf32>
    %81 = arith.mulf %80, %78 : vector<16x16xf32>
    %82 = arith.addf %65, %81 : vector<16x16xf32>
    %c40 = arith.constant 40 : index
    %83 = memref.load %arg1[%c40] : memref<144xf32, #tpu.memory_space<smem>>
    %84 = vector.broadcast %83 : f32 to vector<16x16xf32>
    %85 = arith.mulf %84, %78 : vector<16x16xf32>
    %86 = arith.addf %69, %85 : vector<16x16xf32>
    %c76 = arith.constant 76 : index
    %87 = memref.load %arg1[%c76] : memref<144xf32, #tpu.memory_space<smem>>
    %88 = vector.broadcast %87 : f32 to vector<16x16xf32>
    %89 = arith.mulf %88, %78 : vector<16x16xf32>
    %90 = arith.addf %73, %89 : vector<16x16xf32>
    %c112 = arith.constant 112 : index
    %91 = memref.load %arg1[%c112] : memref<144xf32, #tpu.memory_space<smem>>
    %92 = vector.broadcast %91 : f32 to vector<16x16xf32>
    %93 = arith.mulf %92, %78 : vector<16x16xf32>
    %94 = arith.addf %77, %93 : vector<16x16xf32>
    %95 = vector.extract_strided_slice %9 {offsets = [1, 2], sizes = [16, 16], strides = [1, 1]} : vector<18x18xf32> to vector<16x16xf32>
    %c5 = arith.constant 5 : index
    %96 = memref.load %arg1[%c5] : memref<144xf32, #tpu.memory_space<smem>>
    %97 = vector.broadcast %96 : f32 to vector<16x16xf32>
    %98 = arith.mulf %97, %95 : vector<16x16xf32>
    %99 = arith.addf %82, %98 : vector<16x16xf32>
    %c41 = arith.constant 41 : index
    %100 = memref.load %arg1[%c41] : memref<144xf32, #tpu.memory_space<smem>>
    %101 = vector.broadcast %100 : f32 to vector<16x16xf32>
    %102 = arith.mulf %101, %95 : vector<16x16xf32>
    %103 = arith.addf %86, %102 : vector<16x16xf32>
    %c77 = arith.constant 77 : index
    %104 = memref.load %arg1[%c77] : memref<144xf32, #tpu.memory_space<smem>>
    %105 = vector.broadcast %104 : f32 to vector<16x16xf32>
    %106 = arith.mulf %105, %95 : vector<16x16xf32>
    %107 = arith.addf %90, %106 : vector<16x16xf32>
    %c113 = arith.constant 113 : index
    %108 = memref.load %arg1[%c113] : memref<144xf32, #tpu.memory_space<smem>>
    %109 = vector.broadcast %108 : f32 to vector<16x16xf32>
    %110 = arith.mulf %109, %95 : vector<16x16xf32>
    %111 = arith.addf %94, %110 : vector<16x16xf32>
    %112 = vector.extract_strided_slice %9 {offsets = [2, 0], sizes = [16, 16], strides = [1, 1]} : vector<18x18xf32> to vector<16x16xf32>
    %c6 = arith.constant 6 : index
    %113 = memref.load %arg1[%c6] : memref<144xf32, #tpu.memory_space<smem>>
    %114 = vector.broadcast %113 : f32 to vector<16x16xf32>
    %115 = arith.mulf %114, %112 : vector<16x16xf32>
    %116 = arith.addf %99, %115 : vector<16x16xf32>
    %c42 = arith.constant 42 : index
    %117 = memref.load %arg1[%c42] : memref<144xf32, #tpu.memory_space<smem>>
    %118 = vector.broadcast %117 : f32 to vector<16x16xf32>
    %119 = arith.mulf %118, %112 : vector<16x16xf32>
    %120 = arith.addf %103, %119 : vector<16x16xf32>
    %c78 = arith.constant 78 : index
    %121 = memref.load %arg1[%c78] : memref<144xf32, #tpu.memory_space<smem>>
    %122 = vector.broadcast %121 : f32 to vector<16x16xf32>
    %123 = arith.mulf %122, %112 : vector<16x16xf32>
    %124 = arith.addf %107, %123 : vector<16x16xf32>
    %c114 = arith.constant 114 : index
    %125 = memref.load %arg1[%c114] : memref<144xf32, #tpu.memory_space<smem>>
    %126 = vector.broadcast %125 : f32 to vector<16x16xf32>
    %127 = arith.mulf %126, %112 : vector<16x16xf32>
    %128 = arith.addf %111, %127 : vector<16x16xf32>
    %129 = vector.extract_strided_slice %9 {offsets = [2, 1], sizes = [16, 16], strides = [1, 1]} : vector<18x18xf32> to vector<16x16xf32>
    %c7 = arith.constant 7 : index
    %130 = memref.load %arg1[%c7] : memref<144xf32, #tpu.memory_space<smem>>
    %131 = vector.broadcast %130 : f32 to vector<16x16xf32>
    %132 = arith.mulf %131, %129 : vector<16x16xf32>
    %133 = arith.addf %116, %132 : vector<16x16xf32>
    %c43 = arith.constant 43 : index
    %134 = memref.load %arg1[%c43] : memref<144xf32, #tpu.memory_space<smem>>
    %135 = vector.broadcast %134 : f32 to vector<16x16xf32>
    %136 = arith.mulf %135, %129 : vector<16x16xf32>
    %137 = arith.addf %120, %136 : vector<16x16xf32>
    %c79 = arith.constant 79 : index
    %138 = memref.load %arg1[%c79] : memref<144xf32, #tpu.memory_space<smem>>
    %139 = vector.broadcast %138 : f32 to vector<16x16xf32>
    %140 = arith.mulf %139, %129 : vector<16x16xf32>
    %141 = arith.addf %124, %140 : vector<16x16xf32>
    %c115 = arith.constant 115 : index
    %142 = memref.load %arg1[%c115] : memref<144xf32, #tpu.memory_space<smem>>
    %143 = vector.broadcast %142 : f32 to vector<16x16xf32>
    %144 = arith.mulf %143, %129 : vector<16x16xf32>
    %145 = arith.addf %128, %144 : vector<16x16xf32>
    %146 = vector.extract_strided_slice %9 {offsets = [2, 2], sizes = [16, 16], strides = [1, 1]} : vector<18x18xf32> to vector<16x16xf32>
    %c8 = arith.constant 8 : index
    %147 = memref.load %arg1[%c8] : memref<144xf32, #tpu.memory_space<smem>>
    %148 = vector.broadcast %147 : f32 to vector<16x16xf32>
    %149 = arith.mulf %148, %146 : vector<16x16xf32>
    %150 = arith.addf %133, %149 : vector<16x16xf32>
    %c44 = arith.constant 44 : index
    %151 = memref.load %arg1[%c44] : memref<144xf32, #tpu.memory_space<smem>>
    %152 = vector.broadcast %151 : f32 to vector<16x16xf32>
    %153 = arith.mulf %152, %146 : vector<16x16xf32>
    %154 = arith.addf %137, %153 : vector<16x16xf32>
    %c80 = arith.constant 80 : index
    %155 = memref.load %arg1[%c80] : memref<144xf32, #tpu.memory_space<smem>>
    %156 = vector.broadcast %155 : f32 to vector<16x16xf32>
    %157 = arith.mulf %156, %146 : vector<16x16xf32>
    %158 = arith.addf %141, %157 : vector<16x16xf32>
    %c116 = arith.constant 116 : index
    %159 = memref.load %arg1[%c116] : memref<144xf32, #tpu.memory_space<smem>>
    %160 = vector.broadcast %159 : f32 to vector<16x16xf32>
    %161 = arith.mulf %160, %146 : vector<16x16xf32>
    %162 = arith.addf %145, %161 : vector<16x16xf32>
    %c0_11 = arith.constant 0 : index
    %c1_12 = arith.constant 1 : index
    %c0_13 = arith.constant 0 : index
    %c0_14 = arith.constant 0 : index
    %163 = vector.load %arg0[%c0_11, %c1_12, %c0_13, %c0_14] : memref<2x4x18x18xf32, #tpu.memory_space<vmem>>, vector<1x1x18x18xf32>
    %164 = vector.shape_cast %163 : vector<1x1x18x18xf32> to vector<18x18xf32>
    %165 = vector.extract_strided_slice %164 {offsets = [0, 0], sizes = [16, 16], strides = [1, 1]} : vector<18x18xf32> to vector<16x16xf32>
    %c9 = arith.constant 9 : index
    %166 = memref.load %arg1[%c9] : memref<144xf32, #tpu.memory_space<smem>>
    %167 = vector.broadcast %166 : f32 to vector<16x16xf32>
    %168 = arith.mulf %167, %165 : vector<16x16xf32>
    %169 = arith.addf %150, %168 : vector<16x16xf32>
    %c45 = arith.constant 45 : index
    %170 = memref.load %arg1[%c45] : memref<144xf32, #tpu.memory_space<smem>>
    %171 = vector.broadcast %170 : f32 to vector<16x16xf32>
    %172 = arith.mulf %171, %165 : vector<16x16xf32>
    %173 = arith.addf %154, %172 : vector<16x16xf32>
    %c81 = arith.constant 81 : index
    %174 = memref.load %arg1[%c81] : memref<144xf32, #tpu.memory_space<smem>>
    %175 = vector.broadcast %174 : f32 to vector<16x16xf32>
    %176 = arith.mulf %175, %165 : vector<16x16xf32>
    %177 = arith.addf %158, %176 : vector<16x16xf32>
    %c117 = arith.constant 117 : index
    %178 = memref.load %arg1[%c117] : memref<144xf32, #tpu.memory_space<smem>>
    %179 = vector.broadcast %178 : f32 to vector<16x16xf32>
    %180 = arith.mulf %179, %165 : vector<16x16xf32>
    %181 = arith.addf %162, %180 : vector<16x16xf32>
    %182 = vector.extract_strided_slice %164 {offsets = [0, 1], sizes = [16, 16], strides = [1, 1]} : vector<18x18xf32> to vector<16x16xf32>
    %c10 = arith.constant 10 : index
    %183 = memref.load %arg1[%c10] : memref<144xf32, #tpu.memory_space<smem>>
    %184 = vector.broadcast %183 : f32 to vector<16x16xf32>
    %185 = arith.mulf %184, %182 : vector<16x16xf32>
    %186 = arith.addf %169, %185 : vector<16x16xf32>
    %c46 = arith.constant 46 : index
    %187 = memref.load %arg1[%c46] : memref<144xf32, #tpu.memory_space<smem>>
    %188 = vector.broadcast %187 : f32 to vector<16x16xf32>
    %189 = arith.mulf %188, %182 : vector<16x16xf32>
    %190 = arith.addf %173, %189 : vector<16x16xf32>
    %c82 = arith.constant 82 : index
    %191 = memref.load %arg1[%c82] : memref<144xf32, #tpu.memory_space<smem>>
    %192 = vector.broadcast %191 : f32 to vector<16x16xf32>
    %193 = arith.mulf %192, %182 : vector<16x16xf32>
    %194 = arith.addf %177, %193 : vector<16x16xf32>
    %c118 = arith.constant 118 : index
    %195 = memref.load %arg1[%c118] : memref<144xf32, #tpu.memory_space<smem>>
    %196 = vector.broadcast %195 : f32 to vector<16x16xf32>
    %197 = arith.mulf %196, %182 : vector<16x16xf32>
    %198 = arith.addf %181, %197 : vector<16x16xf32>
    %199 = vector.extract_strided_slice %164 {offsets = [0, 2], sizes = [16, 16], strides = [1, 1]} : vector<18x18xf32> to vector<16x16xf32>
    %c11 = arith.constant 11 : index
    %200 = memref.load %arg1[%c11] : memref<144xf32, #tpu.memory_space<smem>>
    %201 = vector.broadcast %200 : f32 to vector<16x16xf32>
    %202 = arith.mulf %201, %199 : vector<16x16xf32>
    %203 = arith.addf %186, %202 : vector<16x16xf32>
    %c47 = arith.constant 47 : index
    %204 = memref.load %arg1[%c47] : memref<144xf32, #tpu.memory_space<smem>>
    %205 = vector.broadcast %204 : f32 to vector<16x16xf32>
    %206 = arith.mulf %205, %199 : vector<16x16xf32>
    %207 = arith.addf %190, %206 : vector<16x16xf32>
    %c83 = arith.constant 83 : index
    %208 = memref.load %arg1[%c83] : memref<144xf32, #tpu.memory_space<smem>>
    %209 = vector.broadcast %208 : f32 to vector<16x16xf32>
    %210 = arith.mulf %209, %199 : vector<16x16xf32>
    %211 = arith.addf %194, %210 : vector<16x16xf32>
    %c119 = arith.constant 119 : index
    %212 = memref.load %arg1[%c119] : memref<144xf32, #tpu.memory_space<smem>>
    %213 = vector.broadcast %212 : f32 to vector<16x16xf32>
    %214 = arith.mulf %213, %199 : vector<16x16xf32>
    %215 = arith.addf %198, %214 : vector<16x16xf32>
    %216 = vector.extract_strided_slice %164 {offsets = [1, 0], sizes = [16, 16], strides = [1, 1]} : vector<18x18xf32> to vector<16x16xf32>
    %c12 = arith.constant 12 : index
    %217 = memref.load %arg1[%c12] : memref<144xf32, #tpu.memory_space<smem>>
    %218 = vector.broadcast %217 : f32 to vector<16x16xf32>
    %219 = arith.mulf %218, %216 : vector<16x16xf32>
    %220 = arith.addf %203, %219 : vector<16x16xf32>
    %c48 = arith.constant 48 : index
    %221 = memref.load %arg1[%c48] : memref<144xf32, #tpu.memory_space<smem>>
    %222 = vector.broadcast %221 : f32 to vector<16x16xf32>
    %223 = arith.mulf %222, %216 : vector<16x16xf32>
    %224 = arith.addf %207, %223 : vector<16x16xf32>
    %c84 = arith.constant 84 : index
    %225 = memref.load %arg1[%c84] : memref<144xf32, #tpu.memory_space<smem>>
    %226 = vector.broadcast %225 : f32 to vector<16x16xf32>
    %227 = arith.mulf %226, %216 : vector<16x16xf32>
    %228 = arith.addf %211, %227 : vector<16x16xf32>
    %c120 = arith.constant 120 : index
    %229 = memref.load %arg1[%c120] : memref<144xf32, #tpu.memory_space<smem>>
    %230 = vector.broadcast %229 : f32 to vector<16x16xf32>
    %231 = arith.mulf %230, %216 : vector<16x16xf32>
    %232 = arith.addf %215, %231 : vector<16x16xf32>
    %233 = vector.extract_strided_slice %164 {offsets = [1, 1], sizes = [16, 16], strides = [1, 1]} : vector<18x18xf32> to vector<16x16xf32>
    %c13 = arith.constant 13 : index
    %234 = memref.load %arg1[%c13] : memref<144xf32, #tpu.memory_space<smem>>
    %235 = vector.broadcast %234 : f32 to vector<16x16xf32>
    %236 = arith.mulf %235, %233 : vector<16x16xf32>
    %237 = arith.addf %220, %236 : vector<16x16xf32>
    %c49 = arith.constant 49 : index
    %238 = memref.load %arg1[%c49] : memref<144xf32, #tpu.memory_space<smem>>
    %239 = vector.broadcast %238 : f32 to vector<16x16xf32>
    %240 = arith.mulf %239, %233 : vector<16x16xf32>
    %241 = arith.addf %224, %240 : vector<16x16xf32>
    %c85 = arith.constant 85 : index
    %242 = memref.load %arg1[%c85] : memref<144xf32, #tpu.memory_space<smem>>
    %243 = vector.broadcast %242 : f32 to vector<16x16xf32>
    %244 = arith.mulf %243, %233 : vector<16x16xf32>
    %245 = arith.addf %228, %244 : vector<16x16xf32>
    %c121 = arith.constant 121 : index
    %246 = memref.load %arg1[%c121] : memref<144xf32, #tpu.memory_space<smem>>
    %247 = vector.broadcast %246 : f32 to vector<16x16xf32>
    %248 = arith.mulf %247, %233 : vector<16x16xf32>
    %249 = arith.addf %232, %248 : vector<16x16xf32>
    %250 = vector.extract_strided_slice %164 {offsets = [1, 2], sizes = [16, 16], strides = [1, 1]} : vector<18x18xf32> to vector<16x16xf32>
    %c14 = arith.constant 14 : index
    %251 = memref.load %arg1[%c14] : memref<144xf32, #tpu.memory_space<smem>>
    %252 = vector.broadcast %251 : f32 to vector<16x16xf32>
    %253 = arith.mulf %252, %250 : vector<16x16xf32>
    %254 = arith.addf %237, %253 : vector<16x16xf32>
    %c50 = arith.constant 50 : index
    %255 = memref.load %arg1[%c50] : memref<144xf32, #tpu.memory_space<smem>>
    %256 = vector.broadcast %255 : f32 to vector<16x16xf32>
    %257 = arith.mulf %256, %250 : vector<16x16xf32>
    %258 = arith.addf %241, %257 : vector<16x16xf32>
    %c86 = arith.constant 86 : index
    %259 = memref.load %arg1[%c86] : memref<144xf32, #tpu.memory_space<smem>>
    %260 = vector.broadcast %259 : f32 to vector<16x16xf32>
    %261 = arith.mulf %260, %250 : vector<16x16xf32>
    %262 = arith.addf %245, %261 : vector<16x16xf32>
    %c122 = arith.constant 122 : index
    %263 = memref.load %arg1[%c122] : memref<144xf32, #tpu.memory_space<smem>>
    %264 = vector.broadcast %263 : f32 to vector<16x16xf32>
    %265 = arith.mulf %264, %250 : vector<16x16xf32>
    %266 = arith.addf %249, %265 : vector<16x16xf32>
    %267 = vector.extract_strided_slice %164 {offsets = [2, 0], sizes = [16, 16], strides = [1, 1]} : vector<18x18xf32> to vector<16x16xf32>
    %c15 = arith.constant 15 : index
    %268 = memref.load %arg1[%c15] : memref<144xf32, #tpu.memory_space<smem>>
    %269 = vector.broadcast %268 : f32 to vector<16x16xf32>
    %270 = arith.mulf %269, %267 : vector<16x16xf32>
    %271 = arith.addf %254, %270 : vector<16x16xf32>
    %c51 = arith.constant 51 : index
    %272 = memref.load %arg1[%c51] : memref<144xf32, #tpu.memory_space<smem>>
    %273 = vector.broadcast %272 : f32 to vector<16x16xf32>
    %274 = arith.mulf %273, %267 : vector<16x16xf32>
    %275 = arith.addf %258, %274 : vector<16x16xf32>
    %c87 = arith.constant 87 : index
    %276 = memref.load %arg1[%c87] : memref<144xf32, #tpu.memory_space<smem>>
    %277 = vector.broadcast %276 : f32 to vector<16x16xf32>
    %278 = arith.mulf %277, %267 : vector<16x16xf32>
    %279 = arith.addf %262, %278 : vector<16x16xf32>
    %c123 = arith.constant 123 : index
    %280 = memref.load %arg1[%c123] : memref<144xf32, #tpu.memory_space<smem>>
    %281 = vector.broadcast %280 : f32 to vector<16x16xf32>
    %282 = arith.mulf %281, %267 : vector<16x16xf32>
    %283 = arith.addf %266, %282 : vector<16x16xf32>
    %284 = vector.extract_strided_slice %164 {offsets = [2, 1], sizes = [16, 16], strides = [1, 1]} : vector<18x18xf32> to vector<16x16xf32>
    %c16 = arith.constant 16 : index
    %285 = memref.load %arg1[%c16] : memref<144xf32, #tpu.memory_space<smem>>
    %286 = vector.broadcast %285 : f32 to vector<16x16xf32>
    %287 = arith.mulf %286, %284 : vector<16x16xf32>
    %288 = arith.addf %271, %287 : vector<16x16xf32>
    %c52 = arith.constant 52 : index
    %289 = memref.load %arg1[%c52] : memref<144xf32, #tpu.memory_space<smem>>
    %290 = vector.broadcast %289 : f32 to vector<16x16xf32>
    %291 = arith.mulf %290, %284 : vector<16x16xf32>
    %292 = arith.addf %275, %291 : vector<16x16xf32>
    %c88 = arith.constant 88 : index
    %293 = memref.load %arg1[%c88] : memref<144xf32, #tpu.memory_space<smem>>
    %294 = vector.broadcast %293 : f32 to vector<16x16xf32>
    %295 = arith.mulf %294, %284 : vector<16x16xf32>
    %296 = arith.addf %279, %295 : vector<16x16xf32>
    %c124 = arith.constant 124 : index
    %297 = memref.load %arg1[%c124] : memref<144xf32, #tpu.memory_space<smem>>
    %298 = vector.broadcast %297 : f32 to vector<16x16xf32>
    %299 = arith.mulf %298, %284 : vector<16x16xf32>
    %300 = arith.addf %283, %299 : vector<16x16xf32>
    %301 = vector.extract_strided_slice %164 {offsets = [2, 2], sizes = [16, 16], strides = [1, 1]} : vector<18x18xf32> to vector<16x16xf32>
    %c17 = arith.constant 17 : index
    %302 = memref.load %arg1[%c17] : memref<144xf32, #tpu.memory_space<smem>>
    %303 = vector.broadcast %302 : f32 to vector<16x16xf32>
    %304 = arith.mulf %303, %301 : vector<16x16xf32>
    %305 = arith.addf %288, %304 : vector<16x16xf32>
    %c53 = arith.constant 53 : index
    %306 = memref.load %arg1[%c53] : memref<144xf32, #tpu.memory_space<smem>>
    %307 = vector.broadcast %306 : f32 to vector<16x16xf32>
    %308 = arith.mulf %307, %301 : vector<16x16xf32>
    %309 = arith.addf %292, %308 : vector<16x16xf32>
    %c89 = arith.constant 89 : index
    %310 = memref.load %arg1[%c89] : memref<144xf32, #tpu.memory_space<smem>>
    %311 = vector.broadcast %310 : f32 to vector<16x16xf32>
    %312 = arith.mulf %311, %301 : vector<16x16xf32>
    %313 = arith.addf %296, %312 : vector<16x16xf32>
    %c125 = arith.constant 125 : index
    %314 = memref.load %arg1[%c125] : memref<144xf32, #tpu.memory_space<smem>>
    %315 = vector.broadcast %314 : f32 to vector<16x16xf32>
    %316 = arith.mulf %315, %301 : vector<16x16xf32>
    %317 = arith.addf %300, %316 : vector<16x16xf32>
    %c0_15 = arith.constant 0 : index
    %c2_16 = arith.constant 2 : index
    %c0_17 = arith.constant 0 : index
    %c0_18 = arith.constant 0 : index
    %318 = vector.load %arg0[%c0_15, %c2_16, %c0_17, %c0_18] : memref<2x4x18x18xf32, #tpu.memory_space<vmem>>, vector<1x1x18x18xf32>
    %319 = vector.shape_cast %318 : vector<1x1x18x18xf32> to vector<18x18xf32>
    %320 = vector.extract_strided_slice %319 {offsets = [0, 0], sizes = [16, 16], strides = [1, 1]} : vector<18x18xf32> to vector<16x16xf32>
    %c18 = arith.constant 18 : index
    %321 = memref.load %arg1[%c18] : memref<144xf32, #tpu.memory_space<smem>>
    %322 = vector.broadcast %321 : f32 to vector<16x16xf32>
    %323 = arith.mulf %322, %320 : vector<16x16xf32>
    %324 = arith.addf %305, %323 : vector<16x16xf32>
    %c54 = arith.constant 54 : index
    %325 = memref.load %arg1[%c54] : memref<144xf32, #tpu.memory_space<smem>>
    %326 = vector.broadcast %325 : f32 to vector<16x16xf32>
    %327 = arith.mulf %326, %320 : vector<16x16xf32>
    %328 = arith.addf %309, %327 : vector<16x16xf32>
    %c90 = arith.constant 90 : index
    %329 = memref.load %arg1[%c90] : memref<144xf32, #tpu.memory_space<smem>>
    %330 = vector.broadcast %329 : f32 to vector<16x16xf32>
    %331 = arith.mulf %330, %320 : vector<16x16xf32>
    %332 = arith.addf %313, %331 : vector<16x16xf32>
    %c126 = arith.constant 126 : index
    %333 = memref.load %arg1[%c126] : memref<144xf32, #tpu.memory_space<smem>>
    %334 = vector.broadcast %333 : f32 to vector<16x16xf32>
    %335 = arith.mulf %334, %320 : vector<16x16xf32>
    %336 = arith.addf %317, %335 : vector<16x16xf32>
    %337 = vector.extract_strided_slice %319 {offsets = [0, 1], sizes = [16, 16], strides = [1, 1]} : vector<18x18xf32> to vector<16x16xf32>
    %c19 = arith.constant 19 : index
    %338 = memref.load %arg1[%c19] : memref<144xf32, #tpu.memory_space<smem>>
    %339 = vector.broadcast %338 : f32 to vector<16x16xf32>
    %340 = arith.mulf %339, %337 : vector<16x16xf32>
    %341 = arith.addf %324, %340 : vector<16x16xf32>
    %c55 = arith.constant 55 : index
    %342 = memref.load %arg1[%c55] : memref<144xf32, #tpu.memory_space<smem>>
    %343 = vector.broadcast %342 : f32 to vector<16x16xf32>
    %344 = arith.mulf %343, %337 : vector<16x16xf32>
    %345 = arith.addf %328, %344 : vector<16x16xf32>
    %c91 = arith.constant 91 : index
    %346 = memref.load %arg1[%c91] : memref<144xf32, #tpu.memory_space<smem>>
    %347 = vector.broadcast %346 : f32 to vector<16x16xf32>
    %348 = arith.mulf %347, %337 : vector<16x16xf32>
    %349 = arith.addf %332, %348 : vector<16x16xf32>
    %c127 = arith.constant 127 : index
    %350 = memref.load %arg1[%c127] : memref<144xf32, #tpu.memory_space<smem>>
    %351 = vector.broadcast %350 : f32 to vector<16x16xf32>
    %352 = arith.mulf %351, %337 : vector<16x16xf32>
    %353 = arith.addf %336, %352 : vector<16x16xf32>
    %354 = vector.extract_strided_slice %319 {offsets = [0, 2], sizes = [16, 16], strides = [1, 1]} : vector<18x18xf32> to vector<16x16xf32>
    %c20 = arith.constant 20 : index
    %355 = memref.load %arg1[%c20] : memref<144xf32, #tpu.memory_space<smem>>
    %356 = vector.broadcast %355 : f32 to vector<16x16xf32>
    %357 = arith.mulf %356, %354 : vector<16x16xf32>
    %358 = arith.addf %341, %357 : vector<16x16xf32>
    %c56 = arith.constant 56 : index
    %359 = memref.load %arg1[%c56] : memref<144xf32, #tpu.memory_space<smem>>
    %360 = vector.broadcast %359 : f32 to vector<16x16xf32>
    %361 = arith.mulf %360, %354 : vector<16x16xf32>
    %362 = arith.addf %345, %361 : vector<16x16xf32>
    %c92 = arith.constant 92 : index
    %363 = memref.load %arg1[%c92] : memref<144xf32, #tpu.memory_space<smem>>
    %364 = vector.broadcast %363 : f32 to vector<16x16xf32>
    %365 = arith.mulf %364, %354 : vector<16x16xf32>
    %366 = arith.addf %349, %365 : vector<16x16xf32>
    %c128 = arith.constant 128 : index
    %367 = memref.load %arg1[%c128] : memref<144xf32, #tpu.memory_space<smem>>
    %368 = vector.broadcast %367 : f32 to vector<16x16xf32>
    %369 = arith.mulf %368, %354 : vector<16x16xf32>
    %370 = arith.addf %353, %369 : vector<16x16xf32>
    %371 = vector.extract_strided_slice %319 {offsets = [1, 0], sizes = [16, 16], strides = [1, 1]} : vector<18x18xf32> to vector<16x16xf32>
    %c21 = arith.constant 21 : index
    %372 = memref.load %arg1[%c21] : memref<144xf32, #tpu.memory_space<smem>>
    %373 = vector.broadcast %372 : f32 to vector<16x16xf32>
    %374 = arith.mulf %373, %371 : vector<16x16xf32>
    %375 = arith.addf %358, %374 : vector<16x16xf32>
    %c57 = arith.constant 57 : index
    %376 = memref.load %arg1[%c57] : memref<144xf32, #tpu.memory_space<smem>>
    %377 = vector.broadcast %376 : f32 to vector<16x16xf32>
    %378 = arith.mulf %377, %371 : vector<16x16xf32>
    %379 = arith.addf %362, %378 : vector<16x16xf32>
    %c93 = arith.constant 93 : index
    %380 = memref.load %arg1[%c93] : memref<144xf32, #tpu.memory_space<smem>>
    %381 = vector.broadcast %380 : f32 to vector<16x16xf32>
    %382 = arith.mulf %381, %371 : vector<16x16xf32>
    %383 = arith.addf %366, %382 : vector<16x16xf32>
    %c129 = arith.constant 129 : index
    %384 = memref.load %arg1[%c129] : memref<144xf32, #tpu.memory_space<smem>>
    %385 = vector.broadcast %384 : f32 to vector<16x16xf32>
    %386 = arith.mulf %385, %371 : vector<16x16xf32>
    %387 = arith.addf %370, %386 : vector<16x16xf32>
    %388 = vector.extract_strided_slice %319 {offsets = [1, 1], sizes = [16, 16], strides = [1, 1]} : vector<18x18xf32> to vector<16x16xf32>
    %c22 = arith.constant 22 : index
    %389 = memref.load %arg1[%c22] : memref<144xf32, #tpu.memory_space<smem>>
    %390 = vector.broadcast %389 : f32 to vector<16x16xf32>
    %391 = arith.mulf %390, %388 : vector<16x16xf32>
    %392 = arith.addf %375, %391 : vector<16x16xf32>
    %c58 = arith.constant 58 : index
    %393 = memref.load %arg1[%c58] : memref<144xf32, #tpu.memory_space<smem>>
    %394 = vector.broadcast %393 : f32 to vector<16x16xf32>
    %395 = arith.mulf %394, %388 : vector<16x16xf32>
    %396 = arith.addf %379, %395 : vector<16x16xf32>
    %c94 = arith.constant 94 : index
    %397 = memref.load %arg1[%c94] : memref<144xf32, #tpu.memory_space<smem>>
    %398 = vector.broadcast %397 : f32 to vector<16x16xf32>
    %399 = arith.mulf %398, %388 : vector<16x16xf32>
    %400 = arith.addf %383, %399 : vector<16x16xf32>
    %c130 = arith.constant 130 : index
    %401 = memref.load %arg1[%c130] : memref<144xf32, #tpu.memory_space<smem>>
    %402 = vector.broadcast %401 : f32 to vector<16x16xf32>
    %403 = arith.mulf %402, %388 : vector<16x16xf32>
    %404 = arith.addf %387, %403 : vector<16x16xf32>
    %405 = vector.extract_strided_slice %319 {offsets = [1, 2], sizes = [16, 16], strides = [1, 1]} : vector<18x18xf32> to vector<16x16xf32>
    %c23 = arith.constant 23 : index
    %406 = memref.load %arg1[%c23] : memref<144xf32, #tpu.memory_space<smem>>
    %407 = vector.broadcast %406 : f32 to vector<16x16xf32>
    %408 = arith.mulf %407, %405 : vector<16x16xf32>
    %409 = arith.addf %392, %408 : vector<16x16xf32>
    %c59 = arith.constant 59 : index
    %410 = memref.load %arg1[%c59] : memref<144xf32, #tpu.memory_space<smem>>
    %411 = vector.broadcast %410 : f32 to vector<16x16xf32>
    %412 = arith.mulf %411, %405 : vector<16x16xf32>
    %413 = arith.addf %396, %412 : vector<16x16xf32>
    %c95 = arith.constant 95 : index
    %414 = memref.load %arg1[%c95] : memref<144xf32, #tpu.memory_space<smem>>
    %415 = vector.broadcast %414 : f32 to vector<16x16xf32>
    %416 = arith.mulf %415, %405 : vector<16x16xf32>
    %417 = arith.addf %400, %416 : vector<16x16xf32>
    %c131 = arith.constant 131 : index
    %418 = memref.load %arg1[%c131] : memref<144xf32, #tpu.memory_space<smem>>
    %419 = vector.broadcast %418 : f32 to vector<16x16xf32>
    %420 = arith.mulf %419, %405 : vector<16x16xf32>
    %421 = arith.addf %404, %420 : vector<16x16xf32>
    %422 = vector.extract_strided_slice %319 {offsets = [2, 0], sizes = [16, 16], strides = [1, 1]} : vector<18x18xf32> to vector<16x16xf32>
    %c24 = arith.constant 24 : index
    %423 = memref.load %arg1[%c24] : memref<144xf32, #tpu.memory_space<smem>>
    %424 = vector.broadcast %423 : f32 to vector<16x16xf32>
    %425 = arith.mulf %424, %422 : vector<16x16xf32>
    %426 = arith.addf %409, %425 : vector<16x16xf32>
    %c60 = arith.constant 60 : index
    %427 = memref.load %arg1[%c60] : memref<144xf32, #tpu.memory_space<smem>>
    %428 = vector.broadcast %427 : f32 to vector<16x16xf32>
    %429 = arith.mulf %428, %422 : vector<16x16xf32>
    %430 = arith.addf %413, %429 : vector<16x16xf32>
    %c96 = arith.constant 96 : index
    %431 = memref.load %arg1[%c96] : memref<144xf32, #tpu.memory_space<smem>>
    %432 = vector.broadcast %431 : f32 to vector<16x16xf32>
    %433 = arith.mulf %432, %422 : vector<16x16xf32>
    %434 = arith.addf %417, %433 : vector<16x16xf32>
    %c132 = arith.constant 132 : index
    %435 = memref.load %arg1[%c132] : memref<144xf32, #tpu.memory_space<smem>>
    %436 = vector.broadcast %435 : f32 to vector<16x16xf32>
    %437 = arith.mulf %436, %422 : vector<16x16xf32>
    %438 = arith.addf %421, %437 : vector<16x16xf32>
    %439 = vector.extract_strided_slice %319 {offsets = [2, 1], sizes = [16, 16], strides = [1, 1]} : vector<18x18xf32> to vector<16x16xf32>
    %c25 = arith.constant 25 : index
    %440 = memref.load %arg1[%c25] : memref<144xf32, #tpu.memory_space<smem>>
    %441 = vector.broadcast %440 : f32 to vector<16x16xf32>
    %442 = arith.mulf %441, %439 : vector<16x16xf32>
    %443 = arith.addf %426, %442 : vector<16x16xf32>
    %c61 = arith.constant 61 : index
    %444 = memref.load %arg1[%c61] : memref<144xf32, #tpu.memory_space<smem>>
    %445 = vector.broadcast %444 : f32 to vector<16x16xf32>
    %446 = arith.mulf %445, %439 : vector<16x16xf32>
    %447 = arith.addf %430, %446 : vector<16x16xf32>
    %c97 = arith.constant 97 : index
    %448 = memref.load %arg1[%c97] : memref<144xf32, #tpu.memory_space<smem>>
    %449 = vector.broadcast %448 : f32 to vector<16x16xf32>
    %450 = arith.mulf %449, %439 : vector<16x16xf32>
    %451 = arith.addf %434, %450 : vector<16x16xf32>
    %c133 = arith.constant 133 : index
    %452 = memref.load %arg1[%c133] : memref<144xf32, #tpu.memory_space<smem>>
    %453 = vector.broadcast %452 : f32 to vector<16x16xf32>
    %454 = arith.mulf %453, %439 : vector<16x16xf32>
    %455 = arith.addf %438, %454 : vector<16x16xf32>
    %456 = vector.extract_strided_slice %319 {offsets = [2, 2], sizes = [16, 16], strides = [1, 1]} : vector<18x18xf32> to vector<16x16xf32>
    %c26 = arith.constant 26 : index
    %457 = memref.load %arg1[%c26] : memref<144xf32, #tpu.memory_space<smem>>
    %458 = vector.broadcast %457 : f32 to vector<16x16xf32>
    %459 = arith.mulf %458, %456 : vector<16x16xf32>
    %460 = arith.addf %443, %459 : vector<16x16xf32>
    %c62 = arith.constant 62 : index
    %461 = memref.load %arg1[%c62] : memref<144xf32, #tpu.memory_space<smem>>
    %462 = vector.broadcast %461 : f32 to vector<16x16xf32>
    %463 = arith.mulf %462, %456 : vector<16x16xf32>
    %464 = arith.addf %447, %463 : vector<16x16xf32>
    %c98 = arith.constant 98 : index
    %465 = memref.load %arg1[%c98] : memref<144xf32, #tpu.memory_space<smem>>
    %466 = vector.broadcast %465 : f32 to vector<16x16xf32>
    %467 = arith.mulf %466, %456 : vector<16x16xf32>
    %468 = arith.addf %451, %467 : vector<16x16xf32>
    %c134 = arith.constant 134 : index
    %469 = memref.load %arg1[%c134] : memref<144xf32, #tpu.memory_space<smem>>
    %470 = vector.broadcast %469 : f32 to vector<16x16xf32>
    %471 = arith.mulf %470, %456 : vector<16x16xf32>
    %472 = arith.addf %455, %471 : vector<16x16xf32>
    %c0_19 = arith.constant 0 : index
    %c3_20 = arith.constant 3 : index
    %c0_21 = arith.constant 0 : index
    %c0_22 = arith.constant 0 : index
    %473 = vector.load %arg0[%c0_19, %c3_20, %c0_21, %c0_22] : memref<2x4x18x18xf32, #tpu.memory_space<vmem>>, vector<1x1x18x18xf32>
    %474 = vector.shape_cast %473 : vector<1x1x18x18xf32> to vector<18x18xf32>
    %475 = vector.extract_strided_slice %474 {offsets = [0, 0], sizes = [16, 16], strides = [1, 1]} : vector<18x18xf32> to vector<16x16xf32>
    %c27 = arith.constant 27 : index
    %476 = memref.load %arg1[%c27] : memref<144xf32, #tpu.memory_space<smem>>
    %477 = vector.broadcast %476 : f32 to vector<16x16xf32>
    %478 = arith.mulf %477, %475 : vector<16x16xf32>
    %479 = arith.addf %460, %478 : vector<16x16xf32>
    %c63 = arith.constant 63 : index
    %480 = memref.load %arg1[%c63] : memref<144xf32, #tpu.memory_space<smem>>
    %481 = vector.broadcast %480 : f32 to vector<16x16xf32>
    %482 = arith.mulf %481, %475 : vector<16x16xf32>
    %483 = arith.addf %464, %482 : vector<16x16xf32>
    %c99 = arith.constant 99 : index
    %484 = memref.load %arg1[%c99] : memref<144xf32, #tpu.memory_space<smem>>
    %485 = vector.broadcast %484 : f32 to vector<16x16xf32>
    %486 = arith.mulf %485, %475 : vector<16x16xf32>
    %487 = arith.addf %468, %486 : vector<16x16xf32>
    %c135 = arith.constant 135 : index
    %488 = memref.load %arg1[%c135] : memref<144xf32, #tpu.memory_space<smem>>
    %489 = vector.broadcast %488 : f32 to vector<16x16xf32>
    %490 = arith.mulf %489, %475 : vector<16x16xf32>
    %491 = arith.addf %472, %490 : vector<16x16xf32>
    %492 = vector.extract_strided_slice %474 {offsets = [0, 1], sizes = [16, 16], strides = [1, 1]} : vector<18x18xf32> to vector<16x16xf32>
    %c28 = arith.constant 28 : index
    %493 = memref.load %arg1[%c28] : memref<144xf32, #tpu.memory_space<smem>>
    %494 = vector.broadcast %493 : f32 to vector<16x16xf32>
    %495 = arith.mulf %494, %492 : vector<16x16xf32>
    %496 = arith.addf %479, %495 : vector<16x16xf32>
    %c64 = arith.constant 64 : index
    %497 = memref.load %arg1[%c64] : memref<144xf32, #tpu.memory_space<smem>>
    %498 = vector.broadcast %497 : f32 to vector<16x16xf32>
    %499 = arith.mulf %498, %492 : vector<16x16xf32>
    %500 = arith.addf %483, %499 : vector<16x16xf32>
    %c100 = arith.constant 100 : index
    %501 = memref.load %arg1[%c100] : memref<144xf32, #tpu.memory_space<smem>>
    %502 = vector.broadcast %501 : f32 to vector<16x16xf32>
    %503 = arith.mulf %502, %492 : vector<16x16xf32>
    %504 = arith.addf %487, %503 : vector<16x16xf32>
    %c136 = arith.constant 136 : index
    %505 = memref.load %arg1[%c136] : memref<144xf32, #tpu.memory_space<smem>>
    %506 = vector.broadcast %505 : f32 to vector<16x16xf32>
    %507 = arith.mulf %506, %492 : vector<16x16xf32>
    %508 = arith.addf %491, %507 : vector<16x16xf32>
    %509 = vector.extract_strided_slice %474 {offsets = [0, 2], sizes = [16, 16], strides = [1, 1]} : vector<18x18xf32> to vector<16x16xf32>
    %c29 = arith.constant 29 : index
    %510 = memref.load %arg1[%c29] : memref<144xf32, #tpu.memory_space<smem>>
    %511 = vector.broadcast %510 : f32 to vector<16x16xf32>
    %512 = arith.mulf %511, %509 : vector<16x16xf32>
    %513 = arith.addf %496, %512 : vector<16x16xf32>
    %c65 = arith.constant 65 : index
    %514 = memref.load %arg1[%c65] : memref<144xf32, #tpu.memory_space<smem>>
    %515 = vector.broadcast %514 : f32 to vector<16x16xf32>
    %516 = arith.mulf %515, %509 : vector<16x16xf32>
    %517 = arith.addf %500, %516 : vector<16x16xf32>
    %c101 = arith.constant 101 : index
    %518 = memref.load %arg1[%c101] : memref<144xf32, #tpu.memory_space<smem>>
    %519 = vector.broadcast %518 : f32 to vector<16x16xf32>
    %520 = arith.mulf %519, %509 : vector<16x16xf32>
    %521 = arith.addf %504, %520 : vector<16x16xf32>
    %c137 = arith.constant 137 : index
    %522 = memref.load %arg1[%c137] : memref<144xf32, #tpu.memory_space<smem>>
    %523 = vector.broadcast %522 : f32 to vector<16x16xf32>
    %524 = arith.mulf %523, %509 : vector<16x16xf32>
    %525 = arith.addf %508, %524 : vector<16x16xf32>
    %526 = vector.extract_strided_slice %474 {offsets = [1, 0], sizes = [16, 16], strides = [1, 1]} : vector<18x18xf32> to vector<16x16xf32>
    %c30 = arith.constant 30 : index
    %527 = memref.load %arg1[%c30] : memref<144xf32, #tpu.memory_space<smem>>
    %528 = vector.broadcast %527 : f32 to vector<16x16xf32>
    %529 = arith.mulf %528, %526 : vector<16x16xf32>
    %530 = arith.addf %513, %529 : vector<16x16xf32>
    %c66 = arith.constant 66 : index
    %531 = memref.load %arg1[%c66] : memref<144xf32, #tpu.memory_space<smem>>
    %532 = vector.broadcast %531 : f32 to vector<16x16xf32>
    %533 = arith.mulf %532, %526 : vector<16x16xf32>
    %534 = arith.addf %517, %533 : vector<16x16xf32>
    %c102 = arith.constant 102 : index
    %535 = memref.load %arg1[%c102] : memref<144xf32, #tpu.memory_space<smem>>
    %536 = vector.broadcast %535 : f32 to vector<16x16xf32>
    %537 = arith.mulf %536, %526 : vector<16x16xf32>
    %538 = arith.addf %521, %537 : vector<16x16xf32>
    %c138 = arith.constant 138 : index
    %539 = memref.load %arg1[%c138] : memref<144xf32, #tpu.memory_space<smem>>
    %540 = vector.broadcast %539 : f32 to vector<16x16xf32>
    %541 = arith.mulf %540, %526 : vector<16x16xf32>
    %542 = arith.addf %525, %541 : vector<16x16xf32>
    %543 = vector.extract_strided_slice %474 {offsets = [1, 1], sizes = [16, 16], strides = [1, 1]} : vector<18x18xf32> to vector<16x16xf32>
    %c31 = arith.constant 31 : index
    %544 = memref.load %arg1[%c31] : memref<144xf32, #tpu.memory_space<smem>>
    %545 = vector.broadcast %544 : f32 to vector<16x16xf32>
    %546 = arith.mulf %545, %543 : vector<16x16xf32>
    %547 = arith.addf %530, %546 : vector<16x16xf32>
    %c67 = arith.constant 67 : index
    %548 = memref.load %arg1[%c67] : memref<144xf32, #tpu.memory_space<smem>>
    %549 = vector.broadcast %548 : f32 to vector<16x16xf32>
    %550 = arith.mulf %549, %543 : vector<16x16xf32>
    %551 = arith.addf %534, %550 : vector<16x16xf32>
    %c103 = arith.constant 103 : index
    %552 = memref.load %arg1[%c103] : memref<144xf32, #tpu.memory_space<smem>>
    %553 = vector.broadcast %552 : f32 to vector<16x16xf32>
    %554 = arith.mulf %553, %543 : vector<16x16xf32>
    %555 = arith.addf %538, %554 : vector<16x16xf32>
    %c139 = arith.constant 139 : index
    %556 = memref.load %arg1[%c139] : memref<144xf32, #tpu.memory_space<smem>>
    %557 = vector.broadcast %556 : f32 to vector<16x16xf32>
    %558 = arith.mulf %557, %543 : vector<16x16xf32>
    %559 = arith.addf %542, %558 : vector<16x16xf32>
    %560 = vector.extract_strided_slice %474 {offsets = [1, 2], sizes = [16, 16], strides = [1, 1]} : vector<18x18xf32> to vector<16x16xf32>
    %c32 = arith.constant 32 : index
    %561 = memref.load %arg1[%c32] : memref<144xf32, #tpu.memory_space<smem>>
    %562 = vector.broadcast %561 : f32 to vector<16x16xf32>
    %563 = arith.mulf %562, %560 : vector<16x16xf32>
    %564 = arith.addf %547, %563 : vector<16x16xf32>
    %c68 = arith.constant 68 : index
    %565 = memref.load %arg1[%c68] : memref<144xf32, #tpu.memory_space<smem>>
    %566 = vector.broadcast %565 : f32 to vector<16x16xf32>
    %567 = arith.mulf %566, %560 : vector<16x16xf32>
    %568 = arith.addf %551, %567 : vector<16x16xf32>
    %c104 = arith.constant 104 : index
    %569 = memref.load %arg1[%c104] : memref<144xf32, #tpu.memory_space<smem>>
    %570 = vector.broadcast %569 : f32 to vector<16x16xf32>
    %571 = arith.mulf %570, %560 : vector<16x16xf32>
    %572 = arith.addf %555, %571 : vector<16x16xf32>
    %c140 = arith.constant 140 : index
    %573 = memref.load %arg1[%c140] : memref<144xf32, #tpu.memory_space<smem>>
    %574 = vector.broadcast %573 : f32 to vector<16x16xf32>
    %575 = arith.mulf %574, %560 : vector<16x16xf32>
    %576 = arith.addf %559, %575 : vector<16x16xf32>
    %577 = vector.extract_strided_slice %474 {offsets = [2, 0], sizes = [16, 16], strides = [1, 1]} : vector<18x18xf32> to vector<16x16xf32>
    %c33 = arith.constant 33 : index
    %578 = memref.load %arg1[%c33] : memref<144xf32, #tpu.memory_space<smem>>
    %579 = vector.broadcast %578 : f32 to vector<16x16xf32>
    %580 = arith.mulf %579, %577 : vector<16x16xf32>
    %581 = arith.addf %564, %580 : vector<16x16xf32>
    %c69 = arith.constant 69 : index
    %582 = memref.load %arg1[%c69] : memref<144xf32, #tpu.memory_space<smem>>
    %583 = vector.broadcast %582 : f32 to vector<16x16xf32>
    %584 = arith.mulf %583, %577 : vector<16x16xf32>
    %585 = arith.addf %568, %584 : vector<16x16xf32>
    %c105 = arith.constant 105 : index
    %586 = memref.load %arg1[%c105] : memref<144xf32, #tpu.memory_space<smem>>
    %587 = vector.broadcast %586 : f32 to vector<16x16xf32>
    %588 = arith.mulf %587, %577 : vector<16x16xf32>
    %589 = arith.addf %572, %588 : vector<16x16xf32>
    %c141 = arith.constant 141 : index
    %590 = memref.load %arg1[%c141] : memref<144xf32, #tpu.memory_space<smem>>
    %591 = vector.broadcast %590 : f32 to vector<16x16xf32>
    %592 = arith.mulf %591, %577 : vector<16x16xf32>
    %593 = arith.addf %576, %592 : vector<16x16xf32>
    %594 = vector.extract_strided_slice %474 {offsets = [2, 1], sizes = [16, 16], strides = [1, 1]} : vector<18x18xf32> to vector<16x16xf32>
    %c34 = arith.constant 34 : index
    %595 = memref.load %arg1[%c34] : memref<144xf32, #tpu.memory_space<smem>>
    %596 = vector.broadcast %595 : f32 to vector<16x16xf32>
    %597 = arith.mulf %596, %594 : vector<16x16xf32>
    %598 = arith.addf %581, %597 : vector<16x16xf32>
    %c70 = arith.constant 70 : index
    %599 = memref.load %arg1[%c70] : memref<144xf32, #tpu.memory_space<smem>>
    %600 = vector.broadcast %599 : f32 to vector<16x16xf32>
    %601 = arith.mulf %600, %594 : vector<16x16xf32>
    %602 = arith.addf %585, %601 : vector<16x16xf32>
    %c106 = arith.constant 106 : index
    %603 = memref.load %arg1[%c106] : memref<144xf32, #tpu.memory_space<smem>>
    %604 = vector.broadcast %603 : f32 to vector<16x16xf32>
    %605 = arith.mulf %604, %594 : vector<16x16xf32>
    %606 = arith.addf %589, %605 : vector<16x16xf32>
    %c142 = arith.constant 142 : index
    %607 = memref.load %arg1[%c142] : memref<144xf32, #tpu.memory_space<smem>>
    %608 = vector.broadcast %607 : f32 to vector<16x16xf32>
    %609 = arith.mulf %608, %594 : vector<16x16xf32>
    %610 = arith.addf %593, %609 : vector<16x16xf32>
    %611 = vector.extract_strided_slice %474 {offsets = [2, 2], sizes = [16, 16], strides = [1, 1]} : vector<18x18xf32> to vector<16x16xf32>
    %c35 = arith.constant 35 : index
    %612 = memref.load %arg1[%c35] : memref<144xf32, #tpu.memory_space<smem>>
    %613 = vector.broadcast %612 : f32 to vector<16x16xf32>
    %614 = arith.mulf %613, %611 : vector<16x16xf32>
    %615 = arith.addf %598, %614 : vector<16x16xf32>
    %c71 = arith.constant 71 : index
    %616 = memref.load %arg1[%c71] : memref<144xf32, #tpu.memory_space<smem>>
    %617 = vector.broadcast %616 : f32 to vector<16x16xf32>
    %618 = arith.mulf %617, %611 : vector<16x16xf32>
    %619 = arith.addf %602, %618 : vector<16x16xf32>
    %c107 = arith.constant 107 : index
    %620 = memref.load %arg1[%c107] : memref<144xf32, #tpu.memory_space<smem>>
    %621 = vector.broadcast %620 : f32 to vector<16x16xf32>
    %622 = arith.mulf %621, %611 : vector<16x16xf32>
    %623 = arith.addf %606, %622 : vector<16x16xf32>
    %c143 = arith.constant 143 : index
    %624 = memref.load %arg1[%c143] : memref<144xf32, #tpu.memory_space<smem>>
    %625 = vector.broadcast %624 : f32 to vector<16x16xf32>
    %626 = arith.mulf %625, %611 : vector<16x16xf32>
    %627 = arith.addf %610, %626 : vector<16x16xf32>
    %c1_23 = arith.constant 1 : index
    %c0_24 = arith.constant 0 : index
    %c0_25 = arith.constant 0 : index
    %c0_26 = arith.constant 0 : index
    %628 = vector.load %arg0[%c1_23, %c0_24, %c0_25, %c0_26] : memref<2x4x18x18xf32, #tpu.memory_space<vmem>>, vector<1x1x18x18xf32>
    %629 = vector.shape_cast %628 : vector<1x1x18x18xf32> to vector<18x18xf32>
    %630 = vector.extract_strided_slice %629 {offsets = [0, 0], sizes = [16, 16], strides = [1, 1]} : vector<18x18xf32> to vector<16x16xf32>
    %c0_27 = arith.constant 0 : index
    %631 = memref.load %arg1[%c0_27] : memref<144xf32, #tpu.memory_space<smem>>
    %632 = vector.broadcast %631 : f32 to vector<16x16xf32>
    %633 = arith.mulf %632, %630 : vector<16x16xf32>
    %634 = arith.addf %1, %633 : vector<16x16xf32>
    %c36_28 = arith.constant 36 : index
    %635 = memref.load %arg1[%c36_28] : memref<144xf32, #tpu.memory_space<smem>>
    %636 = vector.broadcast %635 : f32 to vector<16x16xf32>
    %637 = arith.mulf %636, %630 : vector<16x16xf32>
    %638 = arith.addf %3, %637 : vector<16x16xf32>
    %c72_29 = arith.constant 72 : index
    %639 = memref.load %arg1[%c72_29] : memref<144xf32, #tpu.memory_space<smem>>
    %640 = vector.broadcast %639 : f32 to vector<16x16xf32>
    %641 = arith.mulf %640, %630 : vector<16x16xf32>
    %642 = arith.addf %5, %641 : vector<16x16xf32>
    %c108_30 = arith.constant 108 : index
    %643 = memref.load %arg1[%c108_30] : memref<144xf32, #tpu.memory_space<smem>>
    %644 = vector.broadcast %643 : f32 to vector<16x16xf32>
    %645 = arith.mulf %644, %630 : vector<16x16xf32>
    %646 = arith.addf %7, %645 : vector<16x16xf32>
    %647 = vector.extract_strided_slice %629 {offsets = [0, 1], sizes = [16, 16], strides = [1, 1]} : vector<18x18xf32> to vector<16x16xf32>
    %c1_31 = arith.constant 1 : index
    %648 = memref.load %arg1[%c1_31] : memref<144xf32, #tpu.memory_space<smem>>
    %649 = vector.broadcast %648 : f32 to vector<16x16xf32>
    %650 = arith.mulf %649, %647 : vector<16x16xf32>
    %651 = arith.addf %634, %650 : vector<16x16xf32>
    %c37_32 = arith.constant 37 : index
    %652 = memref.load %arg1[%c37_32] : memref<144xf32, #tpu.memory_space<smem>>
    %653 = vector.broadcast %652 : f32 to vector<16x16xf32>
    %654 = arith.mulf %653, %647 : vector<16x16xf32>
    %655 = arith.addf %638, %654 : vector<16x16xf32>
    %c73_33 = arith.constant 73 : index
    %656 = memref.load %arg1[%c73_33] : memref<144xf32, #tpu.memory_space<smem>>
    %657 = vector.broadcast %656 : f32 to vector<16x16xf32>
    %658 = arith.mulf %657, %647 : vector<16x16xf32>
    %659 = arith.addf %642, %658 : vector<16x16xf32>
    %c109_34 = arith.constant 109 : index
    %660 = memref.load %arg1[%c109_34] : memref<144xf32, #tpu.memory_space<smem>>
    %661 = vector.broadcast %660 : f32 to vector<16x16xf32>
    %662 = arith.mulf %661, %647 : vector<16x16xf32>
    %663 = arith.addf %646, %662 : vector<16x16xf32>
    %664 = vector.extract_strided_slice %629 {offsets = [0, 2], sizes = [16, 16], strides = [1, 1]} : vector<18x18xf32> to vector<16x16xf32>
    %c2_35 = arith.constant 2 : index
    %665 = memref.load %arg1[%c2_35] : memref<144xf32, #tpu.memory_space<smem>>
    %666 = vector.broadcast %665 : f32 to vector<16x16xf32>
    %667 = arith.mulf %666, %664 : vector<16x16xf32>
    %668 = arith.addf %651, %667 : vector<16x16xf32>
    %c38_36 = arith.constant 38 : index
    %669 = memref.load %arg1[%c38_36] : memref<144xf32, #tpu.memory_space<smem>>
    %670 = vector.broadcast %669 : f32 to vector<16x16xf32>
    %671 = arith.mulf %670, %664 : vector<16x16xf32>
    %672 = arith.addf %655, %671 : vector<16x16xf32>
    %c74_37 = arith.constant 74 : index
    %673 = memref.load %arg1[%c74_37] : memref<144xf32, #tpu.memory_space<smem>>
    %674 = vector.broadcast %673 : f32 to vector<16x16xf32>
    %675 = arith.mulf %674, %664 : vector<16x16xf32>
    %676 = arith.addf %659, %675 : vector<16x16xf32>
    %c110_38 = arith.constant 110 : index
    %677 = memref.load %arg1[%c110_38] : memref<144xf32, #tpu.memory_space<smem>>
    %678 = vector.broadcast %677 : f32 to vector<16x16xf32>
    %679 = arith.mulf %678, %664 : vector<16x16xf32>
    %680 = arith.addf %663, %679 : vector<16x16xf32>
    %681 = vector.extract_strided_slice %629 {offsets = [1, 0], sizes = [16, 16], strides = [1, 1]} : vector<18x18xf32> to vector<16x16xf32>
    %c3_39 = arith.constant 3 : index
    %682 = memref.load %arg1[%c3_39] : memref<144xf32, #tpu.memory_space<smem>>
    %683 = vector.broadcast %682 : f32 to vector<16x16xf32>
    %684 = arith.mulf %683, %681 : vector<16x16xf32>
    %685 = arith.addf %668, %684 : vector<16x16xf32>
    %c39_40 = arith.constant 39 : index
    %686 = memref.load %arg1[%c39_40] : memref<144xf32, #tpu.memory_space<smem>>
    %687 = vector.broadcast %686 : f32 to vector<16x16xf32>
    %688 = arith.mulf %687, %681 : vector<16x16xf32>
    %689 = arith.addf %672, %688 : vector<16x16xf32>
    %c75_41 = arith.constant 75 : index
    %690 = memref.load %arg1[%c75_41] : memref<144xf32, #tpu.memory_space<smem>>
    %691 = vector.broadcast %690 : f32 to vector<16x16xf32>
    %692 = arith.mulf %691, %681 : vector<16x16xf32>
    %693 = arith.addf %676, %692 : vector<16x16xf32>
    %c111_42 = arith.constant 111 : index
    %694 = memref.load %arg1[%c111_42] : memref<144xf32, #tpu.memory_space<smem>>
    %695 = vector.broadcast %694 : f32 to vector<16x16xf32>
    %696 = arith.mulf %695, %681 : vector<16x16xf32>
    %697 = arith.addf %680, %696 : vector<16x16xf32>
    %698 = vector.extract_strided_slice %629 {offsets = [1, 1], sizes = [16, 16], strides = [1, 1]} : vector<18x18xf32> to vector<16x16xf32>
    %c4_43 = arith.constant 4 : index
    %699 = memref.load %arg1[%c4_43] : memref<144xf32, #tpu.memory_space<smem>>
    %700 = vector.broadcast %699 : f32 to vector<16x16xf32>
    %701 = arith.mulf %700, %698 : vector<16x16xf32>
    %702 = arith.addf %685, %701 : vector<16x16xf32>
    %c40_44 = arith.constant 40 : index
    %703 = memref.load %arg1[%c40_44] : memref<144xf32, #tpu.memory_space<smem>>
    %704 = vector.broadcast %703 : f32 to vector<16x16xf32>
    %705 = arith.mulf %704, %698 : vector<16x16xf32>
    %706 = arith.addf %689, %705 : vector<16x16xf32>
    %c76_45 = arith.constant 76 : index
    %707 = memref.load %arg1[%c76_45] : memref<144xf32, #tpu.memory_space<smem>>
    %708 = vector.broadcast %707 : f32 to vector<16x16xf32>
    %709 = arith.mulf %708, %698 : vector<16x16xf32>
    %710 = arith.addf %693, %709 : vector<16x16xf32>
    %c112_46 = arith.constant 112 : index
    %711 = memref.load %arg1[%c112_46] : memref<144xf32, #tpu.memory_space<smem>>
    %712 = vector.broadcast %711 : f32 to vector<16x16xf32>
    %713 = arith.mulf %712, %698 : vector<16x16xf32>
    %714 = arith.addf %697, %713 : vector<16x16xf32>
    %715 = vector.extract_strided_slice %629 {offsets = [1, 2], sizes = [16, 16], strides = [1, 1]} : vector<18x18xf32> to vector<16x16xf32>
    %c5_47 = arith.constant 5 : index
    %716 = memref.load %arg1[%c5_47] : memref<144xf32, #tpu.memory_space<smem>>
    %717 = vector.broadcast %716 : f32 to vector<16x16xf32>
    %718 = arith.mulf %717, %715 : vector<16x16xf32>
    %719 = arith.addf %702, %718 : vector<16x16xf32>
    %c41_48 = arith.constant 41 : index
    %720 = memref.load %arg1[%c41_48] : memref<144xf32, #tpu.memory_space<smem>>
    %721 = vector.broadcast %720 : f32 to vector<16x16xf32>
    %722 = arith.mulf %721, %715 : vector<16x16xf32>
    %723 = arith.addf %706, %722 : vector<16x16xf32>
    %c77_49 = arith.constant 77 : index
    %724 = memref.load %arg1[%c77_49] : memref<144xf32, #tpu.memory_space<smem>>
    %725 = vector.broadcast %724 : f32 to vector<16x16xf32>
    %726 = arith.mulf %725, %715 : vector<16x16xf32>
    %727 = arith.addf %710, %726 : vector<16x16xf32>
    %c113_50 = arith.constant 113 : index
    %728 = memref.load %arg1[%c113_50] : memref<144xf32, #tpu.memory_space<smem>>
    %729 = vector.broadcast %728 : f32 to vector<16x16xf32>
    %730 = arith.mulf %729, %715 : vector<16x16xf32>
    %731 = arith.addf %714, %730 : vector<16x16xf32>
    %732 = vector.extract_strided_slice %629 {offsets = [2, 0], sizes = [16, 16], strides = [1, 1]} : vector<18x18xf32> to vector<16x16xf32>
    %c6_51 = arith.constant 6 : index
    %733 = memref.load %arg1[%c6_51] : memref<144xf32, #tpu.memory_space<smem>>
    %734 = vector.broadcast %733 : f32 to vector<16x16xf32>
    %735 = arith.mulf %734, %732 : vector<16x16xf32>
    %736 = arith.addf %719, %735 : vector<16x16xf32>
    %c42_52 = arith.constant 42 : index
    %737 = memref.load %arg1[%c42_52] : memref<144xf32, #tpu.memory_space<smem>>
    %738 = vector.broadcast %737 : f32 to vector<16x16xf32>
    %739 = arith.mulf %738, %732 : vector<16x16xf32>
    %740 = arith.addf %723, %739 : vector<16x16xf32>
    %c78_53 = arith.constant 78 : index
    %741 = memref.load %arg1[%c78_53] : memref<144xf32, #tpu.memory_space<smem>>
    %742 = vector.broadcast %741 : f32 to vector<16x16xf32>
    %743 = arith.mulf %742, %732 : vector<16x16xf32>
    %744 = arith.addf %727, %743 : vector<16x16xf32>
    %c114_54 = arith.constant 114 : index
    %745 = memref.load %arg1[%c114_54] : memref<144xf32, #tpu.memory_space<smem>>
    %746 = vector.broadcast %745 : f32 to vector<16x16xf32>
    %747 = arith.mulf %746, %732 : vector<16x16xf32>
    %748 = arith.addf %731, %747 : vector<16x16xf32>
    %749 = vector.extract_strided_slice %629 {offsets = [2, 1], sizes = [16, 16], strides = [1, 1]} : vector<18x18xf32> to vector<16x16xf32>
    %c7_55 = arith.constant 7 : index
    %750 = memref.load %arg1[%c7_55] : memref<144xf32, #tpu.memory_space<smem>>
    %751 = vector.broadcast %750 : f32 to vector<16x16xf32>
    %752 = arith.mulf %751, %749 : vector<16x16xf32>
    %753 = arith.addf %736, %752 : vector<16x16xf32>
    %c43_56 = arith.constant 43 : index
    %754 = memref.load %arg1[%c43_56] : memref<144xf32, #tpu.memory_space<smem>>
    %755 = vector.broadcast %754 : f32 to vector<16x16xf32>
    %756 = arith.mulf %755, %749 : vector<16x16xf32>
    %757 = arith.addf %740, %756 : vector<16x16xf32>
    %c79_57 = arith.constant 79 : index
    %758 = memref.load %arg1[%c79_57] : memref<144xf32, #tpu.memory_space<smem>>
    %759 = vector.broadcast %758 : f32 to vector<16x16xf32>
    %760 = arith.mulf %759, %749 : vector<16x16xf32>
    %761 = arith.addf %744, %760 : vector<16x16xf32>
    %c115_58 = arith.constant 115 : index
    %762 = memref.load %arg1[%c115_58] : memref<144xf32, #tpu.memory_space<smem>>
    %763 = vector.broadcast %762 : f32 to vector<16x16xf32>
    %764 = arith.mulf %763, %749 : vector<16x16xf32>
    %765 = arith.addf %748, %764 : vector<16x16xf32>
    %766 = vector.extract_strided_slice %629 {offsets = [2, 2], sizes = [16, 16], strides = [1, 1]} : vector<18x18xf32> to vector<16x16xf32>
    %c8_59 = arith.constant 8 : index
    %767 = memref.load %arg1[%c8_59] : memref<144xf32, #tpu.memory_space<smem>>
    %768 = vector.broadcast %767 : f32 to vector<16x16xf32>
    %769 = arith.mulf %768, %766 : vector<16x16xf32>
    %770 = arith.addf %753, %769 : vector<16x16xf32>
    %c44_60 = arith.constant 44 : index
    %771 = memref.load %arg1[%c44_60] : memref<144xf32, #tpu.memory_space<smem>>
    %772 = vector.broadcast %771 : f32 to vector<16x16xf32>
    %773 = arith.mulf %772, %766 : vector<16x16xf32>
    %774 = arith.addf %757, %773 : vector<16x16xf32>
    %c80_61 = arith.constant 80 : index
    %775 = memref.load %arg1[%c80_61] : memref<144xf32, #tpu.memory_space<smem>>
    %776 = vector.broadcast %775 : f32 to vector<16x16xf32>
    %777 = arith.mulf %776, %766 : vector<16x16xf32>
    %778 = arith.addf %761, %777 : vector<16x16xf32>
    %c116_62 = arith.constant 116 : index
    %779 = memref.load %arg1[%c116_62] : memref<144xf32, #tpu.memory_space<smem>>
    %780 = vector.broadcast %779 : f32 to vector<16x16xf32>
    %781 = arith.mulf %780, %766 : vector<16x16xf32>
    %782 = arith.addf %765, %781 : vector<16x16xf32>
    %c1_63 = arith.constant 1 : index
    %c1_64 = arith.constant 1 : index
    %c0_65 = arith.constant 0 : index
    %c0_66 = arith.constant 0 : index
    %783 = vector.load %arg0[%c1_63, %c1_64, %c0_65, %c0_66] : memref<2x4x18x18xf32, #tpu.memory_space<vmem>>, vector<1x1x18x18xf32>
    %784 = vector.shape_cast %783 : vector<1x1x18x18xf32> to vector<18x18xf32>
    %785 = vector.extract_strided_slice %784 {offsets = [0, 0], sizes = [16, 16], strides = [1, 1]} : vector<18x18xf32> to vector<16x16xf32>
    %c9_67 = arith.constant 9 : index
    %786 = memref.load %arg1[%c9_67] : memref<144xf32, #tpu.memory_space<smem>>
    %787 = vector.broadcast %786 : f32 to vector<16x16xf32>
    %788 = arith.mulf %787, %785 : vector<16x16xf32>
    %789 = arith.addf %770, %788 : vector<16x16xf32>
    %c45_68 = arith.constant 45 : index
    %790 = memref.load %arg1[%c45_68] : memref<144xf32, #tpu.memory_space<smem>>
    %791 = vector.broadcast %790 : f32 to vector<16x16xf32>
    %792 = arith.mulf %791, %785 : vector<16x16xf32>
    %793 = arith.addf %774, %792 : vector<16x16xf32>
    %c81_69 = arith.constant 81 : index
    %794 = memref.load %arg1[%c81_69] : memref<144xf32, #tpu.memory_space<smem>>
    %795 = vector.broadcast %794 : f32 to vector<16x16xf32>
    %796 = arith.mulf %795, %785 : vector<16x16xf32>
    %797 = arith.addf %778, %796 : vector<16x16xf32>
    %c117_70 = arith.constant 117 : index
    %798 = memref.load %arg1[%c117_70] : memref<144xf32, #tpu.memory_space<smem>>
    %799 = vector.broadcast %798 : f32 to vector<16x16xf32>
    %800 = arith.mulf %799, %785 : vector<16x16xf32>
    %801 = arith.addf %782, %800 : vector<16x16xf32>
    %802 = vector.extract_strided_slice %784 {offsets = [0, 1], sizes = [16, 16], strides = [1, 1]} : vector<18x18xf32> to vector<16x16xf32>
    %c10_71 = arith.constant 10 : index
    %803 = memref.load %arg1[%c10_71] : memref<144xf32, #tpu.memory_space<smem>>
    %804 = vector.broadcast %803 : f32 to vector<16x16xf32>
    %805 = arith.mulf %804, %802 : vector<16x16xf32>
    %806 = arith.addf %789, %805 : vector<16x16xf32>
    %c46_72 = arith.constant 46 : index
    %807 = memref.load %arg1[%c46_72] : memref<144xf32, #tpu.memory_space<smem>>
    %808 = vector.broadcast %807 : f32 to vector<16x16xf32>
    %809 = arith.mulf %808, %802 : vector<16x16xf32>
    %810 = arith.addf %793, %809 : vector<16x16xf32>
    %c82_73 = arith.constant 82 : index
    %811 = memref.load %arg1[%c82_73] : memref<144xf32, #tpu.memory_space<smem>>
    %812 = vector.broadcast %811 : f32 to vector<16x16xf32>
    %813 = arith.mulf %812, %802 : vector<16x16xf32>
    %814 = arith.addf %797, %813 : vector<16x16xf32>
    %c118_74 = arith.constant 118 : index
    %815 = memref.load %arg1[%c118_74] : memref<144xf32, #tpu.memory_space<smem>>
    %816 = vector.broadcast %815 : f32 to vector<16x16xf32>
    %817 = arith.mulf %816, %802 : vector<16x16xf32>
    %818 = arith.addf %801, %817 : vector<16x16xf32>
    %819 = vector.extract_strided_slice %784 {offsets = [0, 2], sizes = [16, 16], strides = [1, 1]} : vector<18x18xf32> to vector<16x16xf32>
    %c11_75 = arith.constant 11 : index
    %820 = memref.load %arg1[%c11_75] : memref<144xf32, #tpu.memory_space<smem>>
    %821 = vector.broadcast %820 : f32 to vector<16x16xf32>
    %822 = arith.mulf %821, %819 : vector<16x16xf32>
    %823 = arith.addf %806, %822 : vector<16x16xf32>
    %c47_76 = arith.constant 47 : index
    %824 = memref.load %arg1[%c47_76] : memref<144xf32, #tpu.memory_space<smem>>
    %825 = vector.broadcast %824 : f32 to vector<16x16xf32>
    %826 = arith.mulf %825, %819 : vector<16x16xf32>
    %827 = arith.addf %810, %826 : vector<16x16xf32>
    %c83_77 = arith.constant 83 : index
    %828 = memref.load %arg1[%c83_77] : memref<144xf32, #tpu.memory_space<smem>>
    %829 = vector.broadcast %828 : f32 to vector<16x16xf32>
    %830 = arith.mulf %829, %819 : vector<16x16xf32>
    %831 = arith.addf %814, %830 : vector<16x16xf32>
    %c119_78 = arith.constant 119 : index
    %832 = memref.load %arg1[%c119_78] : memref<144xf32, #tpu.memory_space<smem>>
    %833 = vector.broadcast %832 : f32 to vector<16x16xf32>
    %834 = arith.mulf %833, %819 : vector<16x16xf32>
    %835 = arith.addf %818, %834 : vector<16x16xf32>
    %836 = vector.extract_strided_slice %784 {offsets = [1, 0], sizes = [16, 16], strides = [1, 1]} : vector<18x18xf32> to vector<16x16xf32>
    %c12_79 = arith.constant 12 : index
    %837 = memref.load %arg1[%c12_79] : memref<144xf32, #tpu.memory_space<smem>>
    %838 = vector.broadcast %837 : f32 to vector<16x16xf32>
    %839 = arith.mulf %838, %836 : vector<16x16xf32>
    %840 = arith.addf %823, %839 : vector<16x16xf32>
    %c48_80 = arith.constant 48 : index
    %841 = memref.load %arg1[%c48_80] : memref<144xf32, #tpu.memory_space<smem>>
    %842 = vector.broadcast %841 : f32 to vector<16x16xf32>
    %843 = arith.mulf %842, %836 : vector<16x16xf32>
    %844 = arith.addf %827, %843 : vector<16x16xf32>
    %c84_81 = arith.constant 84 : index
    %845 = memref.load %arg1[%c84_81] : memref<144xf32, #tpu.memory_space<smem>>
    %846 = vector.broadcast %845 : f32 to vector<16x16xf32>
    %847 = arith.mulf %846, %836 : vector<16x16xf32>
    %848 = arith.addf %831, %847 : vector<16x16xf32>
    %c120_82 = arith.constant 120 : index
    %849 = memref.load %arg1[%c120_82] : memref<144xf32, #tpu.memory_space<smem>>
    %850 = vector.broadcast %849 : f32 to vector<16x16xf32>
    %851 = arith.mulf %850, %836 : vector<16x16xf32>
    %852 = arith.addf %835, %851 : vector<16x16xf32>
    %853 = vector.extract_strided_slice %784 {offsets = [1, 1], sizes = [16, 16], strides = [1, 1]} : vector<18x18xf32> to vector<16x16xf32>
    %c13_83 = arith.constant 13 : index
    %854 = memref.load %arg1[%c13_83] : memref<144xf32, #tpu.memory_space<smem>>
    %855 = vector.broadcast %854 : f32 to vector<16x16xf32>
    %856 = arith.mulf %855, %853 : vector<16x16xf32>
    %857 = arith.addf %840, %856 : vector<16x16xf32>
    %c49_84 = arith.constant 49 : index
    %858 = memref.load %arg1[%c49_84] : memref<144xf32, #tpu.memory_space<smem>>
    %859 = vector.broadcast %858 : f32 to vector<16x16xf32>
    %860 = arith.mulf %859, %853 : vector<16x16xf32>
    %861 = arith.addf %844, %860 : vector<16x16xf32>
    %c85_85 = arith.constant 85 : index
    %862 = memref.load %arg1[%c85_85] : memref<144xf32, #tpu.memory_space<smem>>
    %863 = vector.broadcast %862 : f32 to vector<16x16xf32>
    %864 = arith.mulf %863, %853 : vector<16x16xf32>
    %865 = arith.addf %848, %864 : vector<16x16xf32>
    %c121_86 = arith.constant 121 : index
    %866 = memref.load %arg1[%c121_86] : memref<144xf32, #tpu.memory_space<smem>>
    %867 = vector.broadcast %866 : f32 to vector<16x16xf32>
    %868 = arith.mulf %867, %853 : vector<16x16xf32>
    %869 = arith.addf %852, %868 : vector<16x16xf32>
    %870 = vector.extract_strided_slice %784 {offsets = [1, 2], sizes = [16, 16], strides = [1, 1]} : vector<18x18xf32> to vector<16x16xf32>
    %c14_87 = arith.constant 14 : index
    %871 = memref.load %arg1[%c14_87] : memref<144xf32, #tpu.memory_space<smem>>
    %872 = vector.broadcast %871 : f32 to vector<16x16xf32>
    %873 = arith.mulf %872, %870 : vector<16x16xf32>
    %874 = arith.addf %857, %873 : vector<16x16xf32>
    %c50_88 = arith.constant 50 : index
    %875 = memref.load %arg1[%c50_88] : memref<144xf32, #tpu.memory_space<smem>>
    %876 = vector.broadcast %875 : f32 to vector<16x16xf32>
    %877 = arith.mulf %876, %870 : vector<16x16xf32>
    %878 = arith.addf %861, %877 : vector<16x16xf32>
    %c86_89 = arith.constant 86 : index
    %879 = memref.load %arg1[%c86_89] : memref<144xf32, #tpu.memory_space<smem>>
    %880 = vector.broadcast %879 : f32 to vector<16x16xf32>
    %881 = arith.mulf %880, %870 : vector<16x16xf32>
    %882 = arith.addf %865, %881 : vector<16x16xf32>
    %c122_90 = arith.constant 122 : index
    %883 = memref.load %arg1[%c122_90] : memref<144xf32, #tpu.memory_space<smem>>
    %884 = vector.broadcast %883 : f32 to vector<16x16xf32>
    %885 = arith.mulf %884, %870 : vector<16x16xf32>
    %886 = arith.addf %869, %885 : vector<16x16xf32>
    %887 = vector.extract_strided_slice %784 {offsets = [2, 0], sizes = [16, 16], strides = [1, 1]} : vector<18x18xf32> to vector<16x16xf32>
    %c15_91 = arith.constant 15 : index
    %888 = memref.load %arg1[%c15_91] : memref<144xf32, #tpu.memory_space<smem>>
    %889 = vector.broadcast %888 : f32 to vector<16x16xf32>
    %890 = arith.mulf %889, %887 : vector<16x16xf32>
    %891 = arith.addf %874, %890 : vector<16x16xf32>
    %c51_92 = arith.constant 51 : index
    %892 = memref.load %arg1[%c51_92] : memref<144xf32, #tpu.memory_space<smem>>
    %893 = vector.broadcast %892 : f32 to vector<16x16xf32>
    %894 = arith.mulf %893, %887 : vector<16x16xf32>
    %895 = arith.addf %878, %894 : vector<16x16xf32>
    %c87_93 = arith.constant 87 : index
    %896 = memref.load %arg1[%c87_93] : memref<144xf32, #tpu.memory_space<smem>>
    %897 = vector.broadcast %896 : f32 to vector<16x16xf32>
    %898 = arith.mulf %897, %887 : vector<16x16xf32>
    %899 = arith.addf %882, %898 : vector<16x16xf32>
    %c123_94 = arith.constant 123 : index
    %900 = memref.load %arg1[%c123_94] : memref<144xf32, #tpu.memory_space<smem>>
    %901 = vector.broadcast %900 : f32 to vector<16x16xf32>
    %902 = arith.mulf %901, %887 : vector<16x16xf32>
    %903 = arith.addf %886, %902 : vector<16x16xf32>
    %904 = vector.extract_strided_slice %784 {offsets = [2, 1], sizes = [16, 16], strides = [1, 1]} : vector<18x18xf32> to vector<16x16xf32>
    %c16_95 = arith.constant 16 : index
    %905 = memref.load %arg1[%c16_95] : memref<144xf32, #tpu.memory_space<smem>>
    %906 = vector.broadcast %905 : f32 to vector<16x16xf32>
    %907 = arith.mulf %906, %904 : vector<16x16xf32>
    %908 = arith.addf %891, %907 : vector<16x16xf32>
    %c52_96 = arith.constant 52 : index
    %909 = memref.load %arg1[%c52_96] : memref<144xf32, #tpu.memory_space<smem>>
    %910 = vector.broadcast %909 : f32 to vector<16x16xf32>
    %911 = arith.mulf %910, %904 : vector<16x16xf32>
    %912 = arith.addf %895, %911 : vector<16x16xf32>
    %c88_97 = arith.constant 88 : index
    %913 = memref.load %arg1[%c88_97] : memref<144xf32, #tpu.memory_space<smem>>
    %914 = vector.broadcast %913 : f32 to vector<16x16xf32>
    %915 = arith.mulf %914, %904 : vector<16x16xf32>
    %916 = arith.addf %899, %915 : vector<16x16xf32>
    %c124_98 = arith.constant 124 : index
    %917 = memref.load %arg1[%c124_98] : memref<144xf32, #tpu.memory_space<smem>>
    %918 = vector.broadcast %917 : f32 to vector<16x16xf32>
    %919 = arith.mulf %918, %904 : vector<16x16xf32>
    %920 = arith.addf %903, %919 : vector<16x16xf32>
    %921 = vector.extract_strided_slice %784 {offsets = [2, 2], sizes = [16, 16], strides = [1, 1]} : vector<18x18xf32> to vector<16x16xf32>
    %c17_99 = arith.constant 17 : index
    %922 = memref.load %arg1[%c17_99] : memref<144xf32, #tpu.memory_space<smem>>
    %923 = vector.broadcast %922 : f32 to vector<16x16xf32>
    %924 = arith.mulf %923, %921 : vector<16x16xf32>
    %925 = arith.addf %908, %924 : vector<16x16xf32>
    %c53_100 = arith.constant 53 : index
    %926 = memref.load %arg1[%c53_100] : memref<144xf32, #tpu.memory_space<smem>>
    %927 = vector.broadcast %926 : f32 to vector<16x16xf32>
    %928 = arith.mulf %927, %921 : vector<16x16xf32>
    %929 = arith.addf %912, %928 : vector<16x16xf32>
    %c89_101 = arith.constant 89 : index
    %930 = memref.load %arg1[%c89_101] : memref<144xf32, #tpu.memory_space<smem>>
    %931 = vector.broadcast %930 : f32 to vector<16x16xf32>
    %932 = arith.mulf %931, %921 : vector<16x16xf32>
    %933 = arith.addf %916, %932 : vector<16x16xf32>
    %c125_102 = arith.constant 125 : index
    %934 = memref.load %arg1[%c125_102] : memref<144xf32, #tpu.memory_space<smem>>
    %935 = vector.broadcast %934 : f32 to vector<16x16xf32>
    %936 = arith.mulf %935, %921 : vector<16x16xf32>
    %937 = arith.addf %920, %936 : vector<16x16xf32>
    %c1_103 = arith.constant 1 : index
    %c2_104 = arith.constant 2 : index
    %c0_105 = arith.constant 0 : index
    %c0_106 = arith.constant 0 : index
    %938 = vector.load %arg0[%c1_103, %c2_104, %c0_105, %c0_106] : memref<2x4x18x18xf32, #tpu.memory_space<vmem>>, vector<1x1x18x18xf32>
    %939 = vector.shape_cast %938 : vector<1x1x18x18xf32> to vector<18x18xf32>
    %940 = vector.extract_strided_slice %939 {offsets = [0, 0], sizes = [16, 16], strides = [1, 1]} : vector<18x18xf32> to vector<16x16xf32>
    %c18_107 = arith.constant 18 : index
    %941 = memref.load %arg1[%c18_107] : memref<144xf32, #tpu.memory_space<smem>>
    %942 = vector.broadcast %941 : f32 to vector<16x16xf32>
    %943 = arith.mulf %942, %940 : vector<16x16xf32>
    %944 = arith.addf %925, %943 : vector<16x16xf32>
    %c54_108 = arith.constant 54 : index
    %945 = memref.load %arg1[%c54_108] : memref<144xf32, #tpu.memory_space<smem>>
    %946 = vector.broadcast %945 : f32 to vector<16x16xf32>
    %947 = arith.mulf %946, %940 : vector<16x16xf32>
    %948 = arith.addf %929, %947 : vector<16x16xf32>
    %c90_109 = arith.constant 90 : index
    %949 = memref.load %arg1[%c90_109] : memref<144xf32, #tpu.memory_space<smem>>
    %950 = vector.broadcast %949 : f32 to vector<16x16xf32>
    %951 = arith.mulf %950, %940 : vector<16x16xf32>
    %952 = arith.addf %933, %951 : vector<16x16xf32>
    %c126_110 = arith.constant 126 : index
    %953 = memref.load %arg1[%c126_110] : memref<144xf32, #tpu.memory_space<smem>>
    %954 = vector.broadcast %953 : f32 to vector<16x16xf32>
    %955 = arith.mulf %954, %940 : vector<16x16xf32>
    %956 = arith.addf %937, %955 : vector<16x16xf32>
    %957 = vector.extract_strided_slice %939 {offsets = [0, 1], sizes = [16, 16], strides = [1, 1]} : vector<18x18xf32> to vector<16x16xf32>
    %c19_111 = arith.constant 19 : index
    %958 = memref.load %arg1[%c19_111] : memref<144xf32, #tpu.memory_space<smem>>
    %959 = vector.broadcast %958 : f32 to vector<16x16xf32>
    %960 = arith.mulf %959, %957 : vector<16x16xf32>
    %961 = arith.addf %944, %960 : vector<16x16xf32>
    %c55_112 = arith.constant 55 : index
    %962 = memref.load %arg1[%c55_112] : memref<144xf32, #tpu.memory_space<smem>>
    %963 = vector.broadcast %962 : f32 to vector<16x16xf32>
    %964 = arith.mulf %963, %957 : vector<16x16xf32>
    %965 = arith.addf %948, %964 : vector<16x16xf32>
    %c91_113 = arith.constant 91 : index
    %966 = memref.load %arg1[%c91_113] : memref<144xf32, #tpu.memory_space<smem>>
    %967 = vector.broadcast %966 : f32 to vector<16x16xf32>
    %968 = arith.mulf %967, %957 : vector<16x16xf32>
    %969 = arith.addf %952, %968 : vector<16x16xf32>
    %c127_114 = arith.constant 127 : index
    %970 = memref.load %arg1[%c127_114] : memref<144xf32, #tpu.memory_space<smem>>
    %971 = vector.broadcast %970 : f32 to vector<16x16xf32>
    %972 = arith.mulf %971, %957 : vector<16x16xf32>
    %973 = arith.addf %956, %972 : vector<16x16xf32>
    %974 = vector.extract_strided_slice %939 {offsets = [0, 2], sizes = [16, 16], strides = [1, 1]} : vector<18x18xf32> to vector<16x16xf32>
    %c20_115 = arith.constant 20 : index
    %975 = memref.load %arg1[%c20_115] : memref<144xf32, #tpu.memory_space<smem>>
    %976 = vector.broadcast %975 : f32 to vector<16x16xf32>
    %977 = arith.mulf %976, %974 : vector<16x16xf32>
    %978 = arith.addf %961, %977 : vector<16x16xf32>
    %c56_116 = arith.constant 56 : index
    %979 = memref.load %arg1[%c56_116] : memref<144xf32, #tpu.memory_space<smem>>
    %980 = vector.broadcast %979 : f32 to vector<16x16xf32>
    %981 = arith.mulf %980, %974 : vector<16x16xf32>
    %982 = arith.addf %965, %981 : vector<16x16xf32>
    %c92_117 = arith.constant 92 : index
    %983 = memref.load %arg1[%c92_117] : memref<144xf32, #tpu.memory_space<smem>>
    %984 = vector.broadcast %983 : f32 to vector<16x16xf32>
    %985 = arith.mulf %984, %974 : vector<16x16xf32>
    %986 = arith.addf %969, %985 : vector<16x16xf32>
    %c128_118 = arith.constant 128 : index
    %987 = memref.load %arg1[%c128_118] : memref<144xf32, #tpu.memory_space<smem>>
    %988 = vector.broadcast %987 : f32 to vector<16x16xf32>
    %989 = arith.mulf %988, %974 : vector<16x16xf32>
    %990 = arith.addf %973, %989 : vector<16x16xf32>
    %991 = vector.extract_strided_slice %939 {offsets = [1, 0], sizes = [16, 16], strides = [1, 1]} : vector<18x18xf32> to vector<16x16xf32>
    %c21_119 = arith.constant 21 : index
    %992 = memref.load %arg1[%c21_119] : memref<144xf32, #tpu.memory_space<smem>>
    %993 = vector.broadcast %992 : f32 to vector<16x16xf32>
    %994 = arith.mulf %993, %991 : vector<16x16xf32>
    %995 = arith.addf %978, %994 : vector<16x16xf32>
    %c57_120 = arith.constant 57 : index
    %996 = memref.load %arg1[%c57_120] : memref<144xf32, #tpu.memory_space<smem>>
    %997 = vector.broadcast %996 : f32 to vector<16x16xf32>
    %998 = arith.mulf %997, %991 : vector<16x16xf32>
    %999 = arith.addf %982, %998 : vector<16x16xf32>
    %c93_121 = arith.constant 93 : index
    %1000 = memref.load %arg1[%c93_121] : memref<144xf32, #tpu.memory_space<smem>>
    %1001 = vector.broadcast %1000 : f32 to vector<16x16xf32>
    %1002 = arith.mulf %1001, %991 : vector<16x16xf32>
    %1003 = arith.addf %986, %1002 : vector<16x16xf32>
    %c129_122 = arith.constant 129 : index
    %1004 = memref.load %arg1[%c129_122] : memref<144xf32, #tpu.memory_space<smem>>
    %1005 = vector.broadcast %1004 : f32 to vector<16x16xf32>
    %1006 = arith.mulf %1005, %991 : vector<16x16xf32>
    %1007 = arith.addf %990, %1006 : vector<16x16xf32>
    %1008 = vector.extract_strided_slice %939 {offsets = [1, 1], sizes = [16, 16], strides = [1, 1]} : vector<18x18xf32> to vector<16x16xf32>
    %c22_123 = arith.constant 22 : index
    %1009 = memref.load %arg1[%c22_123] : memref<144xf32, #tpu.memory_space<smem>>
    %1010 = vector.broadcast %1009 : f32 to vector<16x16xf32>
    %1011 = arith.mulf %1010, %1008 : vector<16x16xf32>
    %1012 = arith.addf %995, %1011 : vector<16x16xf32>
    %c58_124 = arith.constant 58 : index
    %1013 = memref.load %arg1[%c58_124] : memref<144xf32, #tpu.memory_space<smem>>
    %1014 = vector.broadcast %1013 : f32 to vector<16x16xf32>
    %1015 = arith.mulf %1014, %1008 : vector<16x16xf32>
    %1016 = arith.addf %999, %1015 : vector<16x16xf32>
    %c94_125 = arith.constant 94 : index
    %1017 = memref.load %arg1[%c94_125] : memref<144xf32, #tpu.memory_space<smem>>
    %1018 = vector.broadcast %1017 : f32 to vector<16x16xf32>
    %1019 = arith.mulf %1018, %1008 : vector<16x16xf32>
    %1020 = arith.addf %1003, %1019 : vector<16x16xf32>
    %c130_126 = arith.constant 130 : index
    %1021 = memref.load %arg1[%c130_126] : memref<144xf32, #tpu.memory_space<smem>>
    %1022 = vector.broadcast %1021 : f32 to vector<16x16xf32>
    %1023 = arith.mulf %1022, %1008 : vector<16x16xf32>
    %1024 = arith.addf %1007, %1023 : vector<16x16xf32>
    %1025 = vector.extract_strided_slice %939 {offsets = [1, 2], sizes = [16, 16], strides = [1, 1]} : vector<18x18xf32> to vector<16x16xf32>
    %c23_127 = arith.constant 23 : index
    %1026 = memref.load %arg1[%c23_127] : memref<144xf32, #tpu.memory_space<smem>>
    %1027 = vector.broadcast %1026 : f32 to vector<16x16xf32>
    %1028 = arith.mulf %1027, %1025 : vector<16x16xf32>
    %1029 = arith.addf %1012, %1028 : vector<16x16xf32>
    %c59_128 = arith.constant 59 : index
    %1030 = memref.load %arg1[%c59_128] : memref<144xf32, #tpu.memory_space<smem>>
    %1031 = vector.broadcast %1030 : f32 to vector<16x16xf32>
    %1032 = arith.mulf %1031, %1025 : vector<16x16xf32>
    %1033 = arith.addf %1016, %1032 : vector<16x16xf32>
    %c95_129 = arith.constant 95 : index
    %1034 = memref.load %arg1[%c95_129] : memref<144xf32, #tpu.memory_space<smem>>
    %1035 = vector.broadcast %1034 : f32 to vector<16x16xf32>
    %1036 = arith.mulf %1035, %1025 : vector<16x16xf32>
    %1037 = arith.addf %1020, %1036 : vector<16x16xf32>
    %c131_130 = arith.constant 131 : index
    %1038 = memref.load %arg1[%c131_130] : memref<144xf32, #tpu.memory_space<smem>>
    %1039 = vector.broadcast %1038 : f32 to vector<16x16xf32>
    %1040 = arith.mulf %1039, %1025 : vector<16x16xf32>
    %1041 = arith.addf %1024, %1040 : vector<16x16xf32>
    %1042 = vector.extract_strided_slice %939 {offsets = [2, 0], sizes = [16, 16], strides = [1, 1]} : vector<18x18xf32> to vector<16x16xf32>
    %c24_131 = arith.constant 24 : index
    %1043 = memref.load %arg1[%c24_131] : memref<144xf32, #tpu.memory_space<smem>>
    %1044 = vector.broadcast %1043 : f32 to vector<16x16xf32>
    %1045 = arith.mulf %1044, %1042 : vector<16x16xf32>
    %1046 = arith.addf %1029, %1045 : vector<16x16xf32>
    %c60_132 = arith.constant 60 : index
    %1047 = memref.load %arg1[%c60_132] : memref<144xf32, #tpu.memory_space<smem>>
    %1048 = vector.broadcast %1047 : f32 to vector<16x16xf32>
    %1049 = arith.mulf %1048, %1042 : vector<16x16xf32>
    %1050 = arith.addf %1033, %1049 : vector<16x16xf32>
    %c96_133 = arith.constant 96 : index
    %1051 = memref.load %arg1[%c96_133] : memref<144xf32, #tpu.memory_space<smem>>
    %1052 = vector.broadcast %1051 : f32 to vector<16x16xf32>
    %1053 = arith.mulf %1052, %1042 : vector<16x16xf32>
    %1054 = arith.addf %1037, %1053 : vector<16x16xf32>
    %c132_134 = arith.constant 132 : index
    %1055 = memref.load %arg1[%c132_134] : memref<144xf32, #tpu.memory_space<smem>>
    %1056 = vector.broadcast %1055 : f32 to vector<16x16xf32>
    %1057 = arith.mulf %1056, %1042 : vector<16x16xf32>
    %1058 = arith.addf %1041, %1057 : vector<16x16xf32>
    %1059 = vector.extract_strided_slice %939 {offsets = [2, 1], sizes = [16, 16], strides = [1, 1]} : vector<18x18xf32> to vector<16x16xf32>
    %c25_135 = arith.constant 25 : index
    %1060 = memref.load %arg1[%c25_135] : memref<144xf32, #tpu.memory_space<smem>>
    %1061 = vector.broadcast %1060 : f32 to vector<16x16xf32>
    %1062 = arith.mulf %1061, %1059 : vector<16x16xf32>
    %1063 = arith.addf %1046, %1062 : vector<16x16xf32>
    %c61_136 = arith.constant 61 : index
    %1064 = memref.load %arg1[%c61_136] : memref<144xf32, #tpu.memory_space<smem>>
    %1065 = vector.broadcast %1064 : f32 to vector<16x16xf32>
    %1066 = arith.mulf %1065, %1059 : vector<16x16xf32>
    %1067 = arith.addf %1050, %1066 : vector<16x16xf32>
    %c97_137 = arith.constant 97 : index
    %1068 = memref.load %arg1[%c97_137] : memref<144xf32, #tpu.memory_space<smem>>
    %1069 = vector.broadcast %1068 : f32 to vector<16x16xf32>
    %1070 = arith.mulf %1069, %1059 : vector<16x16xf32>
    %1071 = arith.addf %1054, %1070 : vector<16x16xf32>
    %c133_138 = arith.constant 133 : index
    %1072 = memref.load %arg1[%c133_138] : memref<144xf32, #tpu.memory_space<smem>>
    %1073 = vector.broadcast %1072 : f32 to vector<16x16xf32>
    %1074 = arith.mulf %1073, %1059 : vector<16x16xf32>
    %1075 = arith.addf %1058, %1074 : vector<16x16xf32>
    %1076 = vector.extract_strided_slice %939 {offsets = [2, 2], sizes = [16, 16], strides = [1, 1]} : vector<18x18xf32> to vector<16x16xf32>
    %c26_139 = arith.constant 26 : index
    %1077 = memref.load %arg1[%c26_139] : memref<144xf32, #tpu.memory_space<smem>>
    %1078 = vector.broadcast %1077 : f32 to vector<16x16xf32>
    %1079 = arith.mulf %1078, %1076 : vector<16x16xf32>
    %1080 = arith.addf %1063, %1079 : vector<16x16xf32>
    %c62_140 = arith.constant 62 : index
    %1081 = memref.load %arg1[%c62_140] : memref<144xf32, #tpu.memory_space<smem>>
    %1082 = vector.broadcast %1081 : f32 to vector<16x16xf32>
    %1083 = arith.mulf %1082, %1076 : vector<16x16xf32>
    %1084 = arith.addf %1067, %1083 : vector<16x16xf32>
    %c98_141 = arith.constant 98 : index
    %1085 = memref.load %arg1[%c98_141] : memref<144xf32, #tpu.memory_space<smem>>
    %1086 = vector.broadcast %1085 : f32 to vector<16x16xf32>
    %1087 = arith.mulf %1086, %1076 : vector<16x16xf32>
    %1088 = arith.addf %1071, %1087 : vector<16x16xf32>
    %c134_142 = arith.constant 134 : index
    %1089 = memref.load %arg1[%c134_142] : memref<144xf32, #tpu.memory_space<smem>>
    %1090 = vector.broadcast %1089 : f32 to vector<16x16xf32>
    %1091 = arith.mulf %1090, %1076 : vector<16x16xf32>
    %1092 = arith.addf %1075, %1091 : vector<16x16xf32>
    %c1_143 = arith.constant 1 : index
    %c3_144 = arith.constant 3 : index
    %c0_145 = arith.constant 0 : index
    %c0_146 = arith.constant 0 : index
    %1093 = vector.load %arg0[%c1_143, %c3_144, %c0_145, %c0_146] : memref<2x4x18x18xf32, #tpu.memory_space<vmem>>, vector<1x1x18x18xf32>
    %1094 = vector.shape_cast %1093 : vector<1x1x18x18xf32> to vector<18x18xf32>
    %1095 = vector.extract_strided_slice %1094 {offsets = [0, 0], sizes = [16, 16], strides = [1, 1]} : vector<18x18xf32> to vector<16x16xf32>
    %c27_147 = arith.constant 27 : index
    %1096 = memref.load %arg1[%c27_147] : memref<144xf32, #tpu.memory_space<smem>>
    %1097 = vector.broadcast %1096 : f32 to vector<16x16xf32>
    %1098 = arith.mulf %1097, %1095 : vector<16x16xf32>
    %1099 = arith.addf %1080, %1098 : vector<16x16xf32>
    %c63_148 = arith.constant 63 : index
    %1100 = memref.load %arg1[%c63_148] : memref<144xf32, #tpu.memory_space<smem>>
    %1101 = vector.broadcast %1100 : f32 to vector<16x16xf32>
    %1102 = arith.mulf %1101, %1095 : vector<16x16xf32>
    %1103 = arith.addf %1084, %1102 : vector<16x16xf32>
    %c99_149 = arith.constant 99 : index
    %1104 = memref.load %arg1[%c99_149] : memref<144xf32, #tpu.memory_space<smem>>
    %1105 = vector.broadcast %1104 : f32 to vector<16x16xf32>
    %1106 = arith.mulf %1105, %1095 : vector<16x16xf32>
    %1107 = arith.addf %1088, %1106 : vector<16x16xf32>
    %c135_150 = arith.constant 135 : index
    %1108 = memref.load %arg1[%c135_150] : memref<144xf32, #tpu.memory_space<smem>>
    %1109 = vector.broadcast %1108 : f32 to vector<16x16xf32>
    %1110 = arith.mulf %1109, %1095 : vector<16x16xf32>
    %1111 = arith.addf %1092, %1110 : vector<16x16xf32>
    %1112 = vector.extract_strided_slice %1094 {offsets = [0, 1], sizes = [16, 16], strides = [1, 1]} : vector<18x18xf32> to vector<16x16xf32>
    %c28_151 = arith.constant 28 : index
    %1113 = memref.load %arg1[%c28_151] : memref<144xf32, #tpu.memory_space<smem>>
    %1114 = vector.broadcast %1113 : f32 to vector<16x16xf32>
    %1115 = arith.mulf %1114, %1112 : vector<16x16xf32>
    %1116 = arith.addf %1099, %1115 : vector<16x16xf32>
    %c64_152 = arith.constant 64 : index
    %1117 = memref.load %arg1[%c64_152] : memref<144xf32, #tpu.memory_space<smem>>
    %1118 = vector.broadcast %1117 : f32 to vector<16x16xf32>
    %1119 = arith.mulf %1118, %1112 : vector<16x16xf32>
    %1120 = arith.addf %1103, %1119 : vector<16x16xf32>
    %c100_153 = arith.constant 100 : index
    %1121 = memref.load %arg1[%c100_153] : memref<144xf32, #tpu.memory_space<smem>>
    %1122 = vector.broadcast %1121 : f32 to vector<16x16xf32>
    %1123 = arith.mulf %1122, %1112 : vector<16x16xf32>
    %1124 = arith.addf %1107, %1123 : vector<16x16xf32>
    %c136_154 = arith.constant 136 : index
    %1125 = memref.load %arg1[%c136_154] : memref<144xf32, #tpu.memory_space<smem>>
    %1126 = vector.broadcast %1125 : f32 to vector<16x16xf32>
    %1127 = arith.mulf %1126, %1112 : vector<16x16xf32>
    %1128 = arith.addf %1111, %1127 : vector<16x16xf32>
    %1129 = vector.extract_strided_slice %1094 {offsets = [0, 2], sizes = [16, 16], strides = [1, 1]} : vector<18x18xf32> to vector<16x16xf32>
    %c29_155 = arith.constant 29 : index
    %1130 = memref.load %arg1[%c29_155] : memref<144xf32, #tpu.memory_space<smem>>
    %1131 = vector.broadcast %1130 : f32 to vector<16x16xf32>
    %1132 = arith.mulf %1131, %1129 : vector<16x16xf32>
    %1133 = arith.addf %1116, %1132 : vector<16x16xf32>
    %c65_156 = arith.constant 65 : index
    %1134 = memref.load %arg1[%c65_156] : memref<144xf32, #tpu.memory_space<smem>>
    %1135 = vector.broadcast %1134 : f32 to vector<16x16xf32>
    %1136 = arith.mulf %1135, %1129 : vector<16x16xf32>
    %1137 = arith.addf %1120, %1136 : vector<16x16xf32>
    %c101_157 = arith.constant 101 : index
    %1138 = memref.load %arg1[%c101_157] : memref<144xf32, #tpu.memory_space<smem>>
    %1139 = vector.broadcast %1138 : f32 to vector<16x16xf32>
    %1140 = arith.mulf %1139, %1129 : vector<16x16xf32>
    %1141 = arith.addf %1124, %1140 : vector<16x16xf32>
    %c137_158 = arith.constant 137 : index
    %1142 = memref.load %arg1[%c137_158] : memref<144xf32, #tpu.memory_space<smem>>
    %1143 = vector.broadcast %1142 : f32 to vector<16x16xf32>
    %1144 = arith.mulf %1143, %1129 : vector<16x16xf32>
    %1145 = arith.addf %1128, %1144 : vector<16x16xf32>
    %1146 = vector.extract_strided_slice %1094 {offsets = [1, 0], sizes = [16, 16], strides = [1, 1]} : vector<18x18xf32> to vector<16x16xf32>
    %c30_159 = arith.constant 30 : index
    %1147 = memref.load %arg1[%c30_159] : memref<144xf32, #tpu.memory_space<smem>>
    %1148 = vector.broadcast %1147 : f32 to vector<16x16xf32>
    %1149 = arith.mulf %1148, %1146 : vector<16x16xf32>
    %1150 = arith.addf %1133, %1149 : vector<16x16xf32>
    %c66_160 = arith.constant 66 : index
    %1151 = memref.load %arg1[%c66_160] : memref<144xf32, #tpu.memory_space<smem>>
    %1152 = vector.broadcast %1151 : f32 to vector<16x16xf32>
    %1153 = arith.mulf %1152, %1146 : vector<16x16xf32>
    %1154 = arith.addf %1137, %1153 : vector<16x16xf32>
    %c102_161 = arith.constant 102 : index
    %1155 = memref.load %arg1[%c102_161] : memref<144xf32, #tpu.memory_space<smem>>
    %1156 = vector.broadcast %1155 : f32 to vector<16x16xf32>
    %1157 = arith.mulf %1156, %1146 : vector<16x16xf32>
    %1158 = arith.addf %1141, %1157 : vector<16x16xf32>
    %c138_162 = arith.constant 138 : index
    %1159 = memref.load %arg1[%c138_162] : memref<144xf32, #tpu.memory_space<smem>>
    %1160 = vector.broadcast %1159 : f32 to vector<16x16xf32>
    %1161 = arith.mulf %1160, %1146 : vector<16x16xf32>
    %1162 = arith.addf %1145, %1161 : vector<16x16xf32>
    %1163 = vector.extract_strided_slice %1094 {offsets = [1, 1], sizes = [16, 16], strides = [1, 1]} : vector<18x18xf32> to vector<16x16xf32>
    %c31_163 = arith.constant 31 : index
    %1164 = memref.load %arg1[%c31_163] : memref<144xf32, #tpu.memory_space<smem>>
    %1165 = vector.broadcast %1164 : f32 to vector<16x16xf32>
    %1166 = arith.mulf %1165, %1163 : vector<16x16xf32>
    %1167 = arith.addf %1150, %1166 : vector<16x16xf32>
    %c67_164 = arith.constant 67 : index
    %1168 = memref.load %arg1[%c67_164] : memref<144xf32, #tpu.memory_space<smem>>
    %1169 = vector.broadcast %1168 : f32 to vector<16x16xf32>
    %1170 = arith.mulf %1169, %1163 : vector<16x16xf32>
    %1171 = arith.addf %1154, %1170 : vector<16x16xf32>
    %c103_165 = arith.constant 103 : index
    %1172 = memref.load %arg1[%c103_165] : memref<144xf32, #tpu.memory_space<smem>>
    %1173 = vector.broadcast %1172 : f32 to vector<16x16xf32>
    %1174 = arith.mulf %1173, %1163 : vector<16x16xf32>
    %1175 = arith.addf %1158, %1174 : vector<16x16xf32>
    %c139_166 = arith.constant 139 : index
    %1176 = memref.load %arg1[%c139_166] : memref<144xf32, #tpu.memory_space<smem>>
    %1177 = vector.broadcast %1176 : f32 to vector<16x16xf32>
    %1178 = arith.mulf %1177, %1163 : vector<16x16xf32>
    %1179 = arith.addf %1162, %1178 : vector<16x16xf32>
    %1180 = vector.extract_strided_slice %1094 {offsets = [1, 2], sizes = [16, 16], strides = [1, 1]} : vector<18x18xf32> to vector<16x16xf32>
    %c32_167 = arith.constant 32 : index
    %1181 = memref.load %arg1[%c32_167] : memref<144xf32, #tpu.memory_space<smem>>
    %1182 = vector.broadcast %1181 : f32 to vector<16x16xf32>
    %1183 = arith.mulf %1182, %1180 : vector<16x16xf32>
    %1184 = arith.addf %1167, %1183 : vector<16x16xf32>
    %c68_168 = arith.constant 68 : index
    %1185 = memref.load %arg1[%c68_168] : memref<144xf32, #tpu.memory_space<smem>>
    %1186 = vector.broadcast %1185 : f32 to vector<16x16xf32>
    %1187 = arith.mulf %1186, %1180 : vector<16x16xf32>
    %1188 = arith.addf %1171, %1187 : vector<16x16xf32>
    %c104_169 = arith.constant 104 : index
    %1189 = memref.load %arg1[%c104_169] : memref<144xf32, #tpu.memory_space<smem>>
    %1190 = vector.broadcast %1189 : f32 to vector<16x16xf32>
    %1191 = arith.mulf %1190, %1180 : vector<16x16xf32>
    %1192 = arith.addf %1175, %1191 : vector<16x16xf32>
    %c140_170 = arith.constant 140 : index
    %1193 = memref.load %arg1[%c140_170] : memref<144xf32, #tpu.memory_space<smem>>
    %1194 = vector.broadcast %1193 : f32 to vector<16x16xf32>
    %1195 = arith.mulf %1194, %1180 : vector<16x16xf32>
    %1196 = arith.addf %1179, %1195 : vector<16x16xf32>
    %1197 = vector.extract_strided_slice %1094 {offsets = [2, 0], sizes = [16, 16], strides = [1, 1]} : vector<18x18xf32> to vector<16x16xf32>
    %c33_171 = arith.constant 33 : index
    %1198 = memref.load %arg1[%c33_171] : memref<144xf32, #tpu.memory_space<smem>>
    %1199 = vector.broadcast %1198 : f32 to vector<16x16xf32>
    %1200 = arith.mulf %1199, %1197 : vector<16x16xf32>
    %1201 = arith.addf %1184, %1200 : vector<16x16xf32>
    %c69_172 = arith.constant 69 : index
    %1202 = memref.load %arg1[%c69_172] : memref<144xf32, #tpu.memory_space<smem>>
    %1203 = vector.broadcast %1202 : f32 to vector<16x16xf32>
    %1204 = arith.mulf %1203, %1197 : vector<16x16xf32>
    %1205 = arith.addf %1188, %1204 : vector<16x16xf32>
    %c105_173 = arith.constant 105 : index
    %1206 = memref.load %arg1[%c105_173] : memref<144xf32, #tpu.memory_space<smem>>
    %1207 = vector.broadcast %1206 : f32 to vector<16x16xf32>
    %1208 = arith.mulf %1207, %1197 : vector<16x16xf32>
    %1209 = arith.addf %1192, %1208 : vector<16x16xf32>
    %c141_174 = arith.constant 141 : index
    %1210 = memref.load %arg1[%c141_174] : memref<144xf32, #tpu.memory_space<smem>>
    %1211 = vector.broadcast %1210 : f32 to vector<16x16xf32>
    %1212 = arith.mulf %1211, %1197 : vector<16x16xf32>
    %1213 = arith.addf %1196, %1212 : vector<16x16xf32>
    %1214 = vector.extract_strided_slice %1094 {offsets = [2, 1], sizes = [16, 16], strides = [1, 1]} : vector<18x18xf32> to vector<16x16xf32>
    %c34_175 = arith.constant 34 : index
    %1215 = memref.load %arg1[%c34_175] : memref<144xf32, #tpu.memory_space<smem>>
    %1216 = vector.broadcast %1215 : f32 to vector<16x16xf32>
    %1217 = arith.mulf %1216, %1214 : vector<16x16xf32>
    %1218 = arith.addf %1201, %1217 : vector<16x16xf32>
    %c70_176 = arith.constant 70 : index
    %1219 = memref.load %arg1[%c70_176] : memref<144xf32, #tpu.memory_space<smem>>
    %1220 = vector.broadcast %1219 : f32 to vector<16x16xf32>
    %1221 = arith.mulf %1220, %1214 : vector<16x16xf32>
    %1222 = arith.addf %1205, %1221 : vector<16x16xf32>
    %c106_177 = arith.constant 106 : index
    %1223 = memref.load %arg1[%c106_177] : memref<144xf32, #tpu.memory_space<smem>>
    %1224 = vector.broadcast %1223 : f32 to vector<16x16xf32>
    %1225 = arith.mulf %1224, %1214 : vector<16x16xf32>
    %1226 = arith.addf %1209, %1225 : vector<16x16xf32>
    %c142_178 = arith.constant 142 : index
    %1227 = memref.load %arg1[%c142_178] : memref<144xf32, #tpu.memory_space<smem>>
    %1228 = vector.broadcast %1227 : f32 to vector<16x16xf32>
    %1229 = arith.mulf %1228, %1214 : vector<16x16xf32>
    %1230 = arith.addf %1213, %1229 : vector<16x16xf32>
    %1231 = vector.extract_strided_slice %1094 {offsets = [2, 2], sizes = [16, 16], strides = [1, 1]} : vector<18x18xf32> to vector<16x16xf32>
    %c35_179 = arith.constant 35 : index
    %1232 = memref.load %arg1[%c35_179] : memref<144xf32, #tpu.memory_space<smem>>
    %1233 = vector.broadcast %1232 : f32 to vector<16x16xf32>
    %1234 = arith.mulf %1233, %1231 : vector<16x16xf32>
    %1235 = arith.addf %1218, %1234 : vector<16x16xf32>
    %c71_180 = arith.constant 71 : index
    %1236 = memref.load %arg1[%c71_180] : memref<144xf32, #tpu.memory_space<smem>>
    %1237 = vector.broadcast %1236 : f32 to vector<16x16xf32>
    %1238 = arith.mulf %1237, %1231 : vector<16x16xf32>
    %1239 = arith.addf %1222, %1238 : vector<16x16xf32>
    %c107_181 = arith.constant 107 : index
    %1240 = memref.load %arg1[%c107_181] : memref<144xf32, #tpu.memory_space<smem>>
    %1241 = vector.broadcast %1240 : f32 to vector<16x16xf32>
    %1242 = arith.mulf %1241, %1231 : vector<16x16xf32>
    %1243 = arith.addf %1226, %1242 : vector<16x16xf32>
    %c143_182 = arith.constant 143 : index
    %1244 = memref.load %arg1[%c143_182] : memref<144xf32, #tpu.memory_space<smem>>
    %1245 = vector.broadcast %1244 : f32 to vector<16x16xf32>
    %1246 = arith.mulf %1245, %1231 : vector<16x16xf32>
    %1247 = arith.addf %1230, %1246 : vector<16x16xf32>
    %c0_183 = arith.constant 0 : index
    %1248 = memref.load %arg2[%c0_183] : memref<4xf32, #tpu.memory_space<smem>>
    %1249 = vector.broadcast %1248 : f32 to vector<16x16xf32>
    %1250 = arith.addf %615, %1249 : vector<16x16xf32>
    %c0_184 = arith.constant 0 : index
    %1251 = memref.load %arg2[%c0_184] : memref<4xf32, #tpu.memory_space<smem>>
    %1252 = vector.broadcast %1251 : f32 to vector<16x16xf32>
    %1253 = arith.addf %1235, %1252 : vector<16x16xf32>
    %cst_185 = arith.constant 0.000000e+00 : f32
    %1254 = vector.broadcast %cst_185 : f32 to vector<1x1xf32>
    %cst_186 = arith.constant dense<0.000000e+00> : vector<16xf32>
    %1255 = vector.multi_reduction <add>, %1250, %cst_186 [1] : vector<16x16xf32> to vector<16xf32>
    %1256 = vector.shape_cast %1255 : vector<16xf32> to vector<16x1xf32>
    %cst_187 = arith.constant dense<0.000000e+00> : vector<1xf32>
    %1257 = vector.multi_reduction <add>, %1256, %cst_187 [0] : vector<16x1xf32> to vector<1xf32>
    %1258 = vector.shape_cast %1257 : vector<1xf32> to vector<1x1xf32>
    %1259 = arith.addf %1254, %1258 : vector<1x1xf32>
    %cst_188 = arith.constant dense<0.000000e+00> : vector<16xf32>
    %1260 = vector.multi_reduction <add>, %1253, %cst_188 [1] : vector<16x16xf32> to vector<16xf32>
    %1261 = vector.shape_cast %1260 : vector<16xf32> to vector<16x1xf32>
    %cst_189 = arith.constant dense<0.000000e+00> : vector<1xf32>
    %1262 = vector.multi_reduction <add>, %1261, %cst_189 [0] : vector<16x1xf32> to vector<1xf32>
    %1263 = vector.shape_cast %1262 : vector<1xf32> to vector<1x1xf32>
    %1264 = arith.addf %1259, %1263 : vector<1x1xf32>
    %cst_190 = arith.constant 0.001953125 : f32
    %1265 = vector.broadcast %cst_190 : f32 to vector<1x1xf32>
    %1266 = arith.mulf %1264, %1265 : vector<1x1xf32>
    %1267 = vector.broadcast %1266 : vector<1x1xf32> to vector<16x16xf32>
    %1268 = arith.subf %1250, %1267 : vector<16x16xf32>
    %1269 = vector.broadcast %1266 : vector<1x1xf32> to vector<16x16xf32>
    %1270 = arith.subf %1253, %1269 : vector<16x16xf32>
    %cst_191 = arith.constant 0.000000e+00 : f32
    %1271 = vector.broadcast %cst_191 : f32 to vector<1x1xf32>
    %1272 = arith.mulf %1268, %1268 : vector<16x16xf32>
    %cst_192 = arith.constant dense<0.000000e+00> : vector<16xf32>
    %1273 = vector.multi_reduction <add>, %1272, %cst_192 [1] : vector<16x16xf32> to vector<16xf32>
    %1274 = vector.shape_cast %1273 : vector<16xf32> to vector<16x1xf32>
    %cst_193 = arith.constant dense<0.000000e+00> : vector<1xf32>
    %1275 = vector.multi_reduction <add>, %1274, %cst_193 [0] : vector<16x1xf32> to vector<1xf32>
    %1276 = vector.shape_cast %1275 : vector<1xf32> to vector<1x1xf32>
    %1277 = arith.addf %1271, %1276 : vector<1x1xf32>
    %1278 = arith.mulf %1270, %1270 : vector<16x16xf32>
    %cst_194 = arith.constant dense<0.000000e+00> : vector<16xf32>
    %1279 = vector.multi_reduction <add>, %1278, %cst_194 [1] : vector<16x16xf32> to vector<16xf32>
    %1280 = vector.shape_cast %1279 : vector<16xf32> to vector<16x1xf32>
    %cst_195 = arith.constant dense<0.000000e+00> : vector<1xf32>
    %1281 = vector.multi_reduction <add>, %1280, %cst_195 [0] : vector<16x1xf32> to vector<1xf32>
    %1282 = vector.shape_cast %1281 : vector<1xf32> to vector<1x1xf32>
    %1283 = arith.addf %1277, %1282 : vector<1x1xf32>
    %cst_196 = arith.constant 0.001953125 : f32
    %1284 = vector.broadcast %cst_196 : f32 to vector<1x1xf32>
    %1285 = arith.mulf %1283, %1284 : vector<1x1xf32>
    %cst_197 = arith.constant 9.99999974E-6 : f32
    %1286 = vector.broadcast %cst_197 : f32 to vector<1x1xf32>
    %1287 = arith.addf %1285, %1286 : vector<1x1xf32>
    %1288 = math.rsqrt %1287 : vector<1x1xf32>
    %1289 = vector.broadcast %1288 : vector<1x1xf32> to vector<16x16xf32>
    %1290 = arith.mulf %1268, %1289 : vector<16x16xf32>
    %cst_198 = arith.constant 0.000000e+00 : f32
    %1291 = vector.broadcast %cst_198 : f32 to vector<16x16xf32>
    %1292 = arith.maximumf %1290, %1291 : vector<16x16xf32>
    %c0_199 = arith.constant 0 : index
    %c0_200 = arith.constant 0 : index
    %c0_201 = arith.constant 0 : index
    %c0_202 = arith.constant 0 : index
    %1293 = vector.load %arg3[%c0_199, %c0_200, %c0_201, %c0_202] : memref<2x4x16x16xf32, #tpu.memory_space<vmem>>, vector<1x1x16x16xf32>
    %1294 = vector.shape_cast %1293 : vector<1x1x16x16xf32> to vector<16x16xf32>
    %1295 = vector.shape_cast %1292 : vector<16x16xf32> to vector<1x1x16x16xf32>
    tpu.vector_store %arg3[%c0_199, %c0_200, %c0_201, %c0_202], %1295 {strides = array<i32>} : memref<2x4x16x16xf32, #tpu.memory_space<vmem>>, vector<1x1x16x16xf32>,
    %1296 = vector.broadcast %1288 : vector<1x1xf32> to vector<16x16xf32>
    %1297 = arith.mulf %1270, %1296 : vector<16x16xf32>
    %cst_203 = arith.constant 0.000000e+00 : f32
    %1298 = vector.broadcast %cst_203 : f32 to vector<16x16xf32>
    %1299 = arith.maximumf %1297, %1298 : vector<16x16xf32>
    %c1_204 = arith.constant 1 : index
    %c0_205 = arith.constant 0 : index
    %c0_206 = arith.constant 0 : index
    %c0_207 = arith.constant 0 : index
    %1300 = vector.load %arg3[%c1_204, %c0_205, %c0_206, %c0_207] : memref<2x4x16x16xf32, #tpu.memory_space<vmem>>, vector<1x1x16x16xf32>
    %1301 = vector.shape_cast %1300 : vector<1x1x16x16xf32> to vector<16x16xf32>
    %1302 = vector.shape_cast %1299 : vector<16x16xf32> to vector<1x1x16x16xf32>
    tpu.vector_store %arg3[%c1_204, %c0_205, %c0_206, %c0_207], %1302 {strides = array<i32>} : memref<2x4x16x16xf32, #tpu.memory_space<vmem>>, vector<1x1x16x16xf32>,
    %c1_208 = arith.constant 1 : index
    %1303 = memref.load %arg2[%c1_208] : memref<4xf32, #tpu.memory_space<smem>>
    %1304 = vector.broadcast %1303 : f32 to vector<16x16xf32>
    %1305 = arith.addf %619, %1304 : vector<16x16xf32>
    %c1_209 = arith.constant 1 : index
    %1306 = memref.load %arg2[%c1_209] : memref<4xf32, #tpu.memory_space<smem>>
    %1307 = vector.broadcast %1306 : f32 to vector<16x16xf32>
    %1308 = arith.addf %1239, %1307 : vector<16x16xf32>
    %cst_210 = arith.constant 0.000000e+00 : f32
    %1309 = vector.broadcast %cst_210 : f32 to vector<1x1xf32>
    %cst_211 = arith.constant dense<0.000000e+00> : vector<16xf32>
    %1310 = vector.multi_reduction <add>, %1305, %cst_211 [1] : vector<16x16xf32> to vector<16xf32>
    %1311 = vector.shape_cast %1310 : vector<16xf32> to vector<16x1xf32>
    %cst_212 = arith.constant dense<0.000000e+00> : vector<1xf32>
    %1312 = vector.multi_reduction <add>, %1311, %cst_212 [0] : vector<16x1xf32> to vector<1xf32>
    %1313 = vector.shape_cast %1312 : vector<1xf32> to vector<1x1xf32>
    %1314 = arith.addf %1309, %1313 : vector<1x1xf32>
    %cst_213 = arith.constant dense<0.000000e+00> : vector<16xf32>
    %1315 = vector.multi_reduction <add>, %1308, %cst_213 [1] : vector<16x16xf32> to vector<16xf32>
    %1316 = vector.shape_cast %1315 : vector<16xf32> to vector<16x1xf32>
    %cst_214 = arith.constant dense<0.000000e+00> : vector<1xf32>
    %1317 = vector.multi_reduction <add>, %1316, %cst_214 [0] : vector<16x1xf32> to vector<1xf32>
    %1318 = vector.shape_cast %1317 : vector<1xf32> to vector<1x1xf32>
    %1319 = arith.addf %1314, %1318 : vector<1x1xf32>
    %cst_215 = arith.constant 0.001953125 : f32
    %1320 = vector.broadcast %cst_215 : f32 to vector<1x1xf32>
    %1321 = arith.mulf %1319, %1320 : vector<1x1xf32>
    %1322 = vector.broadcast %1321 : vector<1x1xf32> to vector<16x16xf32>
    %1323 = arith.subf %1305, %1322 : vector<16x16xf32>
    %1324 = vector.broadcast %1321 : vector<1x1xf32> to vector<16x16xf32>
    %1325 = arith.subf %1308, %1324 : vector<16x16xf32>
    %cst_216 = arith.constant 0.000000e+00 : f32
    %1326 = vector.broadcast %cst_216 : f32 to vector<1x1xf32>
    %1327 = arith.mulf %1323, %1323 : vector<16x16xf32>
    %cst_217 = arith.constant dense<0.000000e+00> : vector<16xf32>
    %1328 = vector.multi_reduction <add>, %1327, %cst_217 [1] : vector<16x16xf32> to vector<16xf32>
    %1329 = vector.shape_cast %1328 : vector<16xf32> to vector<16x1xf32>
    %cst_218 = arith.constant dense<0.000000e+00> : vector<1xf32>
    %1330 = vector.multi_reduction <add>, %1329, %cst_218 [0] : vector<16x1xf32> to vector<1xf32>
    %1331 = vector.shape_cast %1330 : vector<1xf32> to vector<1x1xf32>
    %1332 = arith.addf %1326, %1331 : vector<1x1xf32>
    %1333 = arith.mulf %1325, %1325 : vector<16x16xf32>
    %cst_219 = arith.constant dense<0.000000e+00> : vector<16xf32>
    %1334 = vector.multi_reduction <add>, %1333, %cst_219 [1] : vector<16x16xf32> to vector<16xf32>
    %1335 = vector.shape_cast %1334 : vector<16xf32> to vector<16x1xf32>
    %cst_220 = arith.constant dense<0.000000e+00> : vector<1xf32>
    %1336 = vector.multi_reduction <add>, %1335, %cst_220 [0] : vector<16x1xf32> to vector<1xf32>
    %1337 = vector.shape_cast %1336 : vector<1xf32> to vector<1x1xf32>
    %1338 = arith.addf %1332, %1337 : vector<1x1xf32>
    %cst_221 = arith.constant 0.001953125 : f32
    %1339 = vector.broadcast %cst_221 : f32 to vector<1x1xf32>
    %1340 = arith.mulf %1338, %1339 : vector<1x1xf32>
    %cst_222 = arith.constant 9.99999974E-6 : f32
    %1341 = vector.broadcast %cst_222 : f32 to vector<1x1xf32>
    %1342 = arith.addf %1340, %1341 : vector<1x1xf32>
    %1343 = math.rsqrt %1342 : vector<1x1xf32>
    %1344 = vector.broadcast %1343 : vector<1x1xf32> to vector<16x16xf32>
    %1345 = arith.mulf %1323, %1344 : vector<16x16xf32>
    %cst_223 = arith.constant 0.000000e+00 : f32
    %1346 = vector.broadcast %cst_223 : f32 to vector<16x16xf32>
    %1347 = arith.maximumf %1345, %1346 : vector<16x16xf32>
    %c0_224 = arith.constant 0 : index
    %c1_225 = arith.constant 1 : index
    %c0_226 = arith.constant 0 : index
    %c0_227 = arith.constant 0 : index
    %1348 = vector.load %arg3[%c0_224, %c1_225, %c0_226, %c0_227] : memref<2x4x16x16xf32, #tpu.memory_space<vmem>>, vector<1x1x16x16xf32>
    %1349 = vector.shape_cast %1348 : vector<1x1x16x16xf32> to vector<16x16xf32>
    %1350 = vector.shape_cast %1347 : vector<16x16xf32> to vector<1x1x16x16xf32>
    tpu.vector_store %arg3[%c0_224, %c1_225, %c0_226, %c0_227], %1350 {strides = array<i32>} : memref<2x4x16x16xf32, #tpu.memory_space<vmem>>, vector<1x1x16x16xf32>,
    %1351 = vector.broadcast %1343 : vector<1x1xf32> to vector<16x16xf32>
    %1352 = arith.mulf %1325, %1351 : vector<16x16xf32>
    %cst_228 = arith.constant 0.000000e+00 : f32
    %1353 = vector.broadcast %cst_228 : f32 to vector<16x16xf32>
    %1354 = arith.maximumf %1352, %1353 : vector<16x16xf32>
    %c1_229 = arith.constant 1 : index
    %c1_230 = arith.constant 1 : index
    %c0_231 = arith.constant 0 : index
    %c0_232 = arith.constant 0 : index
    %1355 = vector.load %arg3[%c1_229, %c1_230, %c0_231, %c0_232] : memref<2x4x16x16xf32, #tpu.memory_space<vmem>>, vector<1x1x16x16xf32>
    %1356 = vector.shape_cast %1355 : vector<1x1x16x16xf32> to vector<16x16xf32>
    %1357 = vector.shape_cast %1354 : vector<16x16xf32> to vector<1x1x16x16xf32>
    tpu.vector_store %arg3[%c1_229, %c1_230, %c0_231, %c0_232], %1357 {strides = array<i32>} : memref<2x4x16x16xf32, #tpu.memory_space<vmem>>, vector<1x1x16x16xf32>,
    %c2_233 = arith.constant 2 : index
    %1358 = memref.load %arg2[%c2_233] : memref<4xf32, #tpu.memory_space<smem>>
    %1359 = vector.broadcast %1358 : f32 to vector<16x16xf32>
    %1360 = arith.addf %623, %1359 : vector<16x16xf32>
    %c2_234 = arith.constant 2 : index
    %1361 = memref.load %arg2[%c2_234] : memref<4xf32, #tpu.memory_space<smem>>
    %1362 = vector.broadcast %1361 : f32 to vector<16x16xf32>
    %1363 = arith.addf %1243, %1362 : vector<16x16xf32>
    %cst_235 = arith.constant 0.000000e+00 : f32
    %1364 = vector.broadcast %cst_235 : f32 to vector<1x1xf32>
    %cst_236 = arith.constant dense<0.000000e+00> : vector<16xf32>
    %1365 = vector.multi_reduction <add>, %1360, %cst_236 [1] : vector<16x16xf32> to vector<16xf32>
    %1366 = vector.shape_cast %1365 : vector<16xf32> to vector<16x1xf32>
    %cst_237 = arith.constant dense<0.000000e+00> : vector<1xf32>
    %1367 = vector.multi_reduction <add>, %1366, %cst_237 [0] : vector<16x1xf32> to vector<1xf32>
    %1368 = vector.shape_cast %1367 : vector<1xf32> to vector<1x1xf32>
    %1369 = arith.addf %1364, %1368 : vector<1x1xf32>
    %cst_238 = arith.constant dense<0.000000e+00> : vector<16xf32>
    %1370 = vector.multi_reduction <add>, %1363, %cst_238 [1] : vector<16x16xf32> to vector<16xf32>
    %1371 = vector.shape_cast %1370 : vector<16xf32> to vector<16x1xf32>
    %cst_239 = arith.constant dense<0.000000e+00> : vector<1xf32>
    %1372 = vector.multi_reduction <add>, %1371, %cst_239 [0] : vector<16x1xf32> to vector<1xf32>
    %1373 = vector.shape_cast %1372 : vector<1xf32> to vector<1x1xf32>
    %1374 = arith.addf %1369, %1373 : vector<1x1xf32>
    %cst_240 = arith.constant 0.001953125 : f32
    %1375 = vector.broadcast %cst_240 : f32 to vector<1x1xf32>
    %1376 = arith.mulf %1374, %1375 : vector<1x1xf32>
    %1377 = vector.broadcast %1376 : vector<1x1xf32> to vector<16x16xf32>
    %1378 = arith.subf %1360, %1377 : vector<16x16xf32>
    %1379 = vector.broadcast %1376 : vector<1x1xf32> to vector<16x16xf32>
    %1380 = arith.subf %1363, %1379 : vector<16x16xf32>
    %cst_241 = arith.constant 0.000000e+00 : f32
    %1381 = vector.broadcast %cst_241 : f32 to vector<1x1xf32>
    %1382 = arith.mulf %1378, %1378 : vector<16x16xf32>
    %cst_242 = arith.constant dense<0.000000e+00> : vector<16xf32>
    %1383 = vector.multi_reduction <add>, %1382, %cst_242 [1] : vector<16x16xf32> to vector<16xf32>
    %1384 = vector.shape_cast %1383 : vector<16xf32> to vector<16x1xf32>
    %cst_243 = arith.constant dense<0.000000e+00> : vector<1xf32>
    %1385 = vector.multi_reduction <add>, %1384, %cst_243 [0] : vector<16x1xf32> to vector<1xf32>
    %1386 = vector.shape_cast %1385 : vector<1xf32> to vector<1x1xf32>
    %1387 = arith.addf %1381, %1386 : vector<1x1xf32>
    %1388 = arith.mulf %1380, %1380 : vector<16x16xf32>
    %cst_244 = arith.constant dense<0.000000e+00> : vector<16xf32>
    %1389 = vector.multi_reduction <add>, %1388, %cst_244 [1] : vector<16x16xf32> to vector<16xf32>
    %1390 = vector.shape_cast %1389 : vector<16xf32> to vector<16x1xf32>
    %cst_245 = arith.constant dense<0.000000e+00> : vector<1xf32>
    %1391 = vector.multi_reduction <add>, %1390, %cst_245 [0] : vector<16x1xf32> to vector<1xf32>
    %1392 = vector.shape_cast %1391 : vector<1xf32> to vector<1x1xf32>
    %1393 = arith.addf %1387, %1392 : vector<1x1xf32>
    %cst_246 = arith.constant 0.001953125 : f32
    %1394 = vector.broadcast %cst_246 : f32 to vector<1x1xf32>
    %1395 = arith.mulf %1393, %1394 : vector<1x1xf32>
    %cst_247 = arith.constant 9.99999974E-6 : f32
    %1396 = vector.broadcast %cst_247 : f32 to vector<1x1xf32>
    %1397 = arith.addf %1395, %1396 : vector<1x1xf32>
    %1398 = math.rsqrt %1397 : vector<1x1xf32>
    %1399 = vector.broadcast %1398 : vector<1x1xf32> to vector<16x16xf32>
    %1400 = arith.mulf %1378, %1399 : vector<16x16xf32>
    %cst_248 = arith.constant 0.000000e+00 : f32
    %1401 = vector.broadcast %cst_248 : f32 to vector<16x16xf32>
    %1402 = arith.maximumf %1400, %1401 : vector<16x16xf32>
    %c0_249 = arith.constant 0 : index
    %c2_250 = arith.constant 2 : index
    %c0_251 = arith.constant 0 : index
    %c0_252 = arith.constant 0 : index
    %1403 = vector.load %arg3[%c0_249, %c2_250, %c0_251, %c0_252] : memref<2x4x16x16xf32, #tpu.memory_space<vmem>>, vector<1x1x16x16xf32>
    %1404 = vector.shape_cast %1403 : vector<1x1x16x16xf32> to vector<16x16xf32>
    %1405 = vector.shape_cast %1402 : vector<16x16xf32> to vector<1x1x16x16xf32>
    tpu.vector_store %arg3[%c0_249, %c2_250, %c0_251, %c0_252], %1405 {strides = array<i32>} : memref<2x4x16x16xf32, #tpu.memory_space<vmem>>, vector<1x1x16x16xf32>,
    %1406 = vector.broadcast %1398 : vector<1x1xf32> to vector<16x16xf32>
    %1407 = arith.mulf %1380, %1406 : vector<16x16xf32>
    %cst_253 = arith.constant 0.000000e+00 : f32
    %1408 = vector.broadcast %cst_253 : f32 to vector<16x16xf32>
    %1409 = arith.maximumf %1407, %1408 : vector<16x16xf32>
    %c1_254 = arith.constant 1 : index
    %c2_255 = arith.constant 2 : index
    %c0_256 = arith.constant 0 : index
    %c0_257 = arith.constant 0 : index
    %1410 = vector.load %arg3[%c1_254, %c2_255, %c0_256, %c0_257] : memref<2x4x16x16xf32, #tpu.memory_space<vmem>>, vector<1x1x16x16xf32>
    %1411 = vector.shape_cast %1410 : vector<1x1x16x16xf32> to vector<16x16xf32>
    %1412 = vector.shape_cast %1409 : vector<16x16xf32> to vector<1x1x16x16xf32>
    tpu.vector_store %arg3[%c1_254, %c2_255, %c0_256, %c0_257], %1412 {strides = array<i32>} : memref<2x4x16x16xf32, #tpu.memory_space<vmem>>, vector<1x1x16x16xf32>,
    %c3_258 = arith.constant 3 : index
    %1413 = memref.load %arg2[%c3_258] : memref<4xf32, #tpu.memory_space<smem>>
    %1414 = vector.broadcast %1413 : f32 to vector<16x16xf32>
    %1415 = arith.addf %627, %1414 : vector<16x16xf32>
    %c3_259 = arith.constant 3 : index
    %1416 = memref.load %arg2[%c3_259] : memref<4xf32, #tpu.memory_space<smem>>
    %1417 = vector.broadcast %1416 : f32 to vector<16x16xf32>
    %1418 = arith.addf %1247, %1417 : vector<16x16xf32>
    %cst_260 = arith.constant 0.000000e+00 : f32
    %1419 = vector.broadcast %cst_260 : f32 to vector<1x1xf32>
    %cst_261 = arith.constant dense<0.000000e+00> : vector<16xf32>
    %1420 = vector.multi_reduction <add>, %1415, %cst_261 [1] : vector<16x16xf32> to vector<16xf32>
    %1421 = vector.shape_cast %1420 : vector<16xf32> to vector<16x1xf32>
    %cst_262 = arith.constant dense<0.000000e+00> : vector<1xf32>
    %1422 = vector.multi_reduction <add>, %1421, %cst_262 [0] : vector<16x1xf32> to vector<1xf32>
    %1423 = vector.shape_cast %1422 : vector<1xf32> to vector<1x1xf32>
    %1424 = arith.addf %1419, %1423 : vector<1x1xf32>
    %cst_263 = arith.constant dense<0.000000e+00> : vector<16xf32>
    %1425 = vector.multi_reduction <add>, %1418, %cst_263 [1] : vector<16x16xf32> to vector<16xf32>
    %1426 = vector.shape_cast %1425 : vector<16xf32> to vector<16x1xf32>
    %cst_264 = arith.constant dense<0.000000e+00> : vector<1xf32>
    %1427 = vector.multi_reduction <add>, %1426, %cst_264 [0] : vector<16x1xf32> to vector<1xf32>
    %1428 = vector.shape_cast %1427 : vector<1xf32> to vector<1x1xf32>
    %1429 = arith.addf %1424, %1428 : vector<1x1xf32>
    %cst_265 = arith.constant 0.001953125 : f32
    %1430 = vector.broadcast %cst_265 : f32 to vector<1x1xf32>
    %1431 = arith.mulf %1429, %1430 : vector<1x1xf32>
    %1432 = vector.broadcast %1431 : vector<1x1xf32> to vector<16x16xf32>
    %1433 = arith.subf %1415, %1432 : vector<16x16xf32>
    %1434 = vector.broadcast %1431 : vector<1x1xf32> to vector<16x16xf32>
    %1435 = arith.subf %1418, %1434 : vector<16x16xf32>
    %cst_266 = arith.constant 0.000000e+00 : f32
    %1436 = vector.broadcast %cst_266 : f32 to vector<1x1xf32>
    %1437 = arith.mulf %1433, %1433 : vector<16x16xf32>
    %cst_267 = arith.constant dense<0.000000e+00> : vector<16xf32>
    %1438 = vector.multi_reduction <add>, %1437, %cst_267 [1] : vector<16x16xf32> to vector<16xf32>
    %1439 = vector.shape_cast %1438 : vector<16xf32> to vector<16x1xf32>
    %cst_268 = arith.constant dense<0.000000e+00> : vector<1xf32>
    %1440 = vector.multi_reduction <add>, %1439, %cst_268 [0] : vector<16x1xf32> to vector<1xf32>
    %1441 = vector.shape_cast %1440 : vector<1xf32> to vector<1x1xf32>
    %1442 = arith.addf %1436, %1441 : vector<1x1xf32>
    %1443 = arith.mulf %1435, %1435 : vector<16x16xf32>
    %cst_269 = arith.constant dense<0.000000e+00> : vector<16xf32>
    %1444 = vector.multi_reduction <add>, %1443, %cst_269 [1] : vector<16x16xf32> to vector<16xf32>
    %1445 = vector.shape_cast %1444 : vector<16xf32> to vector<16x1xf32>
    %cst_270 = arith.constant dense<0.000000e+00> : vector<1xf32>
    %1446 = vector.multi_reduction <add>, %1445, %cst_270 [0] : vector<16x1xf32> to vector<1xf32>
    %1447 = vector.shape_cast %1446 : vector<1xf32> to vector<1x1xf32>
    %1448 = arith.addf %1442, %1447 : vector<1x1xf32>
    %cst_271 = arith.constant 0.001953125 : f32
    %1449 = vector.broadcast %cst_271 : f32 to vector<1x1xf32>
    %1450 = arith.mulf %1448, %1449 : vector<1x1xf32>
    %cst_272 = arith.constant 9.99999974E-6 : f32
    %1451 = vector.broadcast %cst_272 : f32 to vector<1x1xf32>
    %1452 = arith.addf %1450, %1451 : vector<1x1xf32>
    %1453 = math.rsqrt %1452 : vector<1x1xf32>
    %1454 = vector.broadcast %1453 : vector<1x1xf32> to vector<16x16xf32>
    %1455 = arith.mulf %1433, %1454 : vector<16x16xf32>
    %cst_273 = arith.constant 0.000000e+00 : f32
    %1456 = vector.broadcast %cst_273 : f32 to vector<16x16xf32>
    %1457 = arith.maximumf %1455, %1456 : vector<16x16xf32>
    %c0_274 = arith.constant 0 : index
    %c3_275 = arith.constant 3 : index
    %c0_276 = arith.constant 0 : index
    %c0_277 = arith.constant 0 : index
    %1458 = vector.load %arg3[%c0_274, %c3_275, %c0_276, %c0_277] : memref<2x4x16x16xf32, #tpu.memory_space<vmem>>, vector<1x1x16x16xf32>
    %1459 = vector.shape_cast %1458 : vector<1x1x16x16xf32> to vector<16x16xf32>
    %1460 = vector.shape_cast %1457 : vector<16x16xf32> to vector<1x1x16x16xf32>
    tpu.vector_store %arg3[%c0_274, %c3_275, %c0_276, %c0_277], %1460 {strides = array<i32>} : memref<2x4x16x16xf32, #tpu.memory_space<vmem>>, vector<1x1x16x16xf32>,
    %1461 = vector.broadcast %1453 : vector<1x1xf32> to vector<16x16xf32>
    %1462 = arith.mulf %1435, %1461 : vector<16x16xf32>
    %cst_278 = arith.constant 0.000000e+00 : f32
    %1463 = vector.broadcast %cst_278 : f32 to vector<16x16xf32>
    %1464 = arith.maximumf %1462, %1463 : vector<16x16xf32>
    %c1_279 = arith.constant 1 : index
    %c3_280 = arith.constant 3 : index
    %c0_281 = arith.constant 0 : index
    %c0_282 = arith.constant 0 : index
    %1465 = vector.load %arg3[%c1_279, %c3_280, %c0_281, %c0_282] : memref<2x4x16x16xf32, #tpu.memory_space<vmem>>, vector<1x1x16x16xf32>
    %1466 = vector.shape_cast %1465 : vector<1x1x16x16xf32> to vector<16x16xf32>
    %1467 = vector.shape_cast %1464 : vector<16x16xf32> to vector<1x1x16x16xf32>
    tpu.vector_store %arg3[%c1_279, %c3_280, %c0_281, %c0_282], %1467 {strides = array<i32>} : memref<2x4x16x16xf32, #tpu.memory_space<vmem>>, vector<1x1x16x16xf32>,
    return
  }
}

</mosaic_0001>

<llo_original>
// kernel: tpu_custom_call.1
$region0: #{tpu_custom_call.1}
  #allocation0 [shape = 'u32[]', space=smem, size = 0x4, offset = 0x4, fixed_abs, tag = 'smem constant byte address 0x4 - core index']
  #allocation1 [shape = 'u32[144,128]{1,0:T(1,128)}', space=vmem, size = 0x12000, scoped, tag = 'internal scratch']
  %s0 = inlined_call_operand.vmem [shape: f32[2,4,18,18], index: 0, kind: input, shape index: {}]
  %s1 = inlined_call_operand.vmem [shape: f32[144], index: 1, kind: input, shape index: {}]
  %s2 = inlined_call_operand.vmem [shape: f32[4], index: 2, kind: input, shape index: {}]
  %s3 = inlined_call_operand.hbm [shape: f32[2,4,16,16], index: 3, kind: output, shape index: {}]
  %s4 = sld [smem:[#allocation0]]
  $region30: #{tpu_custom_call.1} parent=0
    _
  %s6 = ssub.s32 1, %s4
  %s7 = scalar_select 0, %s6, %s4
  $region1: #{tpu_custom_call.1} parent=0
    #allocation2 [shape = 'u8[1024]{0}', space=smem, size = 0x400, scoped, tag = 'input window, operand 1, single buffered']
    #allocation3 [shape = 's32[1]{0}', space=sflag, size = 0x4, scoped, tag = 'scoped memory for tpu_custom_call.1']
    #allocation4 [shape = 's32[1]{0}', space=sflag, size = 0x4, scoped, tag = 'scoped memory for tpu_custom_call.1']
    #allocation5 [shape = 'u8[512]{0}', space=smem, size = 0x200, scoped, tag = 'input window, operand 2, single buffered']
    #allocation6 [shape = 's32[1]{0}', space=sflag, size = 0x4, scoped, tag = 'scoped memory for tpu_custom_call.1']
    #allocation7 [shape = 'u8[65536]{0}', space=vmem, size = 0x10000, scoped, tag = 'output window, operand 0, single buffered']
    %8 = vsyncpa [#allocation4], 0
    %9 = vsyncpa [#allocation6], 0
    %10 = vsyncpa [#allocation3], 0
    // Predicated region
    $region2: #{tpu_custom_call.1} parent=1 // pred_check
      _
    $region3: #{tpu_custom_call.1} parent=1 // pred_check_branch
      %12 = sbr.rel (0) target = $region5
    $region4: #{tpu_custom_call.1} parent=1 // pred_region
      _
    $region5: #{tpu_custom_call.1} parent=1 // pred_fallthru
      _
    // Predicated region
    $region6: #{tpu_custom_call.1} parent=1 // pred_check
      _
    $region7: #{tpu_custom_call.1} parent=1 // pred_check_branch
      %14 = sbr.rel (0) target = $region9
    $region8: #{tpu_custom_call.1} parent=1 // pred_region
      %s16 = ssub.s32 32, 32
      %17 = vsyncadd [#allocation4], %s16
      %s19 = sshll.u32 %s1, 4
      %s20 = int_to_ptr.vmem [resolvable:$true] %s19
      %22 = dma.vmem_to_smem %s20, 32, [#allocation2], [#allocation4]
    $region9: #{tpu_custom_call.1} parent=1 // pred_fallthru
      _
    // Predicated region
    $region10: #{tpu_custom_call.1} parent=1 // pred_check
      _
    $region11: #{tpu_custom_call.1} parent=1 // pred_check_branch
      %24 = sbr.rel (0) target = $region13
    $region12: #{tpu_custom_call.1} parent=1 // pred_region
      %s26 = ssub.s32 16, 16
      %27 = vsyncadd [#allocation6], %s26
      %s29 = sshll.u32 %s2, 4
      %s30 = int_to_ptr.vmem [resolvable:$true] %s29
      %32 = dma.vmem_to_smem %s30, 16, [#allocation5], [#allocation6]
    $region13: #{tpu_custom_call.1} parent=1 // pred_fallthru
      _
    // Predicated region
    $region14: #{tpu_custom_call.1} parent=1 // pred_check
      _
    $region15: #{tpu_custom_call.1} parent=1 // pred_check_branch
      %34 = sbr.rel (0) target = $region17
    $region16: #{tpu_custom_call.1} parent=1 // pred_region
      %35 = dma.done [#allocation4], 32
    $region17: #{tpu_custom_call.1} parent=1 // pred_fallthru
      _
    // Predicated region
    $region18: #{tpu_custom_call.1} parent=1 // pred_check
      _
    $region19: #{tpu_custom_call.1} parent=1 // pred_check_branch
      %37 = sbr.rel (0) target = $region21
    $region20: #{tpu_custom_call.1} parent=1 // pred_region
      %38 = dma.done [#allocation6], 16
    $region21: #{tpu_custom_call.1} parent=1 // pred_fallthru
      _
    %39 = sfence
    %v40 = vld [vmem:[%s0] sm:$0xff]
    %v41 = vld [vmem:[%s0 + $0x8] sm:$0xff]
    %v42 = vld [vmem:[%s0 + $0x10] sm:$0x3]
    %s43 = sld [smem:[#allocation2]]
    %v44 = vstv %s43
    %v45 = vmul.f32 %v44, %v40
    %v46 = vmul.f32 %v44, %v41
    %v47 = vadd.f32 %v45, 0.0
    %v48 = vadd.f32 %v46, 0.0
    %s49 = sld [smem:[#allocation2 + $0x24]]
    %v50 = vstv %s49
    %v51 = vmul.f32 %v50, %v40
    %v52 = vmul.f32 %v50, %v41
    %v53 = vadd.f32 %v51, 0.0
    %v54 = vadd.f32 %v52, 0.0
    %s55 = sld [smem:[#allocation2 + $0x48]]
    %v56 = vstv %s55
    %v57 = vmul.f32 %v56, %v40
    %v58 = vmul.f32 %v56, %v41
    %v59 = vadd.f32 %v57, 0.0
    %v60 = vadd.f32 %v58, 0.0
    %s61 = sld [smem:[#allocation2 + $0x6c]]
    %v62 = vstv %s61
    %v63 = vmul.f32 %v62, %v40
    %v64 = vmul.f32 %v62, %v41
    %v65 = vadd.f32 %v63, 0.0
    %v66 = vadd.f32 %v64, 0.0
    %s67 = sld [smem:[#allocation2 + $0x1]]
    %v68 = vstv %s67
    %v69 = vmul.f32 %v68, %v40
    %v70 = vmul.f32 %v68, %v41
    %73 = vrot.lane.b32.xlu0 %v69, 127
    %v74 = vpop.permute.xlu0 %73
    %75 = vrot.lane.b32.xlu0 %v70, 127
    %v76 = vpop.permute.xlu0 %75
    %v79 = vadd.f32 %v47, %v74
    %v80 = vadd.f32 %v48, %v76
    %s81 = sld [smem:[#allocation2 + $0x25]]
    %v82 = vstv %s81
    %v83 = vmul.f32 %v82, %v40
    %v84 = vmul.f32 %v82, %v41
    %87 = vrot.lane.b32.xlu0 %v83, 127
    %v88 = vpop.permute.xlu0 %87
    %89 = vrot.lane.b32.xlu0 %v84, 127
    %v90 = vpop.permute.xlu0 %89
    %v93 = vadd.f32 %v53, %v88
    %v94 = vadd.f32 %v54, %v90
    %s95 = sld [smem:[#allocation2 + $0x49]]
    %v96 = vstv %s95
    %v97 = vmul.f32 %v96, %v40
    %v98 = vmul.f32 %v96, %v41
    %101 = vrot.lane.b32.xlu0 %v97, 127
    %v102 = vpop.permute.xlu0 %101
    %103 = vrot.lane.b32.xlu0 %v98, 127
    %v104 = vpop.permute.xlu0 %103
    %v107 = vadd.f32 %v59, %v102
    %v108 = vadd.f32 %v60, %v104
    %s109 = sld [smem:[#allocation2 + $0x6d]]
    %v110 = vstv %s109
    %v111 = vmul.f32 %v110, %v40
    %v112 = vmul.f32 %v110, %v41
    %115 = vrot.lane.b32.xlu0 %v111, 127
    %v116 = vpop.permute.xlu0 %115
    %117 = vrot.lane.b32.xlu0 %v112, 127
    %v118 = vpop.permute.xlu0 %117
    %v121 = vadd.f32 %v65, %v116
    %v122 = vadd.f32 %v66, %v118
    %s123 = sld [smem:[#allocation2 + $0x2]]
    %v124 = vstv %s123
    %v125 = vmul.f32 %v124, %v40
    %v126 = vmul.f32 %v124, %v41
    %129 = vrot.lane.b32.xlu0 %v125, 126
    %v130 = vpop.permute.xlu0 %129
    %131 = vrot.lane.b32.xlu0 %v126, 126
    %v132 = vpop.permute.xlu0 %131
    %v135 = vadd.f32 %v79, %v130
    %v136 = vadd.f32 %v80, %v132
    %s137 = sld [smem:[#allocation2 + $0x26]]
    %v138 = vstv %s137
    %v139 = vmul.f32 %v138, %v40
    %v140 = vmul.f32 %v138, %v41
    %143 = vrot.lane.b32.xlu0 %v139, 126
    %v144 = vpop.permute.xlu0 %143
    %145 = vrot.lane.b32.xlu0 %v140, 126
    %v146 = vpop.permute.xlu0 %145
    %v149 = vadd.f32 %v93, %v144
    %v150 = vadd.f32 %v94, %v146
    %s151 = sld [smem:[#allocation2 + $0x4a]]
    %v152 = vstv %s151
    %v153 = vmul.f32 %v152, %v40
    %v154 = vmul.f32 %v152, %v41
    %157 = vrot.lane.b32.xlu0 %v153, 126
    %v158 = vpop.permute.xlu0 %157
    %159 = vrot.lane.b32.xlu0 %v154, 126
    %v160 = vpop.permute.xlu0 %159
    %v163 = vadd.f32 %v107, %v158
    %v164 = vadd.f32 %v108, %v160
    %s165 = sld [smem:[#allocation2 + $0x6e]]
    %v166 = vstv %s165
    %v167 = vmul.f32 %v166, %v40
    %v168 = vmul.f32 %v166, %v41
    %171 = vrot.lane.b32.xlu0 %v167, 126
    %v172 = vpop.permute.xlu0 %171
    %173 = vrot.lane.b32.xlu0 %v168, 126
    %v174 = vpop.permute.xlu0 %173
    %v177 = vadd.f32 %v121, %v172
    %v178 = vadd.f32 %v122, %v174
    %s179 = sld [smem:[#allocation2 + $0x3]]
    %v180 = vstv %s179
    %v181 = vmul.f32 %v180, %v40
    %v182 = vmul.f32 %v180, %v41
    %v183 = vmul.f32 %v180, %v42
    %vm187 = vcmask 1046528
    %v188 = vrot.slane %v181, 1
    %v189 = vrot.slane %v182, 1
    %v190 = vsel %vm187, %v188, %v189
    %v191 = vrot.slane %v183, 1
    %v192 = vsel %vm187, %v189, %v191
    %v195 = vadd.f32 %v135, %v190
    %v196 = vadd.f32 %v136, %v192
    %s197 = sld [smem:[#allocation2 + $0x27]]
    %v198 = vstv %s197
    %v199 = vmul.f32 %v198, %v40
    %v200 = vmul.f32 %v198, %v41
    %v201 = vmul.f32 %v198, %v42
    %v205 = vrot.slane %v199, 1
    %v206 = vrot.slane %v200, 1
    %v207 = vsel %vm187, %v205, %v206
    %v208 = vrot.slane %v201, 1
    %v209 = vsel %vm187, %v206, %v208
    %v212 = vadd.f32 %v149, %v207
    %v213 = vadd.f32 %v150, %v209
    %s214 = sld [smem:[#allocation2 + $0x4b]]
    %v215 = vstv %s214
    %v216 = vmul.f32 %v215, %v40
    %v217 = vmul.f32 %v215, %v41
    %v218 = vmul.f32 %v215, %v42
    %v222 = vrot.slane %v216, 1
    %v223 = vrot.slane %v217, 1
    %v224 = vsel %vm187, %v222, %v223
    %v225 = vrot.slane %v218, 1
    %v226 = vsel %vm187, %v223, %v225
    %v229 = vadd.f32 %v163, %v224
    %v230 = vadd.f32 %v164, %v226
    %s231 = sld [smem:[#allocation2 + $0x6f]]
    %v232 = vstv %s231
    %v233 = vmul.f32 %v232, %v40
    %v234 = vmul.f32 %v232, %v41
    %v235 = vmul.f32 %v232, %v42
    %v239 = vrot.slane %v233, 1
    %v240 = vrot.slane %v234, 1
    %v241 = vsel %vm187, %v239, %v240
    %v242 = vrot.slane %v235, 1
    %v243 = vsel %vm187, %v240, %v242
    %v246 = vadd.f32 %v177, %v241
    %v247 = vadd.f32 %v178, %v243
    %s248 = sld [smem:[#allocation2 + $0x4]]
    %v249 = vstv %s248
    %v250 = vmul.f32 %v249, %v40
    %v251 = vmul.f32 %v249, %v41
    %v252 = vmul.f32 %v249, %v42
    %v256 = vrot.slane %v250, 1
    %v257 = vrot.slane %v251, 1
    %v258 = vsel %vm187, %v256, %v257
    %v259 = vrot.slane %v252, 1
    %v260 = vsel %vm187, %v257, %v259
    %261 = vrot.lane.b32.xlu0 %v258, 127
    %v262 = vpop.permute.xlu0 %261
    %263 = vrot.lane.b32.xlu0 %v260, 127
    %v264 = vpop.permute.xlu0 %263
    %v267 = vadd.f32 %v195, %v262
    %v268 = vadd.f32 %v196, %v264
    %s269 = sld [smem:[#allocation2 + $0x28]]
    %v270 = vstv %s269
    %v271 = vmul.f32 %v270, %v40
    %v272 = vmul.f32 %v270, %v41
    %v273 = vmul.f32 %v270, %v42
    %v277 = vrot.slane %v271, 1
    %v278 = vrot.slane %v272, 1
    %v279 = vsel %vm187, %v277, %v278
    %v280 = vrot.slane %v273, 1
    %v281 = vsel %vm187, %v278, %v280
    %282 = vrot.lane.b32.xlu0 %v279, 127
    %v283 = vpop.permute.xlu0 %282
    %284 = vrot.lane.b32.xlu0 %v281, 127
    %v285 = vpop.permute.xlu0 %284
    %v288 = vadd.f32 %v212, %v283
    %v289 = vadd.f32 %v213, %v285
    %s290 = sld [smem:[#allocation2 + $0x4c]]
    %v291 = vstv %s290
    %v292 = vmul.f32 %v291, %v40
    %v293 = vmul.f32 %v291, %v41
    %v294 = vmul.f32 %v291, %v42
    %v298 = vrot.slane %v292, 1
    %v299 = vrot.slane %v293, 1
    %v300 = vsel %vm187, %v298, %v299
    %v301 = vrot.slane %v294, 1
    %v302 = vsel %vm187, %v299, %v301
    %303 = vrot.lane.b32.xlu0 %v300, 127
    %v304 = vpop.permute.xlu0 %303
    %305 = vrot.lane.b32.xlu0 %v302, 127
    %v306 = vpop.permute.xlu0 %305
    %v309 = vadd.f32 %v229, %v304
    %v310 = vadd.f32 %v230, %v306
    %s311 = sld [smem:[#allocation2 + $0x70]]
    %v312 = vstv %s311
    %v313 = vmul.f32 %v312, %v40
    %v314 = vmul.f32 %v312, %v41
    %v315 = vmul.f32 %v312, %v42
    %v319 = vrot.slane %v313, 1
    %v320 = vrot.slane %v314, 1
    %v321 = vsel %vm187, %v319, %v320
    %v322 = vrot.slane %v315, 1
    %v323 = vsel %vm187, %v320, %v322
    %324 = vrot.lane.b32.xlu0 %v321, 127
    %v325 = vpop.permute.xlu0 %324
    %326 = vrot.lane.b32.xlu0 %v323, 127
    %v327 = vpop.permute.xlu0 %326
    %v330 = vadd.f32 %v246, %v325
    %v331 = vadd.f32 %v247, %v327
    %s332 = sld [smem:[#allocation2 + $0x5]]
    %v333 = vstv %s332
    %v334 = vmul.f32 %v333, %v40
    %v335 = vmul.f32 %v333, %v41
    %v336 = vmul.f32 %v333, %v42
    %v340 = vrot.slane %v334, 1
    %v341 = vrot.slane %v335, 1
    %v342 = vsel %vm187, %v340, %v341
    %v343 = vrot.slane %v336, 1
    %v344 = vsel %vm187, %v341, %v343
    %345 = vrot.lane.b32.xlu0 %v342, 126
    %v346 = vpop.permute.xlu0 %345
    %347 = vrot.lane.b32.xlu0 %v344, 126
    %v348 = vpop.permute.xlu0 %347
    %v351 = vadd.f32 %v267, %v346
    %v352 = vadd.f32 %v268, %v348
    %s353 = sld [smem:[#allocation2 + $0x29]]
    %v354 = vstv %s353
    %v355 = vmul.f32 %v354, %v40
    %v356 = vmul.f32 %v354, %v41
    %v357 = vmul.f32 %v354, %v42
    %v361 = vrot.slane %v355, 1
    %v362 = vrot.slane %v356, 1
    %v363 = vsel %vm187, %v361, %v362
    %v364 = vrot.slane %v357, 1
    %v365 = vsel %vm187, %v362, %v364
    %366 = vrot.lane.b32.xlu0 %v363, 126
    %v367 = vpop.permute.xlu0 %366
    %368 = vrot.lane.b32.xlu0 %v365, 126
    %v369 = vpop.permute.xlu0 %368
    %v372 = vadd.f32 %v288, %v367
    %v373 = vadd.f32 %v289, %v369
    %s374 = sld [smem:[#allocation2 + $0x4d]]
    %v375 = vstv %s374
    %v376 = vmul.f32 %v375, %v40
    %v377 = vmul.f32 %v375, %v41
    %v378 = vmul.f32 %v375, %v42
    %v382 = vrot.slane %v376, 1
    %v383 = vrot.slane %v377, 1
    %v384 = vsel %vm187, %v382, %v383
    %v385 = vrot.slane %v378, 1
    %v386 = vsel %vm187, %v383, %v385
    %387 = vrot.lane.b32.xlu0 %v384, 126
    %v388 = vpop.permute.xlu0 %387
    %389 = vrot.lane.b32.xlu0 %v386, 126
    %v390 = vpop.permute.xlu0 %389
    %v393 = vadd.f32 %v309, %v388
    %v394 = vadd.f32 %v310, %v390
    %s395 = sld [smem:[#allocation2 + $0x71]]
    %v396 = vstv %s395
    %v397 = vmul.f32 %v396, %v40
    %v398 = vmul.f32 %v396, %v41
    %v399 = vmul.f32 %v396, %v42
    %v403 = vrot.slane %v397, 1
    %v404 = vrot.slane %v398, 1
    %v405 = vsel %vm187, %v403, %v404
    %v406 = vrot.slane %v399, 1
    %v407 = vsel %vm187, %v404, %v406
    %408 = vrot.lane.b32.xlu0 %v405, 126
    %v409 = vpop.permute.xlu0 %408
    %410 = vrot.lane.b32.xlu0 %v407, 126
    %v411 = vpop.permute.xlu0 %410
    %v414 = vadd.f32 %v330, %v409
    %v415 = vadd.f32 %v331, %v411
    %s416 = sld [smem:[#allocation2 + $0x6]]
    %v417 = vstv %s416
    %v418 = vmul.f32 %v417, %v40
    %v419 = vmul.f32 %v417, %v41
    %v420 = vmul.f32 %v417, %v42
    %vm424 = vcmask 1045504
    %v425 = vrot.slane %v418, 2
    %v426 = vrot.slane %v419, 2
    %v427 = vsel %vm424, %v425, %v426
    %v428 = vrot.slane %v420, 2
    %v429 = vsel %vm424, %v426, %v428
    %v432 = vadd.f32 %v351, %v427
    %v433 = vadd.f32 %v352, %v429
    %s434 = sld [smem:[#allocation2 + $0x2a]]
    %v435 = vstv %s434
    %v436 = vmul.f32 %v435, %v40
    %v437 = vmul.f32 %v435, %v41
    %v438 = vmul.f32 %v435, %v42
    %v442 = vrot.slane %v436, 2
    %v443 = vrot.slane %v437, 2
    %v444 = vsel %vm424, %v442, %v443
    %v445 = vrot.slane %v438, 2
    %v446 = vsel %vm424, %v443, %v445
    %v449 = vadd.f32 %v372, %v444
    %v450 = vadd.f32 %v373, %v446
    %s451 = sld [smem:[#allocation2 + $0x4e]]
    %v452 = vstv %s451
    %v453 = vmul.f32 %v452, %v40
    %v454 = vmul.f32 %v452, %v41
    %v455 = vmul.f32 %v452, %v42
    %v459 = vrot.slane %v453, 2
    %v460 = vrot.slane %v454, 2
    %v461 = vsel %vm424, %v459, %v460
    %v462 = vrot.slane %v455, 2
    %v463 = vsel %vm424, %v460, %v462
    %v466 = vadd.f32 %v393, %v461
    %v467 = vadd.f32 %v394, %v463
    %s468 = sld [smem:[#allocation2 + $0x72]]
    %v469 = vstv %s468
    %v470 = vmul.f32 %v469, %v40
    %v471 = vmul.f32 %v469, %v41
    %v472 = vmul.f32 %v469, %v42
    %v476 = vrot.slane %v470, 2
    %v477 = vrot.slane %v471, 2
    %v478 = vsel %vm424, %v476, %v477
    %v479 = vrot.slane %v472, 2
    %v480 = vsel %vm424, %v477, %v479
    %v483 = vadd.f32 %v414, %v478
    %v484 = vadd.f32 %v415, %v480
    %s485 = sld [smem:[#allocation2 + $0x7]]
    %v486 = vstv %s485
    %v487 = vmul.f32 %v486, %v40
    %v488 = vmul.f32 %v486, %v41
    %v489 = vmul.f32 %v486, %v42
    %v493 = vrot.slane %v487, 2
    %v494 = vrot.slane %v488, 2
    %v495 = vsel %vm424, %v493, %v494
    %v496 = vrot.slane %v489, 2
    %v497 = vsel %vm424, %v494, %v496
    %498 = vrot.lane.b32.xlu0 %v495, 127
    %v499 = vpop.permute.xlu0 %498
    %500 = vrot.lane.b32.xlu0 %v497, 127
    %v501 = vpop.permute.xlu0 %500
    %v504 = vadd.f32 %v432, %v499
    %v505 = vadd.f32 %v433, %v501
    %s506 = sld [smem:[#allocation2 + $0x2b]]
    %v507 = vstv %s506
    %v508 = vmul.f32 %v507, %v40
    %v509 = vmul.f32 %v507, %v41
    %v510 = vmul.f32 %v507, %v42
    %v514 = vrot.slane %v508, 2
    %v515 = vrot.slane %v509, 2
    %v516 = vsel %vm424, %v514, %v515
    %v517 = vrot.slane %v510, 2
    %v518 = vsel %vm424, %v515, %v517
    %519 = vrot.lane.b32.xlu0 %v516, 127
    %v520 = vpop.permute.xlu0 %519
    %521 = vrot.lane.b32.xlu0 %v518, 127
    %v522 = vpop.permute.xlu0 %521
    %v525 = vadd.f32 %v449, %v520
    %v526 = vadd.f32 %v450, %v522
    %s527 = sld [smem:[#allocation2 + $0x4f]]
    %v528 = vstv %s527
    %v529 = vmul.f32 %v528, %v40
    %v530 = vmul.f32 %v528, %v41
    %v531 = vmul.f32 %v528, %v42
    %v535 = vrot.slane %v529, 2
    %v536 = vrot.slane %v530, 2
    %v537 = vsel %vm424, %v535, %v536
    %v538 = vrot.slane %v531, 2
    %v539 = vsel %vm424, %v536, %v538
    %540 = vrot.lane.b32.xlu0 %v537, 127
    %v541 = vpop.permute.xlu0 %540
    %542 = vrot.lane.b32.xlu0 %v539, 127
    %v543 = vpop.permute.xlu0 %542
    %v546 = vadd.f32 %v466, %v541
    %v547 = vadd.f32 %v467, %v543
    %s548 = sld [smem:[#allocation2 + $0x73]]
    %v549 = vstv %s548
    %v550 = vmul.f32 %v549, %v40
    %v551 = vmul.f32 %v549, %v41
    %v552 = vmul.f32 %v549, %v42
    %v556 = vrot.slane %v550, 2
    %v557 = vrot.slane %v551, 2
    %v558 = vsel %vm424, %v556, %v557
    %v559 = vrot.slane %v552, 2
    %v560 = vsel %vm424, %v557, %v559
    %561 = vrot.lane.b32.xlu0 %v558, 127
    %v562 = vpop.permute.xlu0 %561
    %563 = vrot.lane.b32.xlu0 %v560, 127
    %v564 = vpop.permute.xlu0 %563
    %v567 = vadd.f32 %v483, %v562
    %v568 = vadd.f32 %v484, %v564
    %s569 = sld [smem:[#allocation2 + $0x8]]
    %v570 = vstv %s569
    %v571 = vmul.f32 %v570, %v40
    %v572 = vmul.f32 %v570, %v41
    %v573 = vmul.f32 %v570, %v42
    %v577 = vrot.slane %v571, 2
    %v578 = vrot.slane %v572, 2
    %v579 = vsel %vm424, %v577, %v578
    %v580 = vrot.slane %v573, 2
    %v581 = vsel %vm424, %v578, %v580
    %582 = vrot.lane.b32.xlu0 %v579, 126
    %v583 = vpop.permute.xlu0 %582
    %584 = vrot.lane.b32.xlu0 %v581, 126
    %v585 = vpop.permute.xlu0 %584
    %v588 = vadd.f32 %v504, %v583
    %v589 = vadd.f32 %v505, %v585
    %s590 = sld [smem:[#allocation2 + $0x2c]]
    %v591 = vstv %s590
    %v592 = vmul.f32 %v591, %v40
    %v593 = vmul.f32 %v591, %v41
    %v594 = vmul.f32 %v591, %v42
    %v598 = vrot.slane %v592, 2
    %v599 = vrot.slane %v593, 2
    %v600 = vsel %vm424, %v598, %v599
    %v601 = vrot.slane %v594, 2
    %v602 = vsel %vm424, %v599, %v601
    %603 = vrot.lane.b32.xlu0 %v600, 126
    %v604 = vpop.permute.xlu0 %603
    %605 = vrot.lane.b32.xlu0 %v602, 126
    %v606 = vpop.permute.xlu0 %605
    %v609 = vadd.f32 %v525, %v604
    %v610 = vadd.f32 %v526, %v606
    %s611 = sld [smem:[#allocation2 + $0x50]]
    %v612 = vstv %s611
    %v613 = vmul.f32 %v612, %v40
    %v614 = vmul.f32 %v612, %v41
    %v615 = vmul.f32 %v612, %v42
    %v619 = vrot.slane %v613, 2
    %v620 = vrot.slane %v614, 2
    %v621 = vsel %vm424, %v619, %v620
    %v622 = vrot.slane %v615, 2
    %v623 = vsel %vm424, %v620, %v622
    %624 = vrot.lane.b32.xlu0 %v621, 126
    %v625 = vpop.permute.xlu0 %624
    %626 = vrot.lane.b32.xlu0 %v623, 126
    %v627 = vpop.permute.xlu0 %626
    %v630 = vadd.f32 %v546, %v625
    %v631 = vadd.f32 %v547, %v627
    %s632 = sld [smem:[#allocation2 + $0x74]]
    %v633 = vstv %s632
    %v634 = vmul.f32 %v633, %v40
    %v635 = vmul.f32 %v633, %v41
    %v636 = vmul.f32 %v633, %v42
    %v640 = vrot.slane %v634, 2
    %v641 = vrot.slane %v635, 2
    %v642 = vsel %vm424, %v640, %v641
    %v643 = vrot.slane %v636, 2
    %v644 = vsel %vm424, %v641, %v643
    %645 = vrot.lane.b32.xlu0 %v642, 126
    %v646 = vpop.permute.xlu0 %645
    %647 = vrot.lane.b32.xlu0 %v644, 126
    %v648 = vpop.permute.xlu0 %647
    %v651 = vadd.f32 %v567, %v646
    %v652 = vadd.f32 %v568, %v648
    %s653 = scalar_lea.vmem %s0, 24
    %v654 = vld [vmem:[%s653] sm:$0xff]
    %v655 = vld [vmem:[%s653 + $0x8] sm:$0xff]
    %v656 = vld [vmem:[%s653 + $0x10] sm:$0x3]
    %s657 = sld [smem:[#allocation2 + $0x9]]
    %v658 = vstv %s657
    %v659 = vmul.f32 %v658, %v654
    %v660 = vmul.f32 %v658, %v655
    %v661 = vadd.f32 %v588, %v659
    %v662 = vadd.f32 %v589, %v660
    %s663 = sld [smem:[#allocation2 + $0x2d]]
    %v664 = vstv %s663
    %v665 = vmul.f32 %v664, %v654
    %v666 = vmul.f32 %v664, %v655
    %v667 = vadd.f32 %v609, %v665
    %v668 = vadd.f32 %v610, %v666
    %s669 = sld [smem:[#allocation2 + $0x51]]
    %v670 = vstv %s669
    %v671 = vmul.f32 %v670, %v654
    %v672 = vmul.f32 %v670, %v655
    %v673 = vadd.f32 %v630, %v671
    %v674 = vadd.f32 %v631, %v672
    %s675 = sld [smem:[#allocation2 + $0x75]]
    %v676 = vstv %s675
    %v677 = vmul.f32 %v676, %v654
    %v678 = vmul.f32 %v676, %v655
    %v679 = vadd.f32 %v651, %v677
    %v680 = vadd.f32 %v652, %v678
    %s681 = sld [smem:[#allocation2 + $0xa]]
    %v682 = vstv %s681
    %v683 = vmul.f32 %v682, %v654
    %v684 = vmul.f32 %v682, %v655
    %687 = vrot.lane.b32.xlu0 %v683, 127
    %v688 = vpop.permute.xlu0 %687
    %689 = vrot.lane.b32.xlu0 %v684, 127
    %v690 = vpop.permute.xlu0 %689
    %v693 = vadd.f32 %v661, %v688
    %v694 = vadd.f32 %v662, %v690
    %s695 = sld [smem:[#allocation2 + $0x2e]]
    %v696 = vstv %s695
    %v697 = vmul.f32 %v696, %v654
    %v698 = vmul.f32 %v696, %v655
    %701 = vrot.lane.b32.xlu0 %v697, 127
    %v702 = vpop.permute.xlu0 %701
    %703 = vrot.lane.b32.xlu0 %v698, 127
    %v704 = vpop.permute.xlu0 %703
    %v707 = vadd.f32 %v667, %v702
    %v708 = vadd.f32 %v668, %v704
    %s709 = sld [smem:[#allocation2 + $0x52]]
    %v710 = vstv %s709
    %v711 = vmul.f32 %v710, %v654
    %v712 = vmul.f32 %v710, %v655
    %715 = vrot.lane.b32.xlu0 %v711, 127
    %v716 = vpop.permute.xlu0 %715
    %717 = vrot.lane.b32.xlu0 %v712, 127
    %v718 = vpop.permute.xlu0 %717
    %v721 = vadd.f32 %v673, %v716
    %v722 = vadd.f32 %v674, %v718
    %s723 = sld [smem:[#allocation2 + $0x76]]
    %v724 = vstv %s723
    %v725 = vmul.f32 %v724, %v654
    %v726 = vmul.f32 %v724, %v655
    %729 = vrot.lane.b32.xlu0 %v725, 127
    %v730 = vpop.permute.xlu0 %729
    %731 = vrot.lane.b32.xlu0 %v726, 127
    %v732 = vpop.permute.xlu0 %731
    %v735 = vadd.f32 %v679, %v730
    %v736 = vadd.f32 %v680, %v732
    %s737 = sld [smem:[#allocation2 + $0xb]]
    %v738 = vstv %s737
    %v739 = vmul.f32 %v738, %v654
    %v740 = vmul.f32 %v738, %v655
    %743 = vrot.lane.b32.xlu0 %v739, 126
    %v744 = vpop.permute.xlu0 %743
    %745 = vrot.lane.b32.xlu0 %v740, 126
    %v746 = vpop.permute.xlu0 %745
    %v749 = vadd.f32 %v693, %v744
    %v750 = vadd.f32 %v694, %v746
    %s751 = sld [smem:[#allocation2 + $0x2f]]
    %v752 = vstv %s751
    %v753 = vmul.f32 %v752, %v654
    %v754 = vmul.f32 %v752, %v655
    %757 = vrot.lane.b32.xlu0 %v753, 126
    %v758 = vpop.permute.xlu0 %757
    %759 = vrot.lane.b32.xlu0 %v754, 126
    %v760 = vpop.permute.xlu0 %759
    %v763 = vadd.f32 %v707, %v758
    %v764 = vadd.f32 %v708, %v760
    %s765 = sld [smem:[#allocation2 + $0x53]]
    %v766 = vstv %s765
    %v767 = vmul.f32 %v766, %v654
    %v768 = vmul.f32 %v766, %v655
    %771 = vrot.lane.b32.xlu0 %v767, 126
    %v772 = vpop.permute.xlu0 %771
    %773 = vrot.lane.b32.xlu0 %v768, 126
    %v774 = vpop.permute.xlu0 %773
    %v777 = vadd.f32 %v721, %v772
    %v778 = vadd.f32 %v722, %v774
    %s779 = sld [smem:[#allocation2 + $0x77]]
    %v780 = vstv %s779
    %v781 = vmul.f32 %v780, %v654
    %v782 = vmul.f32 %v780, %v655
    %785 = vrot.lane.b32.xlu0 %v781, 126
    %v786 = vpop.permute.xlu0 %785
    %787 = vrot.lane.b32.xlu0 %v782, 126
    %v788 = vpop.permute.xlu0 %787
    %v791 = vadd.f32 %v735, %v786
    %v792 = vadd.f32 %v736, %v788
    %s793 = sld [smem:[#allocation2 + $0xc]]
    %v794 = vstv %s793
    %v795 = vmul.f32 %v794, %v654
    %v796 = vmul.f32 %v794, %v655
    %v797 = vmul.f32 %v794, %v656
    %v801 = vrot.slane %v795, 1
    %v802 = vrot.slane %v796, 1
    %v803 = vsel %vm187, %v801, %v802
    %v804 = vrot.slane %v797, 1
    %v805 = vsel %vm187, %v802, %v804
    %v808 = vadd.f32 %v749, %v803
    %v809 = vadd.f32 %v750, %v805
    %s810 = sld [smem:[#allocation2 + $0x30]]
    %v811 = vstv %s810
    %v812 = vmul.f32 %v811, %v654
    %v813 = vmul.f32 %v811, %v655
    %v814 = vmul.f32 %v811, %v656
    %v818 = vrot.slane %v812, 1
    %v819 = vrot.slane %v813, 1
    %v820 = vsel %vm187, %v818, %v819
    %v821 = vrot.slane %v814, 1
    %v822 = vsel %vm187, %v819, %v821
    %v825 = vadd.f32 %v763, %v820
    %v826 = vadd.f32 %v764, %v822
    %s827 = sld [smem:[#allocation2 + $0x54]]
    %v828 = vstv %s827
    %v829 = vmul.f32 %v828, %v654
    %v830 = vmul.f32 %v828, %v655
    %v831 = vmul.f32 %v828, %v656
    %v835 = vrot.slane %v829, 1
    %v836 = vrot.slane %v830, 1
    %v837 = vsel %vm187, %v835, %v836
    %v838 = vrot.slane %v831, 1
    %v839 = vsel %vm187, %v836, %v838
    %v842 = vadd.f32 %v777, %v837
    %v843 = vadd.f32 %v778, %v839
    %s844 = sld [smem:[#allocation2 + $0x78]]
    %v845 = vstv %s844
    %v846 = vmul.f32 %v845, %v654
    %v847 = vmul.f32 %v845, %v655
    %v848 = vmul.f32 %v845, %v656
    %v852 = vrot.slane %v846, 1
    %v853 = vrot.slane %v847, 1
    %v854 = vsel %vm187, %v852, %v853
    %v855 = vrot.slane %v848, 1
    %v856 = vsel %vm187, %v853, %v855
    %v859 = vadd.f32 %v791, %v854
    %v860 = vadd.f32 %v792, %v856
    %s861 = sld [smem:[#allocation2 + $0xd]]
    %v862 = vstv %s861
    %v863 = vmul.f32 %v862, %v654
    %v864 = vmul.f32 %v862, %v655
    %v865 = vmul.f32 %v862, %v656
    %v869 = vrot.slane %v863, 1
    %v870 = vrot.slane %v864, 1
    %v871 = vsel %vm187, %v869, %v870
    %v872 = vrot.slane %v865, 1
    %v873 = vsel %vm187, %v870, %v872
    %874 = vrot.lane.b32.xlu0 %v871, 127
    %v875 = vpop.permute.xlu0 %874
    %876 = vrot.lane.b32.xlu0 %v873, 127
    %v877 = vpop.permute.xlu0 %876
    %v880 = vadd.f32 %v808, %v875
    %v881 = vadd.f32 %v809, %v877
    %s882 = sld [smem:[#allocation2 + $0x31]]
    %v883 = vstv %s882
    %v884 = vmul.f32 %v883, %v654
    %v885 = vmul.f32 %v883, %v655
    %v886 = vmul.f32 %v883, %v656
    %v890 = vrot.slane %v884, 1
    %v891 = vrot.slane %v885, 1
    %v892 = vsel %vm187, %v890, %v891
    %v893 = vrot.slane %v886, 1
    %v894 = vsel %vm187, %v891, %v893
    %895 = vrot.lane.b32.xlu0 %v892, 127
    %v896 = vpop.permute.xlu0 %895
    %897 = vrot.lane.b32.xlu0 %v894, 127
    %v898 = vpop.permute.xlu0 %897
    %v901 = vadd.f32 %v825, %v896
    %v902 = vadd.f32 %v826, %v898
    %s903 = sld [smem:[#allocation2 + $0x55]]
    %v904 = vstv %s903
    %v905 = vmul.f32 %v904, %v654
    %v906 = vmul.f32 %v904, %v655
    %v907 = vmul.f32 %v904, %v656
    %v911 = vrot.slane %v905, 1
    %v912 = vrot.slane %v906, 1
    %v913 = vsel %vm187, %v911, %v912
    %v914 = vrot.slane %v907, 1
    %v915 = vsel %vm187, %v912, %v914
    %916 = vrot.lane.b32.xlu0 %v913, 127
    %v917 = vpop.permute.xlu0 %916
    %918 = vrot.lane.b32.xlu0 %v915, 127
    %v919 = vpop.permute.xlu0 %918
    %v922 = vadd.f32 %v842, %v917
    %v923 = vadd.f32 %v843, %v919
    %s924 = sld [smem:[#allocation2 + $0x79]]
    %v925 = vstv %s924
    %v926 = vmul.f32 %v925, %v654
    %v927 = vmul.f32 %v925, %v655
    %v928 = vmul.f32 %v925, %v656
    %v932 = vrot.slane %v926, 1
    %v933 = vrot.slane %v927, 1
    %v934 = vsel %vm187, %v932, %v933
    %v935 = vrot.slane %v928, 1
    %v936 = vsel %vm187, %v933, %v935
    %937 = vrot.lane.b32.xlu0 %v934, 127
    %v938 = vpop.permute.xlu0 %937
    %939 = vrot.lane.b32.xlu0 %v936, 127
    %v940 = vpop.permute.xlu0 %939
    %v943 = vadd.f32 %v859, %v938
    %v944 = vadd.f32 %v860, %v940
    %s945 = sld [smem:[#allocation2 + $0xe]]
    %v946 = vstv %s945
    %v947 = vmul.f32 %v946, %v654
    %v948 = vmul.f32 %v946, %v655
    %v949 = vmul.f32 %v946, %v656
    %v953 = vrot.slane %v947, 1
    %v954 = vrot.slane %v948, 1
    %v955 = vsel %vm187, %v953, %v954
    %v956 = vrot.slane %v949, 1
    %v957 = vsel %vm187, %v954, %v956
    %958 = vrot.lane.b32.xlu0 %v955, 126
    %v959 = vpop.permute.xlu0 %958
    %960 = vrot.lane.b32.xlu0 %v957, 126
    %v961 = vpop.permute.xlu0 %960
    %v964 = vadd.f32 %v880, %v959
    %v965 = vadd.f32 %v881, %v961
    %s966 = sld [smem:[#allocation2 + $0x32]]
    %v967 = vstv %s966
    %v968 = vmul.f32 %v967, %v654
    %v969 = vmul.f32 %v967, %v655
    %v970 = vmul.f32 %v967, %v656
    %v974 = vrot.slane %v968, 1
    %v975 = vrot.slane %v969, 1
    %v976 = vsel %vm187, %v974, %v975
    %v977 = vrot.slane %v970, 1
    %v978 = vsel %vm187, %v975, %v977
    %979 = vrot.lane.b32.xlu0 %v976, 126
    %v980 = vpop.permute.xlu0 %979
    %981 = vrot.lane.b32.xlu0 %v978, 126
    %v982 = vpop.permute.xlu0 %981
    %v985 = vadd.f32 %v901, %v980
    %v986 = vadd.f32 %v902, %v982
    %s987 = sld [smem:[#allocation2 + $0x56]]
    %v988 = vstv %s987
    %v989 = vmul.f32 %v988, %v654
    %v990 = vmul.f32 %v988, %v655
    %v991 = vmul.f32 %v988, %v656
    %v995 = vrot.slane %v989, 1
    %v996 = vrot.slane %v990, 1
    %v997 = vsel %vm187, %v995, %v996
    %v998 = vrot.slane %v991, 1
    %v999 = vsel %vm187, %v996, %v998
    %1000 = vrot.lane.b32.xlu0 %v997, 126
    %v1001 = vpop.permute.xlu0 %1000
    %1002 = vrot.lane.b32.xlu0 %v999, 126
    %v1003 = vpop.permute.xlu0 %1002
    %v1006 = vadd.f32 %v922, %v1001
    %v1007 = vadd.f32 %v923, %v1003
    %s1008 = sld [smem:[#allocation2 + $0x7a]]
    %v1009 = vstv %s1008
    %v1010 = vmul.f32 %v1009, %v654
    %v1011 = vmul.f32 %v1009, %v655
    %v1012 = vmul.f32 %v1009, %v656
    %v1016 = vrot.slane %v1010, 1
    %v1017 = vrot.slane %v1011, 1
    %v1018 = vsel %vm187, %v1016, %v1017
    %v1019 = vrot.slane %v1012, 1
    %v1020 = vsel %vm187, %v1017, %v1019
    %1021 = vrot.lane.b32.xlu0 %v1018, 126
    %v1022 = vpop.permute.xlu0 %1021
    %1023 = vrot.lane.b32.xlu0 %v1020, 126
    %v1024 = vpop.permute.xlu0 %1023
    %v1027 = vadd.f32 %v943, %v1022
    %v1028 = vadd.f32 %v944, %v1024
    %s1029 = sld [smem:[#allocation2 + $0xf]]
    %v1030 = vstv %s1029
    %v1031 = vmul.f32 %v1030, %v654
    %v1032 = vmul.f32 %v1030, %v655
    %v1033 = vmul.f32 %v1030, %v656
    %v1037 = vrot.slane %v1031, 2
    %v1038 = vrot.slane %v1032, 2
    %v1039 = vsel %vm424, %v1037, %v1038
    %v1040 = vrot.slane %v1033, 2
    %v1041 = vsel %vm424, %v1038, %v1040
    %v1044 = vadd.f32 %v964, %v1039
    %v1045 = vadd.f32 %v965, %v1041
    %s1046 = sld [smem:[#allocation2 + $0x33]]
    %v1047 = vstv %s1046
    %v1048 = vmul.f32 %v1047, %v654
    %v1049 = vmul.f32 %v1047, %v655
    %v1050 = vmul.f32 %v1047, %v656
    %v1054 = vrot.slane %v1048, 2
    %v1055 = vrot.slane %v1049, 2
    %v1056 = vsel %vm424, %v1054, %v1055
    %v1057 = vrot.slane %v1050, 2
    %v1058 = vsel %vm424, %v1055, %v1057
    %v1061 = vadd.f32 %v985, %v1056
    %v1062 = vadd.f32 %v986, %v1058
    %s1063 = sld [smem:[#allocation2 + $0x57]]
    %v1064 = vstv %s1063
    %v1065 = vmul.f32 %v1064, %v654
    %v1066 = vmul.f32 %v1064, %v655
    %v1067 = vmul.f32 %v1064, %v656
    %v1071 = vrot.slane %v1065, 2
    %v1072 = vrot.slane %v1066, 2
    %v1073 = vsel %vm424, %v1071, %v1072
    %v1074 = vrot.slane %v1067, 2
    %v1075 = vsel %vm424, %v1072, %v1074
    %v1078 = vadd.f32 %v1006, %v1073
    %v1079 = vadd.f32 %v1007, %v1075
    %s1080 = sld [smem:[#allocation2 + $0x7b]]
    %v1081 = vstv %s1080
    %v1082 = vmul.f32 %v1081, %v654
    %v1083 = vmul.f32 %v1081, %v655
    %v1084 = vmul.f32 %v1081, %v656
    %v1088 = vrot.slane %v1082, 2
    %v1089 = vrot.slane %v1083, 2
    %v1090 = vsel %vm424, %v1088, %v1089
    %v1091 = vrot.slane %v1084, 2
    %v1092 = vsel %vm424, %v1089, %v1091
    %v1095 = vadd.f32 %v1027, %v1090
    %v1096 = vadd.f32 %v1028, %v1092
    %s1097 = sld [smem:[#allocation2 + $0x10]]
    %v1098 = vstv %s1097
    %v1099 = vmul.f32 %v1098, %v654
    %v1100 = vmul.f32 %v1098, %v655
    %v1101 = vmul.f32 %v1098, %v656
    %v1105 = vrot.slane %v1099, 2
    %v1106 = vrot.slane %v1100, 2
    %v1107 = vsel %vm424, %v1105, %v1106
    %v1108 = vrot.slane %v1101, 2
    %v1109 = vsel %vm424, %v1106, %v1108
    %1110 = vrot.lane.b32.xlu0 %v1107, 127
    %v1111 = vpop.permute.xlu0 %1110
    %1112 = vrot.lane.b32.xlu0 %v1109, 127
    %v1113 = vpop.permute.xlu0 %1112
    %v1116 = vadd.f32 %v1044, %v1111
    %v1117 = vadd.f32 %v1045, %v1113
    %s1118 = sld [smem:[#allocation2 + $0x34]]
    %v1119 = vstv %s1118
    %v1120 = vmul.f32 %v1119, %v654
    %v1121 = vmul.f32 %v1119, %v655
    %v1122 = vmul.f32 %v1119, %v656
    %v1126 = vrot.slane %v1120, 2
    %v1127 = vrot.slane %v1121, 2
    %v1128 = vsel %vm424, %v1126, %v1127
    %v1129 = vrot.slane %v1122, 2
    %v1130 = vsel %vm424, %v1127, %v1129
    %1131 = vrot.lane.b32.xlu0 %v1128, 127
    %v1132 = vpop.permute.xlu0 %1131
    %1133 = vrot.lane.b32.xlu0 %v1130, 127
    %v1134 = vpop.permute.xlu0 %1133
    %v1137 = vadd.f32 %v1061, %v1132
    %v1138 = vadd.f32 %v1062, %v1134
    %s1139 = sld [smem:[#allocation2 + $0x58]]
    %v1140 = vstv %s1139
    %v1141 = vmul.f32 %v1140, %v654
    %v1142 = vmul.f32 %v1140, %v655
    %v1143 = vmul.f32 %v1140, %v656
    %v1147 = vrot.slane %v1141, 2
    %v1148 = vrot.slane %v1142, 2
    %v1149 = vsel %vm424, %v1147, %v1148
    %v1150 = vrot.slane %v1143, 2
    %v1151 = vsel %vm424, %v1148, %v1150
    %1152 = vrot.lane.b32.xlu0 %v1149, 127
    %v1153 = vpop.permute.xlu0 %1152
    %1154 = vrot.lane.b32.xlu0 %v1151, 127
    %v1155 = vpop.permute.xlu0 %1154
    %v1158 = vadd.f32 %v1078, %v1153
    %v1159 = vadd.f32 %v1079, %v1155
    %s1160 = sld [smem:[#allocation2 + $0x7c]]
    %v1161 = vstv %s1160
    %v1162 = vmul.f32 %v1161, %v654
    %v1163 = vmul.f32 %v1161, %v655
    %v1164 = vmul.f32 %v1161, %v656
    %v1168 = vrot.slane %v1162, 2
    %v1169 = vrot.slane %v1163, 2
    %v1170 = vsel %vm424, %v1168, %v1169
    %v1171 = vrot.slane %v1164, 2
    %v1172 = vsel %vm424, %v1169, %v1171
    %1173 = vrot.lane.b32.xlu0 %v1170, 127
    %v1174 = vpop.permute.xlu0 %1173
    %1175 = vrot.lane.b32.xlu0 %v1172, 127
    %v1176 = vpop.permute.xlu0 %1175
    %v1179 = vadd.f32 %v1095, %v1174
    %v1180 = vadd.f32 %v1096, %v1176
    %s1181 = sld [smem:[#allocation2 + $0x11]]
    %v1182 = vstv %s1181
    %v1183 = vmul.f32 %v1182, %v654
    %v1184 = vmul.f32 %v1182, %v655
    %v1185 = vmul.f32 %v1182, %v656
    %v1189 = vrot.slane %v1183, 2
    %v1190 = vrot.slane %v1184, 2
    %v1191 = vsel %vm424, %v1189, %v1190
    %v1192 = vrot.slane %v1185, 2
    %v1193 = vsel %vm424, %v1190, %v1192
    %1194 = vrot.lane.b32.xlu0 %v1191, 126
    %v1195 = vpop.permute.xlu0 %1194
    %1196 = vrot.lane.b32.xlu0 %v1193, 126
    %v1197 = vpop.permute.xlu0 %1196
    %v1200 = vadd.f32 %v1116, %v1195
    %v1201 = vadd.f32 %v1117, %v1197
    %s1202 = sld [smem:[#allocation2 + $0x35]]
    %v1203 = vstv %s1202
    %v1204 = vmul.f32 %v1203, %v654
    %v1205 = vmul.f32 %v1203, %v655
    %v1206 = vmul.f32 %v1203, %v656
    %v1210 = vrot.slane %v1204, 2
    %v1211 = vrot.slane %v1205, 2
    %v1212 = vsel %vm424, %v1210, %v1211
    %v1213 = vrot.slane %v1206, 2
    %v1214 = vsel %vm424, %v1211, %v1213
    %1215 = vrot.lane.b32.xlu0 %v1212, 126
    %v1216 = vpop.permute.xlu0 %1215
    %1217 = vrot.lane.b32.xlu0 %v1214, 126
    %v1218 = vpop.permute.xlu0 %1217
    %v1221 = vadd.f32 %v1137, %v1216
    %v1222 = vadd.f32 %v1138, %v1218
    %s1223 = sld [smem:[#allocation2 + $0x59]]
    %v1224 = vstv %s1223
    %v1225 = vmul.f32 %v1224, %v654
    %v1226 = vmul.f32 %v1224, %v655
    %v1227 = vmul.f32 %v1224, %v656
    %v1231 = vrot.slane %v1225, 2
    %v1232 = vrot.slane %v1226, 2
    %v1233 = vsel %vm424, %v1231, %v1232
    %v1234 = vrot.slane %v1227, 2
    %v1235 = vsel %vm424, %v1232, %v1234
    %1236 = vrot.lane.b32.xlu0 %v1233, 126
    %v1237 = vpop.permute.xlu0 %1236
    %1238 = vrot.lane.b32.xlu0 %v1235, 126
    %v1239 = vpop.permute.xlu0 %1238
    %v1242 = vadd.f32 %v1158, %v1237
    %v1243 = vadd.f32 %v1159, %v1239
    %s1244 = sld [smem:[#allocation2 + $0x7d]]
    %v1245 = vstv %s1244
    %v1246 = vmul.f32 %v1245, %v654
    %v1247 = vmul.f32 %v1245, %v655
    %v1248 = vmul.f32 %v1245, %v656
    %v1252 = vrot.slane %v1246, 2
    %v1253 = vrot.slane %v1247, 2
    %v1254 = vsel %vm424, %v1252, %v1253
    %v1255 = vrot.slane %v1248, 2
    %v1256 = vsel %vm424, %v1253, %v1255
    %1257 = vrot.lane.b32.xlu0 %v1254, 126
    %v1258 = vpop.permute.xlu0 %1257
    %1259 = vrot.lane.b32.xlu0 %v1256, 126
    %v1260 = vpop.permute.xlu0 %1259
    %v1263 = vadd.f32 %v1179, %v1258
    %v1264 = vadd.f32 %v1180, %v1260
    %s1265 = scalar_lea.vmem %s0, 48
    %v1266 = vld [vmem:[%s1265] sm:$0xff]
    %v1267 = vld [vmem:[%s1265 + $0x8] sm:$0xff]
    %v1268 = vld [vmem:[%s1265 + $0x10] sm:$0x3]
    %s1269 = sld [smem:[#allocation2 + $0x12]]
    %v1270 = vstv %s1269
    %v1271 = vmul.f32 %v1270, %v1266
    %v1272 = vmul.f32 %v1270, %v1267
    %v1273 = vadd.f32 %v1200, %v1271
    %v1274 = vadd.f32 %v1201, %v1272
    %s1275 = sld [smem:[#allocation2 + $0x36]]
    %v1276 = vstv %s1275
    %v1277 = vmul.f32 %v1276, %v1266
    %v1278 = vmul.f32 %v1276, %v1267
    %v1279 = vadd.f32 %v1221, %v1277
    %v1280 = vadd.f32 %v1222, %v1278
    %s1281 = sld [smem:[#allocation2 + $0x5a]]
    %v1282 = vstv %s1281
    %v1283 = vmul.f32 %v1282, %v1266
    %v1284 = vmul.f32 %v1282, %v1267
    %v1285 = vadd.f32 %v1242, %v1283
    %v1286 = vadd.f32 %v1243, %v1284
    %s1287 = sld [smem:[#allocation2 + $0x7e]]
    %v1288 = vstv %s1287
    %v1289 = vmul.f32 %v1288, %v1266
    %v1290 = vmul.f32 %v1288, %v1267
    %v1291 = vadd.f32 %v1263, %v1289
    %v1292 = vadd.f32 %v1264, %v1290
    %s1293 = sld [smem:[#allocation2 + $0x13]]
    %v1294 = vstv %s1293
    %v1295 = vmul.f32 %v1294, %v1266
    %v1296 = vmul.f32 %v1294, %v1267
    %1299 = vrot.lane.b32.xlu0 %v1295, 127
    %v1300 = vpop.permute.xlu0 %1299
    %1301 = vrot.lane.b32.xlu0 %v1296, 127
    %v1302 = vpop.permute.xlu0 %1301
    %v1305 = vadd.f32 %v1273, %v1300
    %v1306 = vadd.f32 %v1274, %v1302
    %s1307 = sld [smem:[#allocation2 + $0x37]]
    %v1308 = vstv %s1307
    %v1309 = vmul.f32 %v1308, %v1266
    %v1310 = vmul.f32 %v1308, %v1267
    %1313 = vrot.lane.b32.xlu0 %v1309, 127
    %v1314 = vpop.permute.xlu0 %1313
    %1315 = vrot.lane.b32.xlu0 %v1310, 127
    %v1316 = vpop.permute.xlu0 %1315
    %v1319 = vadd.f32 %v1279, %v1314
    %v1320 = vadd.f32 %v1280, %v1316
    %s1321 = sld [smem:[#allocation2 + $0x5b]]
    %v1322 = vstv %s1321
    %v1323 = vmul.f32 %v1322, %v1266
    %v1324 = vmul.f32 %v1322, %v1267
    %1327 = vrot.lane.b32.xlu0 %v1323, 127
    %v1328 = vpop.permute.xlu0 %1327
    %1329 = vrot.lane.b32.xlu0 %v1324, 127
    %v1330 = vpop.permute.xlu0 %1329
    %v1333 = vadd.f32 %v1285, %v1328
    %v1334 = vadd.f32 %v1286, %v1330
    %s1335 = sld [smem:[#allocation2 + $0x7f]]
    %v1336 = vstv %s1335
    %v1337 = vmul.f32 %v1336, %v1266
    %v1338 = vmul.f32 %v1336, %v1267
    %1341 = vrot.lane.b32.xlu0 %v1337, 127
    %v1342 = vpop.permute.xlu0 %1341
    %1343 = vrot.lane.b32.xlu0 %v1338, 127
    %v1344 = vpop.permute.xlu0 %1343
    %v1347 = vadd.f32 %v1291, %v1342
    %v1348 = vadd.f32 %v1292, %v1344
    %s1349 = sld [smem:[#allocation2 + $0x14]]
    %v1350 = vstv %s1349
    %v1351 = vmul.f32 %v1350, %v1266
    %v1352 = vmul.f32 %v1350, %v1267
    %1355 = vrot.lane.b32.xlu0 %v1351, 126
    %v1356 = vpop.permute.xlu0 %1355
    %1357 = vrot.lane.b32.xlu0 %v1352, 126
    %v1358 = vpop.permute.xlu0 %1357
    %v1361 = vadd.f32 %v1305, %v1356
    %v1362 = vadd.f32 %v1306, %v1358
    %s1363 = sld [smem:[#allocation2 + $0x38]]
    %v1364 = vstv %s1363
    %v1365 = vmul.f32 %v1364, %v1266
    %v1366 = vmul.f32 %v1364, %v1267
    %1369 = vrot.lane.b32.xlu0 %v1365, 126
    %v1370 = vpop.permute.xlu0 %1369
    %1371 = vrot.lane.b32.xlu0 %v1366, 126
    %v1372 = vpop.permute.xlu0 %1371
    %v1375 = vadd.f32 %v1319, %v1370
    %v1376 = vadd.f32 %v1320, %v1372
    %s1377 = sld [smem:[#allocation2 + $0x5c]]
    %v1378 = vstv %s1377
    %v1379 = vmul.f32 %v1378, %v1266
    %v1380 = vmul.f32 %v1378, %v1267
    %1383 = vrot.lane.b32.xlu0 %v1379, 126
    %v1384 = vpop.permute.xlu0 %1383
    %1385 = vrot.lane.b32.xlu0 %v1380, 126
    %v1386 = vpop.permute.xlu0 %1385
    %v1389 = vadd.f32 %v1333, %v1384
    %v1390 = vadd.f32 %v1334, %v1386
    %s1391 = sld [smem:[#allocation2 + $0x80]]
    %v1392 = vstv %s1391
    %v1393 = vmul.f32 %v1392, %v1266
    %v1394 = vmul.f32 %v1392, %v1267
    %1397 = vrot.lane.b32.xlu0 %v1393, 126
    %v1398 = vpop.permute.xlu0 %1397
    %1399 = vrot.lane.b32.xlu0 %v1394, 126
    %v1400 = vpop.permute.xlu0 %1399
    %v1403 = vadd.f32 %v1347, %v1398
    %v1404 = vadd.f32 %v1348, %v1400
    %s1405 = sld [smem:[#allocation2 + $0x15]]
    %v1406 = vstv %s1405
    %v1407 = vmul.f32 %v1406, %v1266
    %v1408 = vmul.f32 %v1406, %v1267
    %v1409 = vmul.f32 %v1406, %v1268
    %v1413 = vrot.slane %v1407, 1
    %v1414 = vrot.slane %v1408, 1
    %v1415 = vsel %vm187, %v1413, %v1414
    %v1416 = vrot.slane %v1409, 1
    %v1417 = vsel %vm187, %v1414, %v1416
    %v1420 = vadd.f32 %v1361, %v1415
    %v1421 = vadd.f32 %v1362, %v1417
    %s1422 = sld [smem:[#allocation2 + $0x39]]
    %v1423 = vstv %s1422
    %v1424 = vmul.f32 %v1423, %v1266
    %v1425 = vmul.f32 %v1423, %v1267
    %v1426 = vmul.f32 %v1423, %v1268
    %v1430 = vrot.slane %v1424, 1
    %v1431 = vrot.slane %v1425, 1
    %v1432 = vsel %vm187, %v1430, %v1431
    %v1433 = vrot.slane %v1426, 1
    %v1434 = vsel %vm187, %v1431, %v1433
    %v1437 = vadd.f32 %v1375, %v1432
    %v1438 = vadd.f32 %v1376, %v1434
    %s1439 = sld [smem:[#allocation2 + $0x5d]]
    %v1440 = vstv %s1439
    %v1441 = vmul.f32 %v1440, %v1266
    %v1442 = vmul.f32 %v1440, %v1267
    %v1443 = vmul.f32 %v1440, %v1268
    %v1447 = vrot.slane %v1441, 1
    %v1448 = vrot.slane %v1442, 1
    %v1449 = vsel %vm187, %v1447, %v1448
    %v1450 = vrot.slane %v1443, 1
    %v1451 = vsel %vm187, %v1448, %v1450
    %v1454 = vadd.f32 %v1389, %v1449
    %v1455 = vadd.f32 %v1390, %v1451
    %s1456 = sld [smem:[#allocation2 + $0x81]]
    %v1457 = vstv %s1456
    %v1458 = vmul.f32 %v1457, %v1266
    %v1459 = vmul.f32 %v1457, %v1267
    %v1460 = vmul.f32 %v1457, %v1268
    %v1464 = vrot.slane %v1458, 1
    %v1465 = vrot.slane %v1459, 1
    %v1466 = vsel %vm187, %v1464, %v1465
    %v1467 = vrot.slane %v1460, 1
    %v1468 = vsel %vm187, %v1465, %v1467
    %v1471 = vadd.f32 %v1403, %v1466
    %v1472 = vadd.f32 %v1404, %v1468
    %s1473 = sld [smem:[#allocation2 + $0x16]]
    %v1474 = vstv %s1473
    %v1475 = vmul.f32 %v1474, %v1266
    %v1476 = vmul.f32 %v1474, %v1267
    %v1477 = vmul.f32 %v1474, %v1268
    %v1481 = vrot.slane %v1475, 1
    %v1482 = vrot.slane %v1476, 1
    %v1483 = vsel %vm187, %v1481, %v1482
    %v1484 = vrot.slane %v1477, 1
    %v1485 = vsel %vm187, %v1482, %v1484
    %1486 = vrot.lane.b32.xlu0 %v1483, 127
    %v1487 = vpop.permute.xlu0 %1486
    %1488 = vrot.lane.b32.xlu0 %v1485, 127
    %v1489 = vpop.permute.xlu0 %1488
    %v1492 = vadd.f32 %v1420, %v1487
    %v1493 = vadd.f32 %v1421, %v1489
    %s1494 = sld [smem:[#allocation2 + $0x3a]]
    %v1495 = vstv %s1494
    %v1496 = vmul.f32 %v1495, %v1266
    %v1497 = vmul.f32 %v1495, %v1267
    %v1498 = vmul.f32 %v1495, %v1268
    %v1502 = vrot.slane %v1496, 1
    %v1503 = vrot.slane %v1497, 1
    %v1504 = vsel %vm187, %v1502, %v1503
    %v1505 = vrot.slane %v1498, 1
    %v1506 = vsel %vm187, %v1503, %v1505
    %1507 = vrot.lane.b32.xlu0 %v1504, 127
    %v1508 = vpop.permute.xlu0 %1507
    %1509 = vrot.lane.b32.xlu0 %v1506, 127
    %v1510 = vpop.permute.xlu0 %1509
    %v1513 = vadd.f32 %v1437, %v1508
    %v1514 = vadd.f32 %v1438, %v1510
    %s1515 = sld [smem:[#allocation2 + $0x5e]]
    %v1516 = vstv %s1515
    %v1517 = vmul.f32 %v1516, %v1266
    %v1518 = vmul.f32 %v1516, %v1267
    %v1519 = vmul.f32 %v1516, %v1268
    %v1523 = vrot.slane %v1517, 1
    %v1524 = vrot.slane %v1518, 1
    %v1525 = vsel %vm187, %v1523, %v1524
    %v1526 = vrot.slane %v1519, 1
    %v1527 = vsel %vm187, %v1524, %v1526
    %1528 = vrot.lane.b32.xlu0 %v1525, 127
    %v1529 = vpop.permute.xlu0 %1528
    %1530 = vrot.lane.b32.xlu0 %v1527, 127
    %v1531 = vpop.permute.xlu0 %1530
    %v1534 = vadd.f32 %v1454, %v1529
    %v1535 = vadd.f32 %v1455, %v1531
    %s1536 = sld [smem:[#allocation2 + $0x82]]
    %v1537 = vstv %s1536
    %v1538 = vmul.f32 %v1537, %v1266
    %v1539 = vmul.f32 %v1537, %v1267
    %v1540 = vmul.f32 %v1537, %v1268
    %v1544 = vrot.slane %v1538, 1
    %v1545 = vrot.slane %v1539, 1
    %v1546 = vsel %vm187, %v1544, %v1545
    %v1547 = vrot.slane %v1540, 1
    %v1548 = vsel %vm187, %v1545, %v1547
    %1549 = vrot.lane.b32.xlu0 %v1546, 127
    %v1550 = vpop.permute.xlu0 %1549
    %1551 = vrot.lane.b32.xlu0 %v1548, 127
    %v1552 = vpop.permute.xlu0 %1551
    %v1555 = vadd.f32 %v1471, %v1550
    %v1556 = vadd.f32 %v1472, %v1552
    %s1557 = sld [smem:[#allocation2 + $0x17]]
    %v1558 = vstv %s1557
    %v1559 = vmul.f32 %v1558, %v1266
    %v1560 = vmul.f32 %v1558, %v1267
    %v1561 = vmul.f32 %v1558, %v1268
    %v1565 = vrot.slane %v1559, 1
    %v1566 = vrot.slane %v1560, 1
    %v1567 = vsel %vm187, %v1565, %v1566
    %v1568 = vrot.slane %v1561, 1
    %v1569 = vsel %vm187, %v1566, %v1568
    %1570 = vrot.lane.b32.xlu0 %v1567, 126
    %v1571 = vpop.permute.xlu0 %1570
    %1572 = vrot.lane.b32.xlu0 %v1569, 126
    %v1573 = vpop.permute.xlu0 %1572
    %v1576 = vadd.f32 %v1492, %v1571
    %v1577 = vadd.f32 %v1493, %v1573
    %s1578 = sld [smem:[#allocation2 + $0x3b]]
    %v1579 = vstv %s1578
    %v1580 = vmul.f32 %v1579, %v1266
    %v1581 = vmul.f32 %v1579, %v1267
    %v1582 = vmul.f32 %v1579, %v1268
    %v1586 = vrot.slane %v1580, 1
    %v1587 = vrot.slane %v1581, 1
    %v1588 = vsel %vm187, %v1586, %v1587
    %v1589 = vrot.slane %v1582, 1
    %v1590 = vsel %vm187, %v1587, %v1589
    %1591 = vrot.lane.b32.xlu0 %v1588, 126
    %v1592 = vpop.permute.xlu0 %1591
    %1593 = vrot.lane.b32.xlu0 %v1590, 126
    %v1594 = vpop.permute.xlu0 %1593
    %v1597 = vadd.f32 %v1513, %v1592
    %v1598 = vadd.f32 %v1514, %v1594
    %s1599 = sld [smem:[#allocation2 + $0x5f]]
    %v1600 = vstv %s1599
    %v1601 = vmul.f32 %v1600, %v1266
    %v1602 = vmul.f32 %v1600, %v1267
    %v1603 = vmul.f32 %v1600, %v1268
    %v1607 = vrot.slane %v1601, 1
    %v1608 = vrot.slane %v1602, 1
    %v1609 = vsel %vm187, %v1607, %v1608
    %v1610 = vrot.slane %v1603, 1
    %v1611 = vsel %vm187, %v1608, %v1610
    %1612 = vrot.lane.b32.xlu0 %v1609, 126
    %v1613 = vpop.permute.xlu0 %1612
    %1614 = vrot.lane.b32.xlu0 %v1611, 126
    %v1615 = vpop.permute.xlu0 %1614
    %v1618 = vadd.f32 %v1534, %v1613
    %v1619 = vadd.f32 %v1535, %v1615
    %s1620 = sld [smem:[#allocation2 + $0x83]]
    %v1621 = vstv %s1620
    %v1622 = vmul.f32 %v1621, %v1266
    %v1623 = vmul.f32 %v1621, %v1267
    %v1624 = vmul.f32 %v1621, %v1268
    %v1628 = vrot.slane %v1622, 1
    %v1629 = vrot.slane %v1623, 1
    %v1630 = vsel %vm187, %v1628, %v1629
    %v1631 = vrot.slane %v1624, 1
    %v1632 = vsel %vm187, %v1629, %v1631
    %1633 = vrot.lane.b32.xlu0 %v1630, 126
    %v1634 = vpop.permute.xlu0 %1633
    %1635 = vrot.lane.b32.xlu0 %v1632, 126
    %v1636 = vpop.permute.xlu0 %1635
    %v1639 = vadd.f32 %v1555, %v1634
    %v1640 = vadd.f32 %v1556, %v1636
    %s1641 = sld [smem:[#allocation2 + $0x18]]
    %v1642 = vstv %s1641
    %v1643 = vmul.f32 %v1642, %v1266
    %v1644 = vmul.f32 %v1642, %v1267
    %v1645 = vmul.f32 %v1642, %v1268
    %v1649 = vrot.slane %v1643, 2
    %v1650 = vrot.slane %v1644, 2
    %v1651 = vsel %vm424, %v1649, %v1650
    %v1652 = vrot.slane %v1645, 2
    %v1653 = vsel %vm424, %v1650, %v1652
    %v1656 = vadd.f32 %v1576, %v1651
    %v1657 = vadd.f32 %v1577, %v1653
    %s1658 = sld [smem:[#allocation2 + $0x3c]]
    %v1659 = vstv %s1658
    %v1660 = vmul.f32 %v1659, %v1266
    %v1661 = vmul.f32 %v1659, %v1267
    %v1662 = vmul.f32 %v1659, %v1268
    %v1666 = vrot.slane %v1660, 2
    %v1667 = vrot.slane %v1661, 2
    %v1668 = vsel %vm424, %v1666, %v1667
    %v1669 = vrot.slane %v1662, 2
    %v1670 = vsel %vm424, %v1667, %v1669
    %v1673 = vadd.f32 %v1597, %v1668
    %v1674 = vadd.f32 %v1598, %v1670
    %s1675 = sld [smem:[#allocation2 + $0x60]]
    %v1676 = vstv %s1675
    %v1677 = vmul.f32 %v1676, %v1266
    %v1678 = vmul.f32 %v1676, %v1267
    %v1679 = vmul.f32 %v1676, %v1268
    %v1683 = vrot.slane %v1677, 2
    %v1684 = vrot.slane %v1678, 2
    %v1685 = vsel %vm424, %v1683, %v1684
    %v1686 = vrot.slane %v1679, 2
    %v1687 = vsel %vm424, %v1684, %v1686
    %v1690 = vadd.f32 %v1618, %v1685
    %v1691 = vadd.f32 %v1619, %v1687
    %s1692 = sld [smem:[#allocation2 + $0x84]]
    %v1693 = vstv %s1692
    %v1694 = vmul.f32 %v1693, %v1266
    %v1695 = vmul.f32 %v1693, %v1267
    %v1696 = vmul.f32 %v1693, %v1268
    %v1700 = vrot.slane %v1694, 2
    %v1701 = vrot.slane %v1695, 2
    %v1702 = vsel %vm424, %v1700, %v1701
    %v1703 = vrot.slane %v1696, 2
    %v1704 = vsel %vm424, %v1701, %v1703
    %v1707 = vadd.f32 %v1639, %v1702
    %v1708 = vadd.f32 %v1640, %v1704
    %s1709 = sld [smem:[#allocation2 + $0x19]]
    %v1710 = vstv %s1709
    %v1711 = vmul.f32 %v1710, %v1266
    %v1712 = vmul.f32 %v1710, %v1267
    %v1713 = vmul.f32 %v1710, %v1268
    %v1717 = vrot.slane %v1711, 2
    %v1718 = vrot.slane %v1712, 2
    %v1719 = vsel %vm424, %v1717, %v1718
    %v1720 = vrot.slane %v1713, 2
    %v1721 = vsel %vm424, %v1718, %v1720
    %1722 = vrot.lane.b32.xlu0 %v1719, 127
    %v1723 = vpop.permute.xlu0 %1722
    %1724 = vrot.lane.b32.xlu0 %v1721, 127
    %v1725 = vpop.permute.xlu0 %1724
    %v1728 = vadd.f32 %v1656, %v1723
    %v1729 = vadd.f32 %v1657, %v1725
    %s1730 = sld [smem:[#allocation2 + $0x3d]]
    %v1731 = vstv %s1730
    %v1732 = vmul.f32 %v1731, %v1266
    %v1733 = vmul.f32 %v1731, %v1267
    %v1734 = vmul.f32 %v1731, %v1268
    %v1738 = vrot.slane %v1732, 2
    %v1739 = vrot.slane %v1733, 2
    %v1740 = vsel %vm424, %v1738, %v1739
    %v1741 = vrot.slane %v1734, 2
    %v1742 = vsel %vm424, %v1739, %v1741
    %1743 = vrot.lane.b32.xlu0 %v1740, 127
    %v1744 = vpop.permute.xlu0 %1743
    %1745 = vrot.lane.b32.xlu0 %v1742, 127
    %v1746 = vpop.permute.xlu0 %1745
    %v1749 = vadd.f32 %v1673, %v1744
    %v1750 = vadd.f32 %v1674, %v1746
    %s1751 = sld [smem:[#allocation2 + $0x61]]
    %v1752 = vstv %s1751
    %v1753 = vmul.f32 %v1752, %v1266
    %v1754 = vmul.f32 %v1752, %v1267
    %v1755 = vmul.f32 %v1752, %v1268
    %v1759 = vrot.slane %v1753, 2
    %v1760 = vrot.slane %v1754, 2
    %v1761 = vsel %vm424, %v1759, %v1760
    %v1762 = vrot.slane %v1755, 2
    %v1763 = vsel %vm424, %v1760, %v1762
    %1764 = vrot.lane.b32.xlu0 %v1761, 127
    %v1765 = vpop.permute.xlu0 %1764
    %1766 = vrot.lane.b32.xlu0 %v1763, 127
    %v1767 = vpop.permute.xlu0 %1766
    %v1770 = vadd.f32 %v1690, %v1765
    %v1771 = vadd.f32 %v1691, %v1767
    %s1772 = sld [smem:[#allocation2 + $0x85]]
    %v1773 = vstv %s1772
    %v1774 = vmul.f32 %v1773, %v1266
    %v1775 = vmul.f32 %v1773, %v1267
    %v1776 = vmul.f32 %v1773, %v1268
    %v1780 = vrot.slane %v1774, 2
    %v1781 = vrot.slane %v1775, 2
    %v1782 = vsel %vm424, %v1780, %v1781
    %v1783 = vrot.slane %v1776, 2
    %v1784 = vsel %vm424, %v1781, %v1783
    %1785 = vrot.lane.b32.xlu0 %v1782, 127
    %v1786 = vpop.permute.xlu0 %1785
    %1787 = vrot.lane.b32.xlu0 %v1784, 127
    %v1788 = vpop.permute.xlu0 %1787
    %v1791 = vadd.f32 %v1707, %v1786
    %v1792 = vadd.f32 %v1708, %v1788
    %s1793 = sld [smem:[#allocation2 + $0x1a]]
    %v1794 = vstv %s1793
    %v1795 = vmul.f32 %v1794, %v1266
    %v1796 = vmul.f32 %v1794, %v1267
    %v1797 = vmul.f32 %v1794, %v1268
    %v1801 = vrot.slane %v1795, 2
    %v1802 = vrot.slane %v1796, 2
    %v1803 = vsel %vm424, %v1801, %v1802
    %v1804 = vrot.slane %v1797, 2
    %v1805 = vsel %vm424, %v1802, %v1804
    %1806 = vrot.lane.b32.xlu0 %v1803, 126
    %v1807 = vpop.permute.xlu0 %1806
    %1808 = vrot.lane.b32.xlu0 %v1805, 126
    %v1809 = vpop.permute.xlu0 %1808
    %v1812 = vadd.f32 %v1728, %v1807
    %v1813 = vadd.f32 %v1729, %v1809
    %s1814 = sld [smem:[#allocation2 + $0x3e]]
    %v1815 = vstv %s1814
    %v1816 = vmul.f32 %v1815, %v1266
    %v1817 = vmul.f32 %v1815, %v1267
    %v1818 = vmul.f32 %v1815, %v1268
    %v1822 = vrot.slane %v1816, 2
    %v1823 = vrot.slane %v1817, 2
    %v1824 = vsel %vm424, %v1822, %v1823
    %v1825 = vrot.slane %v1818, 2
    %v1826 = vsel %vm424, %v1823, %v1825
    %1827 = vrot.lane.b32.xlu0 %v1824, 126
    %v1828 = vpop.permute.xlu0 %1827
    %1829 = vrot.lane.b32.xlu0 %v1826, 126
    %v1830 = vpop.permute.xlu0 %1829
    %v1833 = vadd.f32 %v1749, %v1828
    %v1834 = vadd.f32 %v1750, %v1830
    %s1835 = sld [smem:[#allocation2 + $0x62]]
    %v1836 = vstv %s1835
    %v1837 = vmul.f32 %v1836, %v1266
    %v1838 = vmul.f32 %v1836, %v1267
    %v1839 = vmul.f32 %v1836, %v1268
    %v1843 = vrot.slane %v1837, 2
    %v1844 = vrot.slane %v1838, 2
    %v1845 = vsel %vm424, %v1843, %v1844
    %v1846 = vrot.slane %v1839, 2
    %v1847 = vsel %vm424, %v1844, %v1846
    %1848 = vrot.lane.b32.xlu0 %v1845, 126
    %v1849 = vpop.permute.xlu0 %1848
    %1850 = vrot.lane.b32.xlu0 %v1847, 126
    %v1851 = vpop.permute.xlu0 %1850
    %v1854 = vadd.f32 %v1770, %v1849
    %v1855 = vadd.f32 %v1771, %v1851
    %s1856 = sld [smem:[#allocation2 + $0x86]]
    %v1857 = vstv %s1856
    %v1858 = vmul.f32 %v1857, %v1266
    %v1859 = vmul.f32 %v1857, %v1267
    %v1860 = vmul.f32 %v1857, %v1268
    %v1864 = vrot.slane %v1858, 2
    %v1865 = vrot.slane %v1859, 2
    %v1866 = vsel %vm424, %v1864, %v1865
    %v1867 = vrot.slane %v1860, 2
    %v1868 = vsel %vm424, %v1865, %v1867
    %1869 = vrot.lane.b32.xlu0 %v1866, 126
    %v1870 = vpop.permute.xlu0 %1869
    %1871 = vrot.lane.b32.xlu0 %v1868, 126
    %v1872 = vpop.permute.xlu0 %1871
    %v1875 = vadd.f32 %v1791, %v1870
    %v1876 = vadd.f32 %v1792, %v1872
    %s1877 = scalar_lea.vmem %s0, 72
    %v1878 = vld [vmem:[%s1877] sm:$0xff]
    %v1879 = vld [vmem:[%s1877 + $0x8] sm:$0xff]
    %v1880 = vld [vmem:[%s1877 + $0x10] sm:$0x3]
    %s1881 = sld [smem:[#allocation2 + $0x1b]]
    %v1882 = vstv %s1881
    %v1883 = vmul.f32 %v1882, %v1878
    %v1884 = vmul.f32 %v1882, %v1879
    %v1885 = vadd.f32 %v1812, %v1883
    %v1886 = vadd.f32 %v1813, %v1884
    %s1887 = sld [smem:[#allocation2 + $0x3f]]
    %v1888 = vstv %s1887
    %v1889 = vmul.f32 %v1888, %v1878
    %v1890 = vmul.f32 %v1888, %v1879
    %v1891 = vadd.f32 %v1833, %v1889
    %v1892 = vadd.f32 %v1834, %v1890
    %s1893 = sld [smem:[#allocation2 + $0x63]]
    %v1894 = vstv %s1893
    %v1895 = vmul.f32 %v1894, %v1878
    %v1896 = vmul.f32 %v1894, %v1879
    %v1897 = vadd.f32 %v1854, %v1895
    %v1898 = vadd.f32 %v1855, %v1896
    %s1899 = sld [smem:[#allocation2 + $0x87]]
    %v1900 = vstv %s1899
    %v1901 = vmul.f32 %v1900, %v1878
    %v1902 = vmul.f32 %v1900, %v1879
    %v1903 = vadd.f32 %v1875, %v1901
    %v1904 = vadd.f32 %v1876, %v1902
    %s1905 = sld [smem:[#allocation2 + $0x1c]]
    %v1906 = vstv %s1905
    %v1907 = vmul.f32 %v1906, %v1878
    %v1908 = vmul.f32 %v1906, %v1879
    %1911 = vrot.lane.b32.xlu0 %v1907, 127
    %v1912 = vpop.permute.xlu0 %1911
    %1913 = vrot.lane.b32.xlu0 %v1908, 127
    %v1914 = vpop.permute.xlu0 %1913
    %v1917 = vadd.f32 %v1885, %v1912
    %v1918 = vadd.f32 %v1886, %v1914
    %s1919 = sld [smem:[#allocation2 + $0x40]]
    %v1920 = vstv %s1919
    %v1921 = vmul.f32 %v1920, %v1878
    %v1922 = vmul.f32 %v1920, %v1879
    %1925 = vrot.lane.b32.xlu0 %v1921, 127
    %v1926 = vpop.permute.xlu0 %1925
    %1927 = vrot.lane.b32.xlu0 %v1922, 127
    %v1928 = vpop.permute.xlu0 %1927
    %v1931 = vadd.f32 %v1891, %v1926
    %v1932 = vadd.f32 %v1892, %v1928
    %s1933 = sld [smem:[#allocation2 + $0x64]]
    %v1934 = vstv %s1933
    %v1935 = vmul.f32 %v1934, %v1878
    %v1936 = vmul.f32 %v1934, %v1879
    %1939 = vrot.lane.b32.xlu0 %v1935, 127
    %v1940 = vpop.permute.xlu0 %1939
    %1941 = vrot.lane.b32.xlu0 %v1936, 127
    %v1942 = vpop.permute.xlu0 %1941
    %v1945 = vadd.f32 %v1897, %v1940
    %v1946 = vadd.f32 %v1898, %v1942
    %s1947 = sld [smem:[#allocation2 + $0x88]]
    %v1948 = vstv %s1947
    %v1949 = vmul.f32 %v1948, %v1878
    %v1950 = vmul.f32 %v1948, %v1879
    %1953 = vrot.lane.b32.xlu0 %v1949, 127
    %v1954 = vpop.permute.xlu0 %1953
    %1955 = vrot.lane.b32.xlu0 %v1950, 127
    %v1956 = vpop.permute.xlu0 %1955
    %v1959 = vadd.f32 %v1903, %v1954
    %v1960 = vadd.f32 %v1904, %v1956
    %s1961 = sld [smem:[#allocation2 + $0x1d]]
    %v1962 = vstv %s1961
    %v1963 = vmul.f32 %v1962, %v1878
    %v1964 = vmul.f32 %v1962, %v1879
    %1967 = vrot.lane.b32.xlu0 %v1963, 126
    %v1968 = vpop.permute.xlu0 %1967
    %1969 = vrot.lane.b32.xlu0 %v1964, 126
    %v1970 = vpop.permute.xlu0 %1969
    %v1973 = vadd.f32 %v1917, %v1968
    %v1974 = vadd.f32 %v1918, %v1970
    %s1975 = sld [smem:[#allocation2 + $0x41]]
    %v1976 = vstv %s1975
    %v1977 = vmul.f32 %v1976, %v1878
    %v1978 = vmul.f32 %v1976, %v1879
    %1981 = vrot.lane.b32.xlu0 %v1977, 126
    %v1982 = vpop.permute.xlu0 %1981
    %1983 = vrot.lane.b32.xlu0 %v1978, 126
    %v1984 = vpop.permute.xlu0 %1983
    %v1987 = vadd.f32 %v1931, %v1982
    %v1988 = vadd.f32 %v1932, %v1984
    %s1989 = sld [smem:[#allocation2 + $0x65]]
    %v1990 = vstv %s1989
    %v1991 = vmul.f32 %v1990, %v1878
    %v1992 = vmul.f32 %v1990, %v1879
    %1995 = vrot.lane.b32.xlu0 %v1991, 126
    %v1996 = vpop.permute.xlu0 %1995
    %1997 = vrot.lane.b32.xlu0 %v1992, 126
    %v1998 = vpop.permute.xlu0 %1997
    %v2001 = vadd.f32 %v1945, %v1996
    %v2002 = vadd.f32 %v1946, %v1998
    %s2003 = sld [smem:[#allocation2 + $0x89]]
    %v2004 = vstv %s2003
    %v2005 = vmul.f32 %v2004, %v1878
    %v2006 = vmul.f32 %v2004, %v1879
    %2009 = vrot.lane.b32.xlu0 %v2005, 126
    %v2010 = vpop.permute.xlu0 %2009
    %2011 = vrot.lane.b32.xlu0 %v2006, 126
    %v2012 = vpop.permute.xlu0 %2011
    %v2015 = vadd.f32 %v1959, %v2010
    %v2016 = vadd.f32 %v1960, %v2012
    %s2017 = sld [smem:[#allocation2 + $0x1e]]
    %v2018 = vstv %s2017
    %v2019 = vmul.f32 %v2018, %v1878
    %v2020 = vmul.f32 %v2018, %v1879
    %v2021 = vmul.f32 %v2018, %v1880
    %v2025 = vrot.slane %v2019, 1
    %v2026 = vrot.slane %v2020, 1
    %v2027 = vsel %vm187, %v2025, %v2026
    %v2028 = vrot.slane %v2021, 1
    %v2029 = vsel %vm187, %v2026, %v2028
    %v2032 = vadd.f32 %v1973, %v2027
    %v2033 = vadd.f32 %v1974, %v2029
    %s2034 = sld [smem:[#allocation2 + $0x42]]
    %v2035 = vstv %s2034
    %v2036 = vmul.f32 %v2035, %v1878
    %v2037 = vmul.f32 %v2035, %v1879
    %v2038 = vmul.f32 %v2035, %v1880
    %v2042 = vrot.slane %v2036, 1
    %v2043 = vrot.slane %v2037, 1
    %v2044 = vsel %vm187, %v2042, %v2043
    %v2045 = vrot.slane %v2038, 1
    %v2046 = vsel %vm187, %v2043, %v2045
    %v2049 = vadd.f32 %v1987, %v2044
    %v2050 = vadd.f32 %v1988, %v2046
    %s2051 = sld [smem:[#allocation2 + $0x66]]
    %v2052 = vstv %s2051
    %v2053 = vmul.f32 %v2052, %v1878
    %v2054 = vmul.f32 %v2052, %v1879
    %v2055 = vmul.f32 %v2052, %v1880
    %v2059 = vrot.slane %v2053, 1
    %v2060 = vrot.slane %v2054, 1
    %v2061 = vsel %vm187, %v2059, %v2060
    %v2062 = vrot.slane %v2055, 1
    %v2063 = vsel %vm187, %v2060, %v2062
    %v2066 = vadd.f32 %v2001, %v2061
    %v2067 = vadd.f32 %v2002, %v2063
    %s2068 = sld [smem:[#allocation2 + $0x8a]]
    %v2069 = vstv %s2068
    %v2070 = vmul.f32 %v2069, %v1878
    %v2071 = vmul.f32 %v2069, %v1879
    %v2072 = vmul.f32 %v2069, %v1880
    %v2076 = vrot.slane %v2070, 1
    %v2077 = vrot.slane %v2071, 1
    %v2078 = vsel %vm187, %v2076, %v2077
    %v2079 = vrot.slane %v2072, 1
    %v2080 = vsel %vm187, %v2077, %v2079
    %v2083 = vadd.f32 %v2015, %v2078
    %v2084 = vadd.f32 %v2016, %v2080
    %s2085 = sld [smem:[#allocation2 + $0x1f]]
    %v2086 = vstv %s2085
    %v2087 = vmul.f32 %v2086, %v1878
    %v2088 = vmul.f32 %v2086, %v1879
    %v2089 = vmul.f32 %v2086, %v1880
    %v2093 = vrot.slane %v2087, 1
    %v2094 = vrot.slane %v2088, 1
    %v2095 = vsel %vm187, %v2093, %v2094
    %v2096 = vrot.slane %v2089, 1
    %v2097 = vsel %vm187, %v2094, %v2096
    %2098 = vrot.lane.b32.xlu0 %v2095, 127
    %v2099 = vpop.permute.xlu0 %2098
    %2100 = vrot.lane.b32.xlu0 %v2097, 127
    %v2101 = vpop.permute.xlu0 %2100
    %v2104 = vadd.f32 %v2032, %v2099
    %v2105 = vadd.f32 %v2033, %v2101
    %s2106 = sld [smem:[#allocation2 + $0x43]]
    %v2107 = vstv %s2106
    %v2108 = vmul.f32 %v2107, %v1878
    %v2109 = vmul.f32 %v2107, %v1879
    %v2110 = vmul.f32 %v2107, %v1880
    %v2114 = vrot.slane %v2108, 1
    %v2115 = vrot.slane %v2109, 1
    %v2116 = vsel %vm187, %v2114, %v2115
    %v2117 = vrot.slane %v2110, 1
    %v2118 = vsel %vm187, %v2115, %v2117
    %2119 = vrot.lane.b32.xlu0 %v2116, 127
    %v2120 = vpop.permute.xlu0 %2119
    %2121 = vrot.lane.b32.xlu0 %v2118, 127
    %v2122 = vpop.permute.xlu0 %2121
    %v2125 = vadd.f32 %v2049, %v2120
    %v2126 = vadd.f32 %v2050, %v2122
    %s2127 = sld [smem:[#allocation2 + $0x67]]
    %v2128 = vstv %s2127
    %v2129 = vmul.f32 %v2128, %v1878
    %v2130 = vmul.f32 %v2128, %v1879
    %v2131 = vmul.f32 %v2128, %v1880
    %v2135 = vrot.slane %v2129, 1
    %v2136 = vrot.slane %v2130, 1
    %v2137 = vsel %vm187, %v2135, %v2136
    %v2138 = vrot.slane %v2131, 1
    %v2139 = vsel %vm187, %v2136, %v2138
    %2140 = vrot.lane.b32.xlu0 %v2137, 127
    %v2141 = vpop.permute.xlu0 %2140
    %2142 = vrot.lane.b32.xlu0 %v2139, 127
    %v2143 = vpop.permute.xlu0 %2142
    %v2146 = vadd.f32 %v2066, %v2141
    %v2147 = vadd.f32 %v2067, %v2143
    %s2148 = sld [smem:[#allocation2 + $0x8b]]
    %v2149 = vstv %s2148
    %v2150 = vmul.f32 %v2149, %v1878
    %v2151 = vmul.f32 %v2149, %v1879
    %v2152 = vmul.f32 %v2149, %v1880
    %v2156 = vrot.slane %v2150, 1
    %v2157 = vrot.slane %v2151, 1
    %v2158 = vsel %vm187, %v2156, %v2157
    %v2159 = vrot.slane %v2152, 1
    %v2160 = vsel %vm187, %v2157, %v2159
    %2161 = vrot.lane.b32.xlu0 %v2158, 127
    %v2162 = vpop.permute.xlu0 %2161
    %2163 = vrot.lane.b32.xlu0 %v2160, 127
    %v2164 = vpop.permute.xlu0 %2163
    %v2167 = vadd.f32 %v2083, %v2162
    %v2168 = vadd.f32 %v2084, %v2164
    %s2169 = sld [smem:[#allocation2 + $0x20]]
    %v2170 = vstv %s2169
    %v2171 = vmul.f32 %v2170, %v1878
    %v2172 = vmul.f32 %v2170, %v1879
    %v2173 = vmul.f32 %v2170, %v1880
    %v2177 = vrot.slane %v2171, 1
    %v2178 = vrot.slane %v2172, 1
    %v2179 = vsel %vm187, %v2177, %v2178
    %v2180 = vrot.slane %v2173, 1
    %v2181 = vsel %vm187, %v2178, %v2180
    %2182 = vrot.lane.b32.xlu0 %v2179, 126
    %v2183 = vpop.permute.xlu0 %2182
    %2184 = vrot.lane.b32.xlu0 %v2181, 126
    %v2185 = vpop.permute.xlu0 %2184
    %v2188 = vadd.f32 %v2104, %v2183
    %v2189 = vadd.f32 %v2105, %v2185
    %s2190 = sld [smem:[#allocation2 + $0x44]]
    %v2191 = vstv %s2190
    %v2192 = vmul.f32 %v2191, %v1878
    %v2193 = vmul.f32 %v2191, %v1879
    %v2194 = vmul.f32 %v2191, %v1880
    %v2198 = vrot.slane %v2192, 1
    %v2199 = vrot.slane %v2193, 1
    %v2200 = vsel %vm187, %v2198, %v2199
    %v2201 = vrot.slane %v2194, 1
    %v2202 = vsel %vm187, %v2199, %v2201
    %2203 = vrot.lane.b32.xlu0 %v2200, 126
    %v2204 = vpop.permute.xlu0 %2203
    %2205 = vrot.lane.b32.xlu0 %v2202, 126
    %v2206 = vpop.permute.xlu0 %2205
    %v2209 = vadd.f32 %v2125, %v2204
    %v2210 = vadd.f32 %v2126, %v2206
    %s2211 = sld [smem:[#allocation2 + $0x68]]
    %v2212 = vstv %s2211
    %v2213 = vmul.f32 %v2212, %v1878
    %v2214 = vmul.f32 %v2212, %v1879
    %v2215 = vmul.f32 %v2212, %v1880
    %v2219 = vrot.slane %v2213, 1
    %v2220 = vrot.slane %v2214, 1
    %v2221 = vsel %vm187, %v2219, %v2220
    %v2222 = vrot.slane %v2215, 1
    %v2223 = vsel %vm187, %v2220, %v2222
    %2224 = vrot.lane.b32.xlu0 %v2221, 126
    %v2225 = vpop.permute.xlu0 %2224
    %2226 = vrot.lane.b32.xlu0 %v2223, 126
    %v2227 = vpop.permute.xlu0 %2226
    %v2230 = vadd.f32 %v2146, %v2225
    %v2231 = vadd.f32 %v2147, %v2227
    %s2232 = sld [smem:[#allocation2 + $0x8c]]
    %v2233 = vstv %s2232
    %v2234 = vmul.f32 %v2233, %v1878
    %v2235 = vmul.f32 %v2233, %v1879
    %v2236 = vmul.f32 %v2233, %v1880
    %v2240 = vrot.slane %v2234, 1
    %v2241 = vrot.slane %v2235, 1
    %v2242 = vsel %vm187, %v2240, %v2241
    %v2243 = vrot.slane %v2236, 1
    %v2244 = vsel %vm187, %v2241, %v2243
    %2245 = vrot.lane.b32.xlu0 %v2242, 126
    %v2246 = vpop.permute.xlu0 %2245
    %2247 = vrot.lane.b32.xlu0 %v2244, 126
    %v2248 = vpop.permute.xlu0 %2247
    %v2251 = vadd.f32 %v2167, %v2246
    %v2252 = vadd.f32 %v2168, %v2248
    %s2253 = sld [smem:[#allocation2 + $0x21]]
    %v2254 = vstv %s2253
    %v2255 = vmul.f32 %v2254, %v1878
    %v2256 = vmul.f32 %v2254, %v1879
    %v2257 = vmul.f32 %v2254, %v1880
    %v2261 = vrot.slane %v2255, 2
    %v2262 = vrot.slane %v2256, 2
    %v2263 = vsel %vm424, %v2261, %v2262
    %v2264 = vrot.slane %v2257, 2
    %v2265 = vsel %vm424, %v2262, %v2264
    %v2268 = vadd.f32 %v2188, %v2263
    %v2269 = vadd.f32 %v2189, %v2265
    %s2270 = sld [smem:[#allocation2 + $0x45]]
    %v2271 = vstv %s2270
    %v2272 = vmul.f32 %v2271, %v1878
    %v2273 = vmul.f32 %v2271, %v1879
    %v2274 = vmul.f32 %v2271, %v1880
    %v2278 = vrot.slane %v2272, 2
    %v2279 = vrot.slane %v2273, 2
    %v2280 = vsel %vm424, %v2278, %v2279
    %v2281 = vrot.slane %v2274, 2
    %v2282 = vsel %vm424, %v2279, %v2281
    %v2285 = vadd.f32 %v2209, %v2280
    %v2286 = vadd.f32 %v2210, %v2282
    %s2287 = sld [smem:[#allocation2 + $0x69]]
    %v2288 = vstv %s2287
    %v2289 = vmul.f32 %v2288, %v1878
    %v2290 = vmul.f32 %v2288, %v1879
    %v2291 = vmul.f32 %v2288, %v1880
    %v2295 = vrot.slane %v2289, 2
    %v2296 = vrot.slane %v2290, 2
    %v2297 = vsel %vm424, %v2295, %v2296
    %v2298 = vrot.slane %v2291, 2
    %v2299 = vsel %vm424, %v2296, %v2298
    %v2302 = vadd.f32 %v2230, %v2297
    %v2303 = vadd.f32 %v2231, %v2299
    %s2304 = sld [smem:[#allocation2 + $0x8d]]
    %v2305 = vstv %s2304
    %v2306 = vmul.f32 %v2305, %v1878
    %v2307 = vmul.f32 %v2305, %v1879
    %v2308 = vmul.f32 %v2305, %v1880
    %v2312 = vrot.slane %v2306, 2
    %v2313 = vrot.slane %v2307, 2
    %v2314 = vsel %vm424, %v2312, %v2313
    %v2315 = vrot.slane %v2308, 2
    %v2316 = vsel %vm424, %v2313, %v2315
    %v2319 = vadd.f32 %v2251, %v2314
    %v2320 = vadd.f32 %v2252, %v2316
    %s2321 = sld [smem:[#allocation2 + $0x22]]
    %v2322 = vstv %s2321
    %v2323 = vmul.f32 %v2322, %v1878
    %v2324 = vmul.f32 %v2322, %v1879
    %v2325 = vmul.f32 %v2322, %v1880
    %v2329 = vrot.slane %v2323, 2
    %v2330 = vrot.slane %v2324, 2
    %v2331 = vsel %vm424, %v2329, %v2330
    %v2332 = vrot.slane %v2325, 2
    %v2333 = vsel %vm424, %v2330, %v2332
    %2334 = vrot.lane.b32.xlu0 %v2331, 127
    %v2335 = vpop.permute.xlu0 %2334
    %2336 = vrot.lane.b32.xlu0 %v2333, 127
    %v2337 = vpop.permute.xlu0 %2336
    %v2340 = vadd.f32 %v2268, %v2335
    %v2341 = vadd.f32 %v2269, %v2337
    %s2342 = sld [smem:[#allocation2 + $0x46]]
    %v2343 = vstv %s2342
    %v2344 = vmul.f32 %v2343, %v1878
    %v2345 = vmul.f32 %v2343, %v1879
    %v2346 = vmul.f32 %v2343, %v1880
    %v2350 = vrot.slane %v2344, 2
    %v2351 = vrot.slane %v2345, 2
    %v2352 = vsel %vm424, %v2350, %v2351
    %v2353 = vrot.slane %v2346, 2
    %v2354 = vsel %vm424, %v2351, %v2353
    %2355 = vrot.lane.b32.xlu0 %v2352, 127
    %v2356 = vpop.permute.xlu0 %2355
    %2357 = vrot.lane.b32.xlu0 %v2354, 127
    %v2358 = vpop.permute.xlu0 %2357
    %v2361 = vadd.f32 %v2285, %v2356
    %v2362 = vadd.f32 %v2286, %v2358
    %s2363 = sld [smem:[#allocation2 + $0x6a]]
    %v2364 = vstv %s2363
    %v2365 = vmul.f32 %v2364, %v1878
    %v2366 = vmul.f32 %v2364, %v1879
    %v2367 = vmul.f32 %v2364, %v1880
    %v2371 = vrot.slane %v2365, 2
    %v2372 = vrot.slane %v2366, 2
    %v2373 = vsel %vm424, %v2371, %v2372
    %v2374 = vrot.slane %v2367, 2
    %v2375 = vsel %vm424, %v2372, %v2374
    %2376 = vrot.lane.b32.xlu0 %v2373, 127
    %v2377 = vpop.permute.xlu0 %2376
    %2378 = vrot.lane.b32.xlu0 %v2375, 127
    %v2379 = vpop.permute.xlu0 %2378
    %v2382 = vadd.f32 %v2302, %v2377
    %v2383 = vadd.f32 %v2303, %v2379
    %s2384 = sld [smem:[#allocation2 + $0x8e]]
    %v2385 = vstv %s2384
    %v2386 = vmul.f32 %v2385, %v1878
    %v2387 = vmul.f32 %v2385, %v1879
    %v2388 = vmul.f32 %v2385, %v1880
    %v2392 = vrot.slane %v2386, 2
    %v2393 = vrot.slane %v2387, 2
    %v2394 = vsel %vm424, %v2392, %v2393
    %v2395 = vrot.slane %v2388, 2
    %v2396 = vsel %vm424, %v2393, %v2395
    %2397 = vrot.lane.b32.xlu0 %v2394, 127
    %v2398 = vpop.permute.xlu0 %2397
    %2399 = vrot.lane.b32.xlu0 %v2396, 127
    %v2400 = vpop.permute.xlu0 %2399
    %v2403 = vadd.f32 %v2319, %v2398
    %v2404 = vadd.f32 %v2320, %v2400
    %s2405 = sld [smem:[#allocation2 + $0x23]]
    %v2406 = vstv %s2405
    %v2407 = vmul.f32 %v2406, %v1878
    %v2408 = vmul.f32 %v2406, %v1879
    %v2409 = vmul.f32 %v2406, %v1880
    %v2413 = vrot.slane %v2407, 2
    %v2414 = vrot.slane %v2408, 2
    %v2415 = vsel %vm424, %v2413, %v2414
    %v2416 = vrot.slane %v2409, 2
    %v2417 = vsel %vm424, %v2414, %v2416
    %2418 = vrot.lane.b32.xlu0 %v2415, 126
    %v2419 = vpop.permute.xlu0 %2418
    %2420 = vrot.lane.b32.xlu0 %v2417, 126
    %v2421 = vpop.permute.xlu0 %2420
    %v2424 = vadd.f32 %v2340, %v2419
    %v2425 = vadd.f32 %v2341, %v2421
    %s2426 = sld [smem:[#allocation2 + $0x47]]
    %v2427 = vstv %s2426
    %v2428 = vmul.f32 %v2427, %v1878
    %v2429 = vmul.f32 %v2427, %v1879
    %v2430 = vmul.f32 %v2427, %v1880
    %v2434 = vrot.slane %v2428, 2
    %v2435 = vrot.slane %v2429, 2
    %v2436 = vsel %vm424, %v2434, %v2435
    %v2437 = vrot.slane %v2430, 2
    %v2438 = vsel %vm424, %v2435, %v2437
    %2439 = vrot.lane.b32.xlu0 %v2436, 126
    %v2440 = vpop.permute.xlu0 %2439
    %2441 = vrot.lane.b32.xlu0 %v2438, 126
    %v2442 = vpop.permute.xlu0 %2441
    %v2445 = vadd.f32 %v2361, %v2440
    %v2446 = vadd.f32 %v2362, %v2442
    %s2447 = sld [smem:[#allocation2 + $0x6b]]
    %v2448 = vstv %s2447
    %v2449 = vmul.f32 %v2448, %v1878
    %v2450 = vmul.f32 %v2448, %v1879
    %v2451 = vmul.f32 %v2448, %v1880
    %v2455 = vrot.slane %v2449, 2
    %v2456 = vrot.slane %v2450, 2
    %v2457 = vsel %vm424, %v2455, %v2456
    %v2458 = vrot.slane %v2451, 2
    %v2459 = vsel %vm424, %v2456, %v2458
    %2460 = vrot.lane.b32.xlu0 %v2457, 126
    %v2461 = vpop.permute.xlu0 %2460
    %2462 = vrot.lane.b32.xlu0 %v2459, 126
    %v2463 = vpop.permute.xlu0 %2462
    %v2466 = vadd.f32 %v2382, %v2461
    %v2467 = vadd.f32 %v2383, %v2463
    %s2468 = sld [smem:[#allocation2 + $0x8f]]
    %v2469 = vstv %s2468
    %v2470 = vmul.f32 %v2469, %v1878
    %v2471 = vmul.f32 %v2469, %v1879
    %v2472 = vmul.f32 %v2469, %v1880
    %v2476 = vrot.slane %v2470, 2
    %v2477 = vrot.slane %v2471, 2
    %v2478 = vsel %vm424, %v2476, %v2477
    %v2479 = vrot.slane %v2472, 2
    %v2480 = vsel %vm424, %v2477, %v2479
    %2481 = vrot.lane.b32.xlu0 %v2478, 126
    %v2482 = vpop.permute.xlu0 %2481
    %2483 = vrot.lane.b32.xlu0 %v2480, 126
    %v2484 = vpop.permute.xlu0 %2483
    %v2487 = vadd.f32 %v2403, %v2482
    %v2488 = vadd.f32 %v2404, %v2484
    %s2489 = scalar_lea.vmem %s0, 96
    %v2490 = vld [vmem:[%s2489] sm:$0xff]
    %v2491 = vld [vmem:[%s2489 + $0x8] sm:$0xff]
    %v2492 = vld [vmem:[%s2489 + $0x10] sm:$0x3]
    %v2493 = vmul.f32 %v44, %v2490
    %v2494 = vmul.f32 %v44, %v2491
    %v2495 = vadd.f32 %v2493, 0.0
    %v2496 = vadd.f32 %v2494, 0.0
    %v2497 = vmul.f32 %v50, %v2490
    %v2498 = vmul.f32 %v50, %v2491
    %v2499 = vadd.f32 %v2497, 0.0
    %v2500 = vadd.f32 %v2498, 0.0
    %v2501 = vmul.f32 %v56, %v2490
    %v2502 = vmul.f32 %v56, %v2491
    %v2503 = vadd.f32 %v2501, 0.0
    %v2504 = vadd.f32 %v2502, 0.0
    %v2505 = vmul.f32 %v62, %v2490
    %v2506 = vmul.f32 %v62, %v2491
    %v2507 = vadd.f32 %v2505, 0.0
    %v2508 = vadd.f32 %v2506, 0.0
    %v2509 = vmul.f32 %v68, %v2490
    %v2510 = vmul.f32 %v68, %v2491
    %2513 = vrot.lane.b32.xlu0 %v2509, 127
    %v2514 = vpop.permute.xlu0 %2513
    %2515 = vrot.lane.b32.xlu0 %v2510, 127
    %v2516 = vpop.permute.xlu0 %2515
    %v2519 = vadd.f32 %v2495, %v2514
    %v2520 = vadd.f32 %v2496, %v2516
    %v2521 = vmul.f32 %v82, %v2490
    %v2522 = vmul.f32 %v82, %v2491
    %2525 = vrot.lane.b32.xlu0 %v2521, 127
    %v2526 = vpop.permute.xlu0 %2525
    %2527 = vrot.lane.b32.xlu0 %v2522, 127
    %v2528 = vpop.permute.xlu0 %2527
    %v2531 = vadd.f32 %v2499, %v2526
    %v2532 = vadd.f32 %v2500, %v2528
    %v2533 = vmul.f32 %v96, %v2490
    %v2534 = vmul.f32 %v96, %v2491
    %2537 = vrot.lane.b32.xlu0 %v2533, 127
    %v2538 = vpop.permute.xlu0 %2537
    %2539 = vrot.lane.b32.xlu0 %v2534, 127
    %v2540 = vpop.permute.xlu0 %2539
    %v2543 = vadd.f32 %v2503, %v2538
    %v2544 = vadd.f32 %v2504, %v2540
    %v2545 = vmul.f32 %v110, %v2490
    %v2546 = vmul.f32 %v110, %v2491
    %2549 = vrot.lane.b32.xlu0 %v2545, 127
    %v2550 = vpop.permute.xlu0 %2549
    %2551 = vrot.lane.b32.xlu0 %v2546, 127
    %v2552 = vpop.permute.xlu0 %2551
    %v2555 = vadd.f32 %v2507, %v2550
    %v2556 = vadd.f32 %v2508, %v2552
    %v2557 = vmul.f32 %v124, %v2490
    %v2558 = vmul.f32 %v124, %v2491
    %2561 = vrot.lane.b32.xlu0 %v2557, 126
    %v2562 = vpop.permute.xlu0 %2561
    %2563 = vrot.lane.b32.xlu0 %v2558, 126
    %v2564 = vpop.permute.xlu0 %2563
    %v2567 = vadd.f32 %v2519, %v2562
    %v2568 = vadd.f32 %v2520, %v2564
    %v2569 = vmul.f32 %v138, %v2490
    %v2570 = vmul.f32 %v138, %v2491
    %2573 = vrot.lane.b32.xlu0 %v2569, 126
    %v2574 = vpop.permute.xlu0 %2573
    %2575 = vrot.lane.b32.xlu0 %v2570, 126
    %v2576 = vpop.permute.xlu0 %2575
    %v2579 = vadd.f32 %v2531, %v2574
    %v2580 = vadd.f32 %v2532, %v2576
    %v2581 = vmul.f32 %v152, %v2490
    %v2582 = vmul.f32 %v152, %v2491
    %2585 = vrot.lane.b32.xlu0 %v2581, 126
    %v2586 = vpop.permute.xlu0 %2585
    %2587 = vrot.lane.b32.xlu0 %v2582, 126
    %v2588 = vpop.permute.xlu0 %2587
    %v2591 = vadd.f32 %v2543, %v2586
    %v2592 = vadd.f32 %v2544, %v2588
    %v2593 = vmul.f32 %v166, %v2490
    %v2594 = vmul.f32 %v166, %v2491
    %2597 = vrot.lane.b32.xlu0 %v2593, 126
    %v2598 = vpop.permute.xlu0 %2597
    %2599 = vrot.lane.b32.xlu0 %v2594, 126
    %v2600 = vpop.permute.xlu0 %2599
    %v2603 = vadd.f32 %v2555, %v2598
    %v2604 = vadd.f32 %v2556, %v2600
    %v2605 = vmul.f32 %v180, %v2490
    %v2606 = vmul.f32 %v180, %v2491
    %v2607 = vmul.f32 %v180, %v2492
    %v2611 = vrot.slane %v2605, 1
    %v2612 = vrot.slane %v2606, 1
    %v2613 = vsel %vm187, %v2611, %v2612
    %v2614 = vrot.slane %v2607, 1
    %v2615 = vsel %vm187, %v2612, %v2614
    %v2618 = vadd.f32 %v2567, %v2613
    %v2619 = vadd.f32 %v2568, %v2615
    %v2620 = vmul.f32 %v198, %v2490
    %v2621 = vmul.f32 %v198, %v2491
    %v2622 = vmul.f32 %v198, %v2492
    %v2626 = vrot.slane %v2620, 1
    %v2627 = vrot.slane %v2621, 1
    %v2628 = vsel %vm187, %v2626, %v2627
    %v2629 = vrot.slane %v2622, 1
    %v2630 = vsel %vm187, %v2627, %v2629
    %v2633 = vadd.f32 %v2579, %v2628
    %v2634 = vadd.f32 %v2580, %v2630
    %v2635 = vmul.f32 %v215, %v2490
    %v2636 = vmul.f32 %v215, %v2491
    %v2637 = vmul.f32 %v215, %v2492
    %v2641 = vrot.slane %v2635, 1
    %v2642 = vrot.slane %v2636, 1
    %v2643 = vsel %vm187, %v2641, %v2642
    %v2644 = vrot.slane %v2637, 1
    %v2645 = vsel %vm187, %v2642, %v2644
    %v2648 = vadd.f32 %v2591, %v2643
    %v2649 = vadd.f32 %v2592, %v2645
    %v2650 = vmul.f32 %v232, %v2490
    %v2651 = vmul.f32 %v232, %v2491
    %v2652 = vmul.f32 %v232, %v2492
    %v2656 = vrot.slane %v2650, 1
    %v2657 = vrot.slane %v2651, 1
    %v2658 = vsel %vm187, %v2656, %v2657
    %v2659 = vrot.slane %v2652, 1
    %v2660 = vsel %vm187, %v2657, %v2659
    %v2663 = vadd.f32 %v2603, %v2658
    %v2664 = vadd.f32 %v2604, %v2660
    %v2665 = vmul.f32 %v249, %v2490
    %v2666 = vmul.f32 %v249, %v2491
    %v2667 = vmul.f32 %v249, %v2492
    %v2671 = vrot.slane %v2665, 1
    %v2672 = vrot.slane %v2666, 1
    %v2673 = vsel %vm187, %v2671, %v2672
    %v2674 = vrot.slane %v2667, 1
    %v2675 = vsel %vm187, %v2672, %v2674
    %2676 = vrot.lane.b32.xlu0 %v2673, 127
    %v2677 = vpop.permute.xlu0 %2676
    %2678 = vrot.lane.b32.xlu0 %v2675, 127
    %v2679 = vpop.permute.xlu0 %2678
    %v2682 = vadd.f32 %v2618, %v2677
    %v2683 = vadd.f32 %v2619, %v2679
    %v2684 = vmul.f32 %v270, %v2490
    %v2685 = vmul.f32 %v270, %v2491
    %v2686 = vmul.f32 %v270, %v2492
    %v2690 = vrot.slane %v2684, 1
    %v2691 = vrot.slane %v2685, 1
    %v2692 = vsel %vm187, %v2690, %v2691
    %v2693 = vrot.slane %v2686, 1
    %v2694 = vsel %vm187, %v2691, %v2693
    %2695 = vrot.lane.b32.xlu0 %v2692, 127
    %v2696 = vpop.permute.xlu0 %2695
    %2697 = vrot.lane.b32.xlu0 %v2694, 127
    %v2698 = vpop.permute.xlu0 %2697
    %v2701 = vadd.f32 %v2633, %v2696
    %v2702 = vadd.f32 %v2634, %v2698
    %v2703 = vmul.f32 %v291, %v2490
    %v2704 = vmul.f32 %v291, %v2491
    %v2705 = vmul.f32 %v291, %v2492
    %v2709 = vrot.slane %v2703, 1
    %v2710 = vrot.slane %v2704, 1
    %v2711 = vsel %vm187, %v2709, %v2710
    %v2712 = vrot.slane %v2705, 1
    %v2713 = vsel %vm187, %v2710, %v2712
    %2714 = vrot.lane.b32.xlu0 %v2711, 127
    %v2715 = vpop.permute.xlu0 %2714
    %2716 = vrot.lane.b32.xlu0 %v2713, 127
    %v2717 = vpop.permute.xlu0 %2716
    %v2720 = vadd.f32 %v2648, %v2715
    %v2721 = vadd.f32 %v2649, %v2717
    %v2722 = vmul.f32 %v312, %v2490
    %v2723 = vmul.f32 %v312, %v2491
    %v2724 = vmul.f32 %v312, %v2492
    %v2728 = vrot.slane %v2722, 1
    %v2729 = vrot.slane %v2723, 1
    %v2730 = vsel %vm187, %v2728, %v2729
    %v2731 = vrot.slane %v2724, 1
    %v2732 = vsel %vm187, %v2729, %v2731
    %2733 = vrot.lane.b32.xlu0 %v2730, 127
    %v2734 = vpop.permute.xlu0 %2733
    %2735 = vrot.lane.b32.xlu0 %v2732, 127
    %v2736 = vpop.permute.xlu0 %2735
    %v2739 = vadd.f32 %v2663, %v2734
    %v2740 = vadd.f32 %v2664, %v2736
    %v2741 = vmul.f32 %v333, %v2490
    %v2742 = vmul.f32 %v333, %v2491
    %v2743 = vmul.f32 %v333, %v2492
    %v2747 = vrot.slane %v2741, 1
    %v2748 = vrot.slane %v2742, 1
    %v2749 = vsel %vm187, %v2747, %v2748
    %v2750 = vrot.slane %v2743, 1
    %v2751 = vsel %vm187, %v2748, %v2750
    %2752 = vrot.lane.b32.xlu0 %v2749, 126
    %v2753 = vpop.permute.xlu0 %2752
    %2754 = vrot.lane.b32.xlu0 %v2751, 126
    %v2755 = vpop.permute.xlu0 %2754
    %v2758 = vadd.f32 %v2682, %v2753
    %v2759 = vadd.f32 %v2683, %v2755
    %v2760 = vmul.f32 %v354, %v2490
    %v2761 = vmul.f32 %v354, %v2491
    %v2762 = vmul.f32 %v354, %v2492
    %v2766 = vrot.slane %v2760, 1
    %v2767 = vrot.slane %v2761, 1
    %v2768 = vsel %vm187, %v2766, %v2767
    %v2769 = vrot.slane %v2762, 1
    %v2770 = vsel %vm187, %v2767, %v2769
    %2771 = vrot.lane.b32.xlu0 %v2768, 126
    %v2772 = vpop.permute.xlu0 %2771
    %2773 = vrot.lane.b32.xlu0 %v2770, 126
    %v2774 = vpop.permute.xlu0 %2773
    %v2777 = vadd.f32 %v2701, %v2772
    %v2778 = vadd.f32 %v2702, %v2774
    %v2779 = vmul.f32 %v375, %v2490
    %v2780 = vmul.f32 %v375, %v2491
    %v2781 = vmul.f32 %v375, %v2492
    %v2785 = vrot.slane %v2779, 1
    %v2786 = vrot.slane %v2780, 1
    %v2787 = vsel %vm187, %v2785, %v2786
    %v2788 = vrot.slane %v2781, 1
    %v2789 = vsel %vm187, %v2786, %v2788
    %2790 = vrot.lane.b32.xlu0 %v2787, 126
    %v2791 = vpop.permute.xlu0 %2790
    %2792 = vrot.lane.b32.xlu0 %v2789, 126
    %v2793 = vpop.permute.xlu0 %2792
    %v2796 = vadd.f32 %v2720, %v2791
    %v2797 = vadd.f32 %v2721, %v2793
    %v2798 = vmul.f32 %v396, %v2490
    %v2799 = vmul.f32 %v396, %v2491
    %v2800 = vmul.f32 %v396, %v2492
    %v2804 = vrot.slane %v2798, 1
    %v2805 = vrot.slane %v2799, 1
    %v2806 = vsel %vm187, %v2804, %v2805
    %v2807 = vrot.slane %v2800, 1
    %v2808 = vsel %vm187, %v2805, %v2807
    %2809 = vrot.lane.b32.xlu0 %v2806, 126
    %v2810 = vpop.permute.xlu0 %2809
    %2811 = vrot.lane.b32.xlu0 %v2808, 126
    %v2812 = vpop.permute.xlu0 %2811
    %v2815 = vadd.f32 %v2739, %v2810
    %v2816 = vadd.f32 %v2740, %v2812
    %v2817 = vmul.f32 %v417, %v2490
    %v2818 = vmul.f32 %v417, %v2491
    %v2819 = vmul.f32 %v417, %v2492
    %v2823 = vrot.slane %v2817, 2
    %v2824 = vrot.slane %v2818, 2
    %v2825 = vsel %vm424, %v2823, %v2824
    %v2826 = vrot.slane %v2819, 2
    %v2827 = vsel %vm424, %v2824, %v2826
    %v2830 = vadd.f32 %v2758, %v2825
    %v2831 = vadd.f32 %v2759, %v2827
    %v2832 = vmul.f32 %v435, %v2490
    %v2833 = vmul.f32 %v435, %v2491
    %v2834 = vmul.f32 %v435, %v2492
    %v2838 = vrot.slane %v2832, 2
    %v2839 = vrot.slane %v2833, 2
    %v2840 = vsel %vm424, %v2838, %v2839
    %v2841 = vrot.slane %v2834, 2
    %v2842 = vsel %vm424, %v2839, %v2841
    %v2845 = vadd.f32 %v2777, %v2840
    %v2846 = vadd.f32 %v2778, %v2842
    %v2847 = vmul.f32 %v452, %v2490
    %v2848 = vmul.f32 %v452, %v2491
    %v2849 = vmul.f32 %v452, %v2492
    %v2853 = vrot.slane %v2847, 2
    %v2854 = vrot.slane %v2848, 2
    %v2855 = vsel %vm424, %v2853, %v2854
    %v2856 = vrot.slane %v2849, 2
    %v2857 = vsel %vm424, %v2854, %v2856
    %v2860 = vadd.f32 %v2796, %v2855
    %v2861 = vadd.f32 %v2797, %v2857
    %v2862 = vmul.f32 %v469, %v2490
    %v2863 = vmul.f32 %v469, %v2491
    %v2864 = vmul.f32 %v469, %v2492
    %v2868 = vrot.slane %v2862, 2
    %v2869 = vrot.slane %v2863, 2
    %v2870 = vsel %vm424, %v2868, %v2869
    %v2871 = vrot.slane %v2864, 2
    %v2872 = vsel %vm424, %v2869, %v2871
    %v2875 = vadd.f32 %v2815, %v2870
    %v2876 = vadd.f32 %v2816, %v2872
    %v2877 = vmul.f32 %v486, %v2490
    %v2878 = vmul.f32 %v486, %v2491
    %v2879 = vmul.f32 %v486, %v2492
    %v2883 = vrot.slane %v2877, 2
    %v2884 = vrot.slane %v2878, 2
    %v2885 = vsel %vm424, %v2883, %v2884
    %v2886 = vrot.slane %v2879, 2
    %v2887 = vsel %vm424, %v2884, %v2886
    %2888 = vrot.lane.b32.xlu0 %v2885, 127
    %v2889 = vpop.permute.xlu0 %2888
    %2890 = vrot.lane.b32.xlu0 %v2887, 127
    %v2891 = vpop.permute.xlu0 %2890
    %v2894 = vadd.f32 %v2830, %v2889
    %v2895 = vadd.f32 %v2831, %v2891
    %v2896 = vmul.f32 %v507, %v2490
    %v2897 = vmul.f32 %v507, %v2491
    %v2898 = vmul.f32 %v507, %v2492
    %v2902 = vrot.slane %v2896, 2
    %v2903 = vrot.slane %v2897, 2
    %v2904 = vsel %vm424, %v2902, %v2903
    %v2905 = vrot.slane %v2898, 2
    %v2906 = vsel %vm424, %v2903, %v2905
    %2907 = vrot.lane.b32.xlu0 %v2904, 127
    %v2908 = vpop.permute.xlu0 %2907
    %2909 = vrot.lane.b32.xlu0 %v2906, 127
    %v2910 = vpop.permute.xlu0 %2909
    %v2913 = vadd.f32 %v2845, %v2908
    %v2914 = vadd.f32 %v2846, %v2910
    %v2915 = vmul.f32 %v528, %v2490
    %v2916 = vmul.f32 %v528, %v2491
    %v2917 = vmul.f32 %v528, %v2492
    %v2921 = vrot.slane %v2915, 2
    %v2922 = vrot.slane %v2916, 2
    %v2923 = vsel %vm424, %v2921, %v2922
    %v2924 = vrot.slane %v2917, 2
    %v2925 = vsel %vm424, %v2922, %v2924
    %2926 = vrot.lane.b32.xlu0 %v2923, 127
    %v2927 = vpop.permute.xlu0 %2926
    %2928 = vrot.lane.b32.xlu0 %v2925, 127
    %v2929 = vpop.permute.xlu0 %2928
    %v2932 = vadd.f32 %v2860, %v2927
    %v2933 = vadd.f32 %v2861, %v2929
    %v2934 = vmul.f32 %v549, %v2490
    %v2935 = vmul.f32 %v549, %v2491
    %v2936 = vmul.f32 %v549, %v2492
    %v2940 = vrot.slane %v2934, 2
    %v2941 = vrot.slane %v2935, 2
    %v2942 = vsel %vm424, %v2940, %v2941
    %v2943 = vrot.slane %v2936, 2
    %v2944 = vsel %vm424, %v2941, %v2943
    %2945 = vrot.lane.b32.xlu0 %v2942, 127
    %v2946 = vpop.permute.xlu0 %2945
    %2947 = vrot.lane.b32.xlu0 %v2944, 127
    %v2948 = vpop.permute.xlu0 %2947
    %v2951 = vadd.f32 %v2875, %v2946
    %v2952 = vadd.f32 %v2876, %v2948
    %v2953 = vmul.f32 %v570, %v2490
    %v2954 = vmul.f32 %v570, %v2491
    %v2955 = vmul.f32 %v570, %v2492
    %v2959 = vrot.slane %v2953, 2
    %v2960 = vrot.slane %v2954, 2
    %v2961 = vsel %vm424, %v2959, %v2960
    %v2962 = vrot.slane %v2955, 2
    %v2963 = vsel %vm424, %v2960, %v2962
    %2964 = vrot.lane.b32.xlu0 %v2961, 126
    %v2965 = vpop.permute.xlu0 %2964
    %2966 = vrot.lane.b32.xlu0 %v2963, 126
    %v2967 = vpop.permute.xlu0 %2966
    %v2970 = vadd.f32 %v2894, %v2965
    %v2971 = vadd.f32 %v2895, %v2967
    %v2972 = vmul.f32 %v591, %v2490
    %v2973 = vmul.f32 %v591, %v2491
    %v2974 = vmul.f32 %v591, %v2492
    %v2978 = vrot.slane %v2972, 2
    %v2979 = vrot.slane %v2973, 2
    %v2980 = vsel %vm424, %v2978, %v2979
    %v2981 = vrot.slane %v2974, 2
    %v2982 = vsel %vm424, %v2979, %v2981
    %2983 = vrot.lane.b32.xlu0 %v2980, 126
    %v2984 = vpop.permute.xlu0 %2983
    %2985 = vrot.lane.b32.xlu0 %v2982, 126
    %v2986 = vpop.permute.xlu0 %2985
    %v2989 = vadd.f32 %v2913, %v2984
    %v2990 = vadd.f32 %v2914, %v2986
    %v2991 = vmul.f32 %v612, %v2490
    %v2992 = vmul.f32 %v612, %v2491
    %v2993 = vmul.f32 %v612, %v2492
    %v2997 = vrot.slane %v2991, 2
    %v2998 = vrot.slane %v2992, 2
    %v2999 = vsel %vm424, %v2997, %v2998
    %v3000 = vrot.slane %v2993, 2
    %v3001 = vsel %vm424, %v2998, %v3000
    %3002 = vrot.lane.b32.xlu0 %v2999, 126
    %v3003 = vpop.permute.xlu0 %3002
    %3004 = vrot.lane.b32.xlu0 %v3001, 126
    %v3005 = vpop.permute.xlu0 %3004
    %v3008 = vadd.f32 %v2932, %v3003
    %v3009 = vadd.f32 %v2933, %v3005
    %v3010 = vmul.f32 %v633, %v2490
    %v3011 = vmul.f32 %v633, %v2491
    %v3012 = vmul.f32 %v633, %v2492
    %v3016 = vrot.slane %v3010, 2
    %v3017 = vrot.slane %v3011, 2
    %v3018 = vsel %vm424, %v3016, %v3017
    %v3019 = vrot.slane %v3012, 2
    %v3020 = vsel %vm424, %v3017, %v3019
    %3021 = vrot.lane.b32.xlu0 %v3018, 126
    %v3022 = vpop.permute.xlu0 %3021
    %3023 = vrot.lane.b32.xlu0 %v3020, 126
    %v3024 = vpop.permute.xlu0 %3023
    %v3027 = vadd.f32 %v2951, %v3022
    %v3028 = vadd.f32 %v2952, %v3024
    %s3029 = scalar_lea.vmem %s0, 120
    %v3030 = vld [vmem:[%s3029] sm:$0xff]
    %v3031 = vld [vmem:[%s3029 + $0x8] sm:$0xff]
    %v3032 = vld [vmem:[%s3029 + $0x10] sm:$0x3]
    %v3033 = vmul.f32 %v658, %v3030
    %v3034 = vmul.f32 %v658, %v3031
    %v3035 = vadd.f32 %v2970, %v3033
    %v3036 = vadd.f32 %v2971, %v3034
    %v3037 = vmul.f32 %v664, %v3030
    %v3038 = vmul.f32 %v664, %v3031
    %v3039 = vadd.f32 %v2989, %v3037
    %v3040 = vadd.f32 %v2990, %v3038
    %v3041 = vmul.f32 %v670, %v3030
    %v3042 = vmul.f32 %v670, %v3031
    %v3043 = vadd.f32 %v3008, %v3041
    %v3044 = vadd.f32 %v3009, %v3042
    %v3045 = vmul.f32 %v676, %v3030
    %v3046 = vmul.f32 %v676, %v3031
    %v3047 = vadd.f32 %v3027, %v3045
    %v3048 = vadd.f32 %v3028, %v3046
    %v3049 = vmul.f32 %v682, %v3030
    %v3050 = vmul.f32 %v682, %v3031
    %3053 = vrot.lane.b32.xlu0 %v3049, 127
    %v3054 = vpop.permute.xlu0 %3053
    %3055 = vrot.lane.b32.xlu0 %v3050, 127
    %v3056 = vpop.permute.xlu0 %3055
    %v3059 = vadd.f32 %v3035, %v3054
    %v3060 = vadd.f32 %v3036, %v3056
    %v3061 = vmul.f32 %v696, %v3030
    %v3062 = vmul.f32 %v696, %v3031
    %3065 = vrot.lane.b32.xlu0 %v3061, 127
    %v3066 = vpop.permute.xlu0 %3065
    %3067 = vrot.lane.b32.xlu0 %v3062, 127
    %v3068 = vpop.permute.xlu0 %3067
    %v3071 = vadd.f32 %v3039, %v3066
    %v3072 = vadd.f32 %v3040, %v3068
    %v3073 = vmul.f32 %v710, %v3030
    %v3074 = vmul.f32 %v710, %v3031
    %3077 = vrot.lane.b32.xlu0 %v3073, 127
    %v3078 = vpop.permute.xlu0 %3077
    %3079 = vrot.lane.b32.xlu0 %v3074, 127
    %v3080 = vpop.permute.xlu0 %3079
    %v3083 = vadd.f32 %v3043, %v3078
    %v3084 = vadd.f32 %v3044, %v3080
    %v3085 = vmul.f32 %v724, %v3030
    %v3086 = vmul.f32 %v724, %v3031
    %3089 = vrot.lane.b32.xlu0 %v3085, 127
    %v3090 = vpop.permute.xlu0 %3089
    %3091 = vrot.lane.b32.xlu0 %v3086, 127
    %v3092 = vpop.permute.xlu0 %3091
    %v3095 = vadd.f32 %v3047, %v3090
    %v3096 = vadd.f32 %v3048, %v3092
    %v3097 = vmul.f32 %v738, %v3030
    %v3098 = vmul.f32 %v738, %v3031
    %3101 = vrot.lane.b32.xlu0 %v3097, 126
    %v3102 = vpop.permute.xlu0 %3101
    %3103 = vrot.lane.b32.xlu0 %v3098, 126
    %v3104 = vpop.permute.xlu0 %3103
    %v3107 = vadd.f32 %v3059, %v3102
    %v3108 = vadd.f32 %v3060, %v3104
    %v3109 = vmul.f32 %v752, %v3030
    %v3110 = vmul.f32 %v752, %v3031
    %3113 = vrot.lane.b32.xlu0 %v3109, 126
    %v3114 = vpop.permute.xlu0 %3113
    %3115 = vrot.lane.b32.xlu0 %v3110, 126
    %v3116 = vpop.permute.xlu0 %3115
    %v3119 = vadd.f32 %v3071, %v3114
    %v3120 = vadd.f32 %v3072, %v3116
    %v3121 = vmul.f32 %v766, %v3030
    %v3122 = vmul.f32 %v766, %v3031
    %3125 = vrot.lane.b32.xlu0 %v3121, 126
    %v3126 = vpop.permute.xlu0 %3125
    %3127 = vrot.lane.b32.xlu0 %v3122, 126
    %v3128 = vpop.permute.xlu0 %3127
    %v3131 = vadd.f32 %v3083, %v3126
    %v3132 = vadd.f32 %v3084, %v3128
    %v3133 = vmul.f32 %v780, %v3030
    %v3134 = vmul.f32 %v780, %v3031
    %3137 = vrot.lane.b32.xlu0 %v3133, 126
    %v3138 = vpop.permute.xlu0 %3137
    %3139 = vrot.lane.b32.xlu0 %v3134, 126
    %v3140 = vpop.permute.xlu0 %3139
    %v3143 = vadd.f32 %v3095, %v3138
    %v3144 = vadd.f32 %v3096, %v3140
    %v3145 = vmul.f32 %v794, %v3030
    %v3146 = vmul.f32 %v794, %v3031
    %v3147 = vmul.f32 %v794, %v3032
    %v3151 = vrot.slane %v3145, 1
    %v3152 = vrot.slane %v3146, 1
    %v3153 = vsel %vm187, %v3151, %v3152
    %v3154 = vrot.slane %v3147, 1
    %v3155 = vsel %vm187, %v3152, %v3154
    %v3158 = vadd.f32 %v3107, %v3153
    %v3159 = vadd.f32 %v3108, %v3155
    %v3160 = vmul.f32 %v811, %v3030
    %v3161 = vmul.f32 %v811, %v3031
    %v3162 = vmul.f32 %v811, %v3032
    %v3166 = vrot.slane %v3160, 1
    %v3167 = vrot.slane %v3161, 1
    %v3168 = vsel %vm187, %v3166, %v3167
    %v3169 = vrot.slane %v3162, 1
    %v3170 = vsel %vm187, %v3167, %v3169
    %v3173 = vadd.f32 %v3119, %v3168
    %v3174 = vadd.f32 %v3120, %v3170
    %v3175 = vmul.f32 %v828, %v3030
    %v3176 = vmul.f32 %v828, %v3031
    %v3177 = vmul.f32 %v828, %v3032
    %v3181 = vrot.slane %v3175, 1
    %v3182 = vrot.slane %v3176, 1
    %v3183 = vsel %vm187, %v3181, %v3182
    %v3184 = vrot.slane %v3177, 1
    %v3185 = vsel %vm187, %v3182, %v3184
    %v3188 = vadd.f32 %v3131, %v3183
    %v3189 = vadd.f32 %v3132, %v3185
    %v3190 = vmul.f32 %v845, %v3030
    %v3191 = vmul.f32 %v845, %v3031
    %v3192 = vmul.f32 %v845, %v3032
    %v3196 = vrot.slane %v3190, 1
    %v3197 = vrot.slane %v3191, 1
    %v3198 = vsel %vm187, %v3196, %v3197
    %v3199 = vrot.slane %v3192, 1
    %v3200 = vsel %vm187, %v3197, %v3199
    %v3203 = vadd.f32 %v3143, %v3198
    %v3204 = vadd.f32 %v3144, %v3200
    %v3205 = vmul.f32 %v862, %v3030
    %v3206 = vmul.f32 %v862, %v3031
    %v3207 = vmul.f32 %v862, %v3032
    %v3211 = vrot.slane %v3205, 1
    %v3212 = vrot.slane %v3206, 1
    %v3213 = vsel %vm187, %v3211, %v3212
    %v3214 = vrot.slane %v3207, 1
    %v3215 = vsel %vm187, %v3212, %v3214
    %3216 = vrot.lane.b32.xlu0 %v3213, 127
    %v3217 = vpop.permute.xlu0 %3216
    %3218 = vrot.lane.b32.xlu0 %v3215, 127
    %v3219 = vpop.permute.xlu0 %3218
    %v3222 = vadd.f32 %v3158, %v3217
    %v3223 = vadd.f32 %v3159, %v3219
    %v3224 = vmul.f32 %v883, %v3030
    %v3225 = vmul.f32 %v883, %v3031
    %v3226 = vmul.f32 %v883, %v3032
    %v3230 = vrot.slane %v3224, 1
    %v3231 = vrot.slane %v3225, 1
    %v3232 = vsel %vm187, %v3230, %v3231
    %v3233 = vrot.slane %v3226, 1
    %v3234 = vsel %vm187, %v3231, %v3233
    %3235 = vrot.lane.b32.xlu0 %v3232, 127
    %v3236 = vpop.permute.xlu0 %3235
    %3237 = vrot.lane.b32.xlu0 %v3234, 127
    %v3238 = vpop.permute.xlu0 %3237
    %v3241 = vadd.f32 %v3173, %v3236
    %v3242 = vadd.f32 %v3174, %v3238
    %v3243 = vmul.f32 %v904, %v3030
    %v3244 = vmul.f32 %v904, %v3031
    %v3245 = vmul.f32 %v904, %v3032
    %v3249 = vrot.slane %v3243, 1
    %v3250 = vrot.slane %v3244, 1
    %v3251 = vsel %vm187, %v3249, %v3250
    %v3252 = vrot.slane %v3245, 1
    %v3253 = vsel %vm187, %v3250, %v3252
    %3254 = vrot.lane.b32.xlu0 %v3251, 127
    %v3255 = vpop.permute.xlu0 %3254
    %3256 = vrot.lane.b32.xlu0 %v3253, 127
    %v3257 = vpop.permute.xlu0 %3256
    %v3260 = vadd.f32 %v3188, %v3255
    %v3261 = vadd.f32 %v3189, %v3257
    %v3262 = vmul.f32 %v925, %v3030
    %v3263 = vmul.f32 %v925, %v3031
    %v3264 = vmul.f32 %v925, %v3032
    %v3268 = vrot.slane %v3262, 1
    %v3269 = vrot.slane %v3263, 1
    %v3270 = vsel %vm187, %v3268, %v3269
    %v3271 = vrot.slane %v3264, 1
    %v3272 = vsel %vm187, %v3269, %v3271
    %3273 = vrot.lane.b32.xlu0 %v3270, 127
    %v3274 = vpop.permute.xlu0 %3273
    %3275 = vrot.lane.b32.xlu0 %v3272, 127
    %v3276 = vpop.permute.xlu0 %3275
    %v3279 = vadd.f32 %v3203, %v3274
    %v3280 = vadd.f32 %v3204, %v3276
    %v3281 = vmul.f32 %v946, %v3030
    %v3282 = vmul.f32 %v946, %v3031
    %v3283 = vmul.f32 %v946, %v3032
    %v3287 = vrot.slane %v3281, 1
    %v3288 = vrot.slane %v3282, 1
    %v3289 = vsel %vm187, %v3287, %v3288
    %v3290 = vrot.slane %v3283, 1
    %v3291 = vsel %vm187, %v3288, %v3290
    %3292 = vrot.lane.b32.xlu0 %v3289, 126
    %v3293 = vpop.permute.xlu0 %3292
    %3294 = vrot.lane.b32.xlu0 %v3291, 126
    %v3295 = vpop.permute.xlu0 %3294
    %v3298 = vadd.f32 %v3222, %v3293
    %v3299 = vadd.f32 %v3223, %v3295
    %v3300 = vmul.f32 %v967, %v3030
    %v3301 = vmul.f32 %v967, %v3031
    %v3302 = vmul.f32 %v967, %v3032
    %v3306 = vrot.slane %v3300, 1
    %v3307 = vrot.slane %v3301, 1
    %v3308 = vsel %vm187, %v3306, %v3307
    %v3309 = vrot.slane %v3302, 1
    %v3310 = vsel %vm187, %v3307, %v3309
    %3311 = vrot.lane.b32.xlu0 %v3308, 126
    %v3312 = vpop.permute.xlu0 %3311
    %3313 = vrot.lane.b32.xlu0 %v3310, 126
    %v3314 = vpop.permute.xlu0 %3313
    %v3317 = vadd.f32 %v3241, %v3312
    %v3318 = vadd.f32 %v3242, %v3314
    %v3319 = vmul.f32 %v988, %v3030
    %v3320 = vmul.f32 %v988, %v3031
    %v3321 = vmul.f32 %v988, %v3032
    %v3325 = vrot.slane %v3319, 1
    %v3326 = vrot.slane %v3320, 1
    %v3327 = vsel %vm187, %v3325, %v3326
    %v3328 = vrot.slane %v3321, 1
    %v3329 = vsel %vm187, %v3326, %v3328
    %3330 = vrot.lane.b32.xlu0 %v3327, 126
    %v3331 = vpop.permute.xlu0 %3330
    %3332 = vrot.lane.b32.xlu0 %v3329, 126
    %v3333 = vpop.permute.xlu0 %3332
    %v3336 = vadd.f32 %v3260, %v3331
    %v3337 = vadd.f32 %v3261, %v3333
    %v3338 = vmul.f32 %v1009, %v3030
    %v3339 = vmul.f32 %v1009, %v3031
    %v3340 = vmul.f32 %v1009, %v3032
    %v3344 = vrot.slane %v3338, 1
    %v3345 = vrot.slane %v3339, 1
    %v3346 = vsel %vm187, %v3344, %v3345
    %v3347 = vrot.slane %v3340, 1
    %v3348 = vsel %vm187, %v3345, %v3347
    %3349 = vrot.lane.b32.xlu0 %v3346, 126
    %v3350 = vpop.permute.xlu0 %3349
    %3351 = vrot.lane.b32.xlu0 %v3348, 126
    %v3352 = vpop.permute.xlu0 %3351
    %v3355 = vadd.f32 %v3279, %v3350
    %v3356 = vadd.f32 %v3280, %v3352
    %v3357 = vmul.f32 %v1030, %v3030
    %v3358 = vmul.f32 %v1030, %v3031
    %v3359 = vmul.f32 %v1030, %v3032
    %v3363 = vrot.slane %v3357, 2
    %v3364 = vrot.slane %v3358, 2
    %v3365 = vsel %vm424, %v3363, %v3364
    %v3366 = vrot.slane %v3359, 2
    %v3367 = vsel %vm424, %v3364, %v3366
    %v3370 = vadd.f32 %v3298, %v3365
    %v3371 = vadd.f32 %v3299, %v3367
    %v3372 = vmul.f32 %v1047, %v3030
    %v3373 = vmul.f32 %v1047, %v3031
    %v3374 = vmul.f32 %v1047, %v3032
    %v3378 = vrot.slane %v3372, 2
    %v3379 = vrot.slane %v3373, 2
    %v3380 = vsel %vm424, %v3378, %v3379
    %v3381 = vrot.slane %v3374, 2
    %v3382 = vsel %vm424, %v3379, %v3381
    %v3385 = vadd.f32 %v3317, %v3380
    %v3386 = vadd.f32 %v3318, %v3382
    %v3387 = vmul.f32 %v1064, %v3030
    %v3388 = vmul.f32 %v1064, %v3031
    %v3389 = vmul.f32 %v1064, %v3032
    %v3393 = vrot.slane %v3387, 2
    %v3394 = vrot.slane %v3388, 2
    %v3395 = vsel %vm424, %v3393, %v3394
    %v3396 = vrot.slane %v3389, 2
    %v3397 = vsel %vm424, %v3394, %v3396
    %v3400 = vadd.f32 %v3336, %v3395
    %v3401 = vadd.f32 %v3337, %v3397
    %v3402 = vmul.f32 %v1081, %v3030
    %v3403 = vmul.f32 %v1081, %v3031
    %v3404 = vmul.f32 %v1081, %v3032
    %v3408 = vrot.slane %v3402, 2
    %v3409 = vrot.slane %v3403, 2
    %v3410 = vsel %vm424, %v3408, %v3409
    %v3411 = vrot.slane %v3404, 2
    %v3412 = vsel %vm424, %v3409, %v3411
    %v3415 = vadd.f32 %v3355, %v3410
    %v3416 = vadd.f32 %v3356, %v3412
    %v3417 = vmul.f32 %v1098, %v3030
    %v3418 = vmul.f32 %v1098, %v3031
    %v3419 = vmul.f32 %v1098, %v3032
    %v3423 = vrot.slane %v3417, 2
    %v3424 = vrot.slane %v3418, 2
    %v3425 = vsel %vm424, %v3423, %v3424
    %v3426 = vrot.slane %v3419, 2
    %v3427 = vsel %vm424, %v3424, %v3426
    %3428 = vrot.lane.b32.xlu0 %v3425, 127
    %v3429 = vpop.permute.xlu0 %3428
    %3430 = vrot.lane.b32.xlu0 %v3427, 127
    %v3431 = vpop.permute.xlu0 %3430
    %v3434 = vadd.f32 %v3370, %v3429
    %v3435 = vadd.f32 %v3371, %v3431
    %v3436 = vmul.f32 %v1119, %v3030
    %v3437 = vmul.f32 %v1119, %v3031
    %v3438 = vmul.f32 %v1119, %v3032
    %v3442 = vrot.slane %v3436, 2
    %v3443 = vrot.slane %v3437, 2
    %v3444 = vsel %vm424, %v3442, %v3443
    %v3445 = vrot.slane %v3438, 2
    %v3446 = vsel %vm424, %v3443, %v3445
    %3447 = vrot.lane.b32.xlu0 %v3444, 127
    %v3448 = vpop.permute.xlu0 %3447
    %3449 = vrot.lane.b32.xlu0 %v3446, 127
    %v3450 = vpop.permute.xlu0 %3449
    %v3453 = vadd.f32 %v3385, %v3448
    %v3454 = vadd.f32 %v3386, %v3450
    %v3455 = vmul.f32 %v1140, %v3030
    %v3456 = vmul.f32 %v1140, %v3031
    %v3457 = vmul.f32 %v1140, %v3032
    %v3461 = vrot.slane %v3455, 2
    %v3462 = vrot.slane %v3456, 2
    %v3463 = vsel %vm424, %v3461, %v3462
    %v3464 = vrot.slane %v3457, 2
    %v3465 = vsel %vm424, %v3462, %v3464
    %3466 = vrot.lane.b32.xlu0 %v3463, 127
    %v3467 = vpop.permute.xlu0 %3466
    %3468 = vrot.lane.b32.xlu0 %v3465, 127
    %v3469 = vpop.permute.xlu0 %3468
    %v3472 = vadd.f32 %v3400, %v3467
    %v3473 = vadd.f32 %v3401, %v3469
    %v3474 = vmul.f32 %v1161, %v3030
    %v3475 = vmul.f32 %v1161, %v3031
    %v3476 = vmul.f32 %v1161, %v3032
    %v3480 = vrot.slane %v3474, 2
    %v3481 = vrot.slane %v3475, 2
    %v3482 = vsel %vm424, %v3480, %v3481
    %v3483 = vrot.slane %v3476, 2
    %v3484 = vsel %vm424, %v3481, %v3483
    %3485 = vrot.lane.b32.xlu0 %v3482, 127
    %v3486 = vpop.permute.xlu0 %3485
    %3487 = vrot.lane.b32.xlu0 %v3484, 127
    %v3488 = vpop.permute.xlu0 %3487
    %v3491 = vadd.f32 %v3415, %v3486
    %v3492 = vadd.f32 %v3416, %v3488
    %v3493 = vmul.f32 %v1182, %v3030
    %v3494 = vmul.f32 %v1182, %v3031
    %v3495 = vmul.f32 %v1182, %v3032
    %v3499 = vrot.slane %v3493, 2
    %v3500 = vrot.slane %v3494, 2
    %v3501 = vsel %vm424, %v3499, %v3500
    %v3502 = vrot.slane %v3495, 2
    %v3503 = vsel %vm424, %v3500, %v3502
    %3504 = vrot.lane.b32.xlu0 %v3501, 126
    %v3505 = vpop.permute.xlu0 %3504
    %3506 = vrot.lane.b32.xlu0 %v3503, 126
    %v3507 = vpop.permute.xlu0 %3506
    %v3510 = vadd.f32 %v3434, %v3505
    %v3511 = vadd.f32 %v3435, %v3507
    %v3512 = vmul.f32 %v1203, %v3030
    %v3513 = vmul.f32 %v1203, %v3031
    %v3514 = vmul.f32 %v1203, %v3032
    %v3518 = vrot.slane %v3512, 2
    %v3519 = vrot.slane %v3513, 2
    %v3520 = vsel %vm424, %v3518, %v3519
    %v3521 = vrot.slane %v3514, 2
    %v3522 = vsel %vm424, %v3519, %v3521
    %3523 = vrot.lane.b32.xlu0 %v3520, 126
    %v3524 = vpop.permute.xlu0 %3523
    %3525 = vrot.lane.b32.xlu0 %v3522, 126
    %v3526 = vpop.permute.xlu0 %3525
    %v3529 = vadd.f32 %v3453, %v3524
    %v3530 = vadd.f32 %v3454, %v3526
    %v3531 = vmul.f32 %v1224, %v3030
    %v3532 = vmul.f32 %v1224, %v3031
    %v3533 = vmul.f32 %v1224, %v3032
    %v3537 = vrot.slane %v3531, 2
    %v3538 = vrot.slane %v3532, 2
    %v3539 = vsel %vm424, %v3537, %v3538
    %v3540 = vrot.slane %v3533, 2
    %v3541 = vsel %vm424, %v3538, %v3540
    %3542 = vrot.lane.b32.xlu0 %v3539, 126
    %v3543 = vpop.permute.xlu0 %3542
    %3544 = vrot.lane.b32.xlu0 %v3541, 126
    %v3545 = vpop.permute.xlu0 %3544
    %v3548 = vadd.f32 %v3472, %v3543
    %v3549 = vadd.f32 %v3473, %v3545
    %v3550 = vmul.f32 %v1245, %v3030
    %v3551 = vmul.f32 %v1245, %v3031
    %v3552 = vmul.f32 %v1245, %v3032
    %v3556 = vrot.slane %v3550, 2
    %v3557 = vrot.slane %v3551, 2
    %v3558 = vsel %vm424, %v3556, %v3557
    %v3559 = vrot.slane %v3552, 2
    %v3560 = vsel %vm424, %v3557, %v3559
    %3561 = vrot.lane.b32.xlu0 %v3558, 126
    %v3562 = vpop.permute.xlu0 %3561
    %3563 = vrot.lane.b32.xlu0 %v3560, 126
    %v3564 = vpop.permute.xlu0 %3563
    %v3567 = vadd.f32 %v3491, %v3562
    %v3568 = vadd.f32 %v3492, %v3564
    %s3569 = scalar_lea.vmem %s0, 144
    %v3570 = vld [vmem:[%s3569] sm:$0xff]
    %v3571 = vld [vmem:[%s3569 + $0x8] sm:$0xff]
    %v3572 = vld [vmem:[%s3569 + $0x10] sm:$0x3]
    %v3573 = vmul.f32 %v1270, %v3570
    %v3574 = vmul.f32 %v1270, %v3571
    %v3575 = vadd.f32 %v3510, %v3573
    %v3576 = vadd.f32 %v3511, %v3574
    %v3577 = vmul.f32 %v1276, %v3570
    %v3578 = vmul.f32 %v1276, %v3571
    %v3579 = vadd.f32 %v3529, %v3577
    %v3580 = vadd.f32 %v3530, %v3578
    %v3581 = vmul.f32 %v1282, %v3570
    %v3582 = vmul.f32 %v1282, %v3571
    %v3583 = vadd.f32 %v3548, %v3581
    %v3584 = vadd.f32 %v3549, %v3582
    %v3585 = vmul.f32 %v1288, %v3570
    %v3586 = vmul.f32 %v1288, %v3571
    %v3587 = vadd.f32 %v3567, %v3585
    %v3588 = vadd.f32 %v3568, %v3586
    %v3589 = vmul.f32 %v1294, %v3570
    %v3590 = vmul.f32 %v1294, %v3571
    %3593 = vrot.lane.b32.xlu0 %v3589, 127
    %v3594 = vpop.permute.xlu0 %3593
    %3595 = vrot.lane.b32.xlu0 %v3590, 127
    %v3596 = vpop.permute.xlu0 %3595
    %v3599 = vadd.f32 %v3575, %v3594
    %v3600 = vadd.f32 %v3576, %v3596
    %v3601 = vmul.f32 %v1308, %v3570
    %v3602 = vmul.f32 %v1308, %v3571
    %3605 = vrot.lane.b32.xlu0 %v3601, 127
    %v3606 = vpop.permute.xlu0 %3605
    %3607 = vrot.lane.b32.xlu0 %v3602, 127
    %v3608 = vpop.permute.xlu0 %3607
    %v3611 = vadd.f32 %v3579, %v3606
    %v3612 = vadd.f32 %v3580, %v3608
    %v3613 = vmul.f32 %v1322, %v3570
    %v3614 = vmul.f32 %v1322, %v3571
    %3617 = vrot.lane.b32.xlu0 %v3613, 127
    %v3618 = vpop.permute.xlu0 %3617
    %3619 = vrot.lane.b32.xlu0 %v3614, 127
    %v3620 = vpop.permute.xlu0 %3619
    %v3623 = vadd.f32 %v3583, %v3618
    %v3624 = vadd.f32 %v3584, %v3620
    %v3625 = vmul.f32 %v1336, %v3570
    %v3626 = vmul.f32 %v1336, %v3571
    %3629 = vrot.lane.b32.xlu0 %v3625, 127
    %v3630 = vpop.permute.xlu0 %3629
    %3631 = vrot.lane.b32.xlu0 %v3626, 127
    %v3632 = vpop.permute.xlu0 %3631
    %v3635 = vadd.f32 %v3587, %v3630
    %v3636 = vadd.f32 %v3588, %v3632
    %v3637 = vmul.f32 %v1350, %v3570
    %v3638 = vmul.f32 %v1350, %v3571
    %3641 = vrot.lane.b32.xlu0 %v3637, 126
    %v3642 = vpop.permute.xlu0 %3641
    %3643 = vrot.lane.b32.xlu0 %v3638, 126
    %v3644 = vpop.permute.xlu0 %3643
    %v3647 = vadd.f32 %v3599, %v3642
    %v3648 = vadd.f32 %v3600, %v3644
    %v3649 = vmul.f32 %v1364, %v3570
    %v3650 = vmul.f32 %v1364, %v3571
    %3653 = vrot.lane.b32.xlu0 %v3649, 126
    %v3654 = vpop.permute.xlu0 %3653
    %3655 = vrot.lane.b32.xlu0 %v3650, 126
    %v3656 = vpop.permute.xlu0 %3655
    %v3659 = vadd.f32 %v3611, %v3654
    %v3660 = vadd.f32 %v3612, %v3656
    %v3661 = vmul.f32 %v1378, %v3570
    %v3662 = vmul.f32 %v1378, %v3571
    %3665 = vrot.lane.b32.xlu0 %v3661, 126
    %v3666 = vpop.permute.xlu0 %3665
    %3667 = vrot.lane.b32.xlu0 %v3662, 126
    %v3668 = vpop.permute.xlu0 %3667
    %v3671 = vadd.f32 %v3623, %v3666
    %v3672 = vadd.f32 %v3624, %v3668
    %v3673 = vmul.f32 %v1392, %v3570
    %v3674 = vmul.f32 %v1392, %v3571
    %3677 = vrot.lane.b32.xlu0 %v3673, 126
    %v3678 = vpop.permute.xlu0 %3677
    %3679 = vrot.lane.b32.xlu0 %v3674, 126
    %v3680 = vpop.permute.xlu0 %3679
    %v3683 = vadd.f32 %v3635, %v3678
    %v3684 = vadd.f32 %v3636, %v3680
    %v3685 = vmul.f32 %v1406, %v3570
    %v3686 = vmul.f32 %v1406, %v3571
    %v3687 = vmul.f32 %v1406, %v3572
    %v3691 = vrot.slane %v3685, 1
    %v3692 = vrot.slane %v3686, 1
    %v3693 = vsel %vm187, %v3691, %v3692
    %v3694 = vrot.slane %v3687, 1
    %v3695 = vsel %vm187, %v3692, %v3694
    %v3698 = vadd.f32 %v3647, %v3693
    %v3699 = vadd.f32 %v3648, %v3695
    %v3700 = vmul.f32 %v1423, %v3570
    %v3701 = vmul.f32 %v1423, %v3571
    %v3702 = vmul.f32 %v1423, %v3572
    %v3706 = vrot.slane %v3700, 1
    %v3707 = vrot.slane %v3701, 1
    %v3708 = vsel %vm187, %v3706, %v3707
    %v3709 = vrot.slane %v3702, 1
    %v3710 = vsel %vm187, %v3707, %v3709
    %v3713 = vadd.f32 %v3659, %v3708
    %v3714 = vadd.f32 %v3660, %v3710
    %v3715 = vmul.f32 %v1440, %v3570
    %v3716 = vmul.f32 %v1440, %v3571
    %v3717 = vmul.f32 %v1440, %v3572
    %v3721 = vrot.slane %v3715, 1
    %v3722 = vrot.slane %v3716, 1
    %v3723 = vsel %vm187, %v3721, %v3722
    %v3724 = vrot.slane %v3717, 1
    %v3725 = vsel %vm187, %v3722, %v3724
    %v3728 = vadd.f32 %v3671, %v3723
    %v3729 = vadd.f32 %v3672, %v3725
    %v3730 = vmul.f32 %v1457, %v3570
    %v3731 = vmul.f32 %v1457, %v3571
    %v3732 = vmul.f32 %v1457, %v3572
    %v3736 = vrot.slane %v3730, 1
    %v3737 = vrot.slane %v3731, 1
    %v3738 = vsel %vm187, %v3736, %v3737
    %v3739 = vrot.slane %v3732, 1
    %v3740 = vsel %vm187, %v3737, %v3739
    %v3743 = vadd.f32 %v3683, %v3738
    %v3744 = vadd.f32 %v3684, %v3740
    %v3745 = vmul.f32 %v1474, %v3570
    %v3746 = vmul.f32 %v1474, %v3571
    %v3747 = vmul.f32 %v1474, %v3572
    %v3751 = vrot.slane %v3745, 1
    %v3752 = vrot.slane %v3746, 1
    %v3753 = vsel %vm187, %v3751, %v3752
    %v3754 = vrot.slane %v3747, 1
    %v3755 = vsel %vm187, %v3752, %v3754
    %3756 = vrot.lane.b32.xlu0 %v3753, 127
    %v3757 = vpop.permute.xlu0 %3756
    %3758 = vrot.lane.b32.xlu0 %v3755, 127
    %v3759 = vpop.permute.xlu0 %3758
    %v3762 = vadd.f32 %v3698, %v3757
    %v3763 = vadd.f32 %v3699, %v3759
    %v3764 = vmul.f32 %v1495, %v3570
    %v3765 = vmul.f32 %v1495, %v3571
    %v3766 = vmul.f32 %v1495, %v3572
    %v3770 = vrot.slane %v3764, 1
    %v3771 = vrot.slane %v3765, 1
    %v3772 = vsel %vm187, %v3770, %v3771
    %v3773 = vrot.slane %v3766, 1
    %v3774 = vsel %vm187, %v3771, %v3773
    %3775 = vrot.lane.b32.xlu0 %v3772, 127
    %v3776 = vpop.permute.xlu0 %3775
    %3777 = vrot.lane.b32.xlu0 %v3774, 127
    %v3778 = vpop.permute.xlu0 %3777
    %v3781 = vadd.f32 %v3713, %v3776
    %v3782 = vadd.f32 %v3714, %v3778
    %v3783 = vmul.f32 %v1516, %v3570
    %v3784 = vmul.f32 %v1516, %v3571
    %v3785 = vmul.f32 %v1516, %v3572
    %v3789 = vrot.slane %v3783, 1
    %v3790 = vrot.slane %v3784, 1
    %v3791 = vsel %vm187, %v3789, %v3790
    %v3792 = vrot.slane %v3785, 1
    %v3793 = vsel %vm187, %v3790, %v3792
    %3794 = vrot.lane.b32.xlu0 %v3791, 127
    %v3795 = vpop.permute.xlu0 %3794
    %3796 = vrot.lane.b32.xlu0 %v3793, 127
    %v3797 = vpop.permute.xlu0 %3796
    %v3800 = vadd.f32 %v3728, %v3795
    %v3801 = vadd.f32 %v3729, %v3797
    %v3802 = vmul.f32 %v1537, %v3570
    %v3803 = vmul.f32 %v1537, %v3571
    %v3804 = vmul.f32 %v1537, %v3572
    %v3808 = vrot.slane %v3802, 1
    %v3809 = vrot.slane %v3803, 1
    %v3810 = vsel %vm187, %v3808, %v3809
    %v3811 = vrot.slane %v3804, 1
    %v3812 = vsel %vm187, %v3809, %v3811
    %3813 = vrot.lane.b32.xlu0 %v3810, 127
    %v3814 = vpop.permute.xlu0 %3813
    %3815 = vrot.lane.b32.xlu0 %v3812, 127
    %v3816 = vpop.permute.xlu0 %3815
    %v3819 = vadd.f32 %v3743, %v3814
    %v3820 = vadd.f32 %v3744, %v3816
    %v3821 = vmul.f32 %v1558, %v3570
    %v3822 = vmul.f32 %v1558, %v3571
    %v3823 = vmul.f32 %v1558, %v3572
    %v3827 = vrot.slane %v3821, 1
    %v3828 = vrot.slane %v3822, 1
    %v3829 = vsel %vm187, %v3827, %v3828
    %v3830 = vrot.slane %v3823, 1
    %v3831 = vsel %vm187, %v3828, %v3830
    %3832 = vrot.lane.b32.xlu0 %v3829, 126
    %v3833 = vpop.permute.xlu0 %3832
    %3834 = vrot.lane.b32.xlu0 %v3831, 126
    %v3835 = vpop.permute.xlu0 %3834
    %v3838 = vadd.f32 %v3762, %v3833
    %v3839 = vadd.f32 %v3763, %v3835
    %v3840 = vmul.f32 %v1579, %v3570
    %v3841 = vmul.f32 %v1579, %v3571
    %v3842 = vmul.f32 %v1579, %v3572
    %v3846 = vrot.slane %v3840, 1
    %v3847 = vrot.slane %v3841, 1
    %v3848 = vsel %vm187, %v3846, %v3847
    %v3849 = vrot.slane %v3842, 1
    %v3850 = vsel %vm187, %v3847, %v3849
    %3851 = vrot.lane.b32.xlu0 %v3848, 126
    %v3852 = vpop.permute.xlu0 %3851
    %3853 = vrot.lane.b32.xlu0 %v3850, 126
    %v3854 = vpop.permute.xlu0 %3853
    %v3857 = vadd.f32 %v3781, %v3852
    %v3858 = vadd.f32 %v3782, %v3854
    %v3859 = vmul.f32 %v1600, %v3570
    %v3860 = vmul.f32 %v1600, %v3571
    %v3861 = vmul.f32 %v1600, %v3572
    %v3865 = vrot.slane %v3859, 1
    %v3866 = vrot.slane %v3860, 1
    %v3867 = vsel %vm187, %v3865, %v3866
    %v3868 = vrot.slane %v3861, 1
    %v3869 = vsel %vm187, %v3866, %v3868
    %3870 = vrot.lane.b32.xlu0 %v3867, 126
    %v3871 = vpop.permute.xlu0 %3870
    %3872 = vrot.lane.b32.xlu0 %v3869, 126
    %v3873 = vpop.permute.xlu0 %3872
    %v3876 = vadd.f32 %v3800, %v3871
    %v3877 = vadd.f32 %v3801, %v3873
    %v3878 = vmul.f32 %v1621, %v3570
    %v3879 = vmul.f32 %v1621, %v3571
    %v3880 = vmul.f32 %v1621, %v3572
    %v3884 = vrot.slane %v3878, 1
    %v3885 = vrot.slane %v3879, 1
    %v3886 = vsel %vm187, %v3884, %v3885
    %v3887 = vrot.slane %v3880, 1
    %v3888 = vsel %vm187, %v3885, %v3887
    %3889 = vrot.lane.b32.xlu0 %v3886, 126
    %v3890 = vpop.permute.xlu0 %3889
    %3891 = vrot.lane.b32.xlu0 %v3888, 126
    %v3892 = vpop.permute.xlu0 %3891
    %v3895 = vadd.f32 %v3819, %v3890
    %v3896 = vadd.f32 %v3820, %v3892
    %v3897 = vmul.f32 %v1642, %v3570
    %v3898 = vmul.f32 %v1642, %v3571
    %v3899 = vmul.f32 %v1642, %v3572
    %v3903 = vrot.slane %v3897, 2
    %v3904 = vrot.slane %v3898, 2
    %v3905 = vsel %vm424, %v3903, %v3904
    %v3906 = vrot.slane %v3899, 2
    %v3907 = vsel %vm424, %v3904, %v3906
    %v3910 = vadd.f32 %v3838, %v3905
    %v3911 = vadd.f32 %v3839, %v3907
    %v3912 = vmul.f32 %v1659, %v3570
    %v3913 = vmul.f32 %v1659, %v3571
    %v3914 = vmul.f32 %v1659, %v3572
    %v3918 = vrot.slane %v3912, 2
    %v3919 = vrot.slane %v3913, 2
    %v3920 = vsel %vm424, %v3918, %v3919
    %v3921 = vrot.slane %v3914, 2
    %v3922 = vsel %vm424, %v3919, %v3921
    %v3925 = vadd.f32 %v3857, %v3920
    %v3926 = vadd.f32 %v3858, %v3922
    %v3927 = vmul.f32 %v1676, %v3570
    %v3928 = vmul.f32 %v1676, %v3571
    %v3929 = vmul.f32 %v1676, %v3572
    %v3933 = vrot.slane %v3927, 2
    %v3934 = vrot.slane %v3928, 2
    %v3935 = vsel %vm424, %v3933, %v3934
    %v3936 = vrot.slane %v3929, 2
    %v3937 = vsel %vm424, %v3934, %v3936
    %v3940 = vadd.f32 %v3876, %v3935
    %v3941 = vadd.f32 %v3877, %v3937
    %v3942 = vmul.f32 %v1693, %v3570
    %v3943 = vmul.f32 %v1693, %v3571
    %v3944 = vmul.f32 %v1693, %v3572
    %v3948 = vrot.slane %v3942, 2
    %v3949 = vrot.slane %v3943, 2
    %v3950 = vsel %vm424, %v3948, %v3949
    %v3951 = vrot.slane %v3944, 2
    %v3952 = vsel %vm424, %v3949, %v3951
    %v3955 = vadd.f32 %v3895, %v3950
    %v3956 = vadd.f32 %v3896, %v3952
    %v3957 = vmul.f32 %v1710, %v3570
    %v3958 = vmul.f32 %v1710, %v3571
    %v3959 = vmul.f32 %v1710, %v3572
    %v3963 = vrot.slane %v3957, 2
    %v3964 = vrot.slane %v3958, 2
    %v3965 = vsel %vm424, %v3963, %v3964
    %v3966 = vrot.slane %v3959, 2
    %v3967 = vsel %vm424, %v3964, %v3966
    %3968 = vrot.lane.b32.xlu0 %v3965, 127
    %v3969 = vpop.permute.xlu0 %3968
    %3970 = vrot.lane.b32.xlu0 %v3967, 127
    %v3971 = vpop.permute.xlu0 %3970
    %v3974 = vadd.f32 %v3910, %v3969
    %v3975 = vadd.f32 %v3911, %v3971
    %v3976 = vmul.f32 %v1731, %v3570
    %v3977 = vmul.f32 %v1731, %v3571
    %v3978 = vmul.f32 %v1731, %v3572
    %v3982 = vrot.slane %v3976, 2
    %v3983 = vrot.slane %v3977, 2
    %v3984 = vsel %vm424, %v3982, %v3983
    %v3985 = vrot.slane %v3978, 2
    %v3986 = vsel %vm424, %v3983, %v3985
    %3987 = vrot.lane.b32.xlu0 %v3984, 127
    %v3988 = vpop.permute.xlu0 %3987
    %3989 = vrot.lane.b32.xlu0 %v3986, 127
    %v3990 = vpop.permute.xlu0 %3989
    %v3993 = vadd.f32 %v3925, %v3988
    %v3994 = vadd.f32 %v3926, %v3990
    %v3995 = vmul.f32 %v1752, %v3570
    %v3996 = vmul.f32 %v1752, %v3571
    %v3997 = vmul.f32 %v1752, %v3572
    %v4001 = vrot.slane %v3995, 2
    %v4002 = vrot.slane %v3996, 2
    %v4003 = vsel %vm424, %v4001, %v4002
    %v4004 = vrot.slane %v3997, 2
    %v4005 = vsel %vm424, %v4002, %v4004
    %4006 = vrot.lane.b32.xlu0 %v4003, 127
    %v4007 = vpop.permute.xlu0 %4006
    %4008 = vrot.lane.b32.xlu0 %v4005, 127
    %v4009 = vpop.permute.xlu0 %4008
    %v4012 = vadd.f32 %v3940, %v4007
    %v4013 = vadd.f32 %v3941, %v4009
    %v4014 = vmul.f32 %v1773, %v3570
    %v4015 = vmul.f32 %v1773, %v3571
    %v4016 = vmul.f32 %v1773, %v3572
    %v4020 = vrot.slane %v4014, 2
    %v4021 = vrot.slane %v4015, 2
    %v4022 = vsel %vm424, %v4020, %v4021
    %v4023 = vrot.slane %v4016, 2
    %v4024 = vsel %vm424, %v4021, %v4023
    %4025 = vrot.lane.b32.xlu0 %v4022, 127
    %v4026 = vpop.permute.xlu0 %4025
    %4027 = vrot.lane.b32.xlu0 %v4024, 127
    %v4028 = vpop.permute.xlu0 %4027
    %v4031 = vadd.f32 %v3955, %v4026
    %v4032 = vadd.f32 %v3956, %v4028
    %v4033 = vmul.f32 %v1794, %v3570
    %v4034 = vmul.f32 %v1794, %v3571
    %v4035 = vmul.f32 %v1794, %v3572
    %v4039 = vrot.slane %v4033, 2
    %v4040 = vrot.slane %v4034, 2
    %v4041 = vsel %vm424, %v4039, %v4040
    %v4042 = vrot.slane %v4035, 2
    %v4043 = vsel %vm424, %v4040, %v4042
    %4044 = vrot.lane.b32.xlu0 %v4041, 126
    %v4045 = vpop.permute.xlu0 %4044
    %4046 = vrot.lane.b32.xlu0 %v4043, 126
    %v4047 = vpop.permute.xlu0 %4046
    %v4050 = vadd.f32 %v3974, %v4045
    %v4051 = vadd.f32 %v3975, %v4047
    %v4052 = vmul.f32 %v1815, %v3570
    %v4053 = vmul.f32 %v1815, %v3571
    %v4054 = vmul.f32 %v1815, %v3572
    %v4058 = vrot.slane %v4052, 2
    %v4059 = vrot.slane %v4053, 2
    %v4060 = vsel %vm424, %v4058, %v4059
    %v4061 = vrot.slane %v4054, 2
    %v4062 = vsel %vm424, %v4059, %v4061
    %4063 = vrot.lane.b32.xlu0 %v4060, 126
    %v4064 = vpop.permute.xlu0 %4063
    %4065 = vrot.lane.b32.xlu0 %v4062, 126
    %v4066 = vpop.permute.xlu0 %4065
    %v4069 = vadd.f32 %v3993, %v4064
    %v4070 = vadd.f32 %v3994, %v4066
    %v4071 = vmul.f32 %v1836, %v3570
    %v4072 = vmul.f32 %v1836, %v3571
    %v4073 = vmul.f32 %v1836, %v3572
    %v4077 = vrot.slane %v4071, 2
    %v4078 = vrot.slane %v4072, 2
    %v4079 = vsel %vm424, %v4077, %v4078
    %v4080 = vrot.slane %v4073, 2
    %v4081 = vsel %vm424, %v4078, %v4080
    %4082 = vrot.lane.b32.xlu0 %v4079, 126
    %v4083 = vpop.permute.xlu0 %4082
    %4084 = vrot.lane.b32.xlu0 %v4081, 126
    %v4085 = vpop.permute.xlu0 %4084
    %v4088 = vadd.f32 %v4012, %v4083
    %v4089 = vadd.f32 %v4013, %v4085
    %v4090 = vmul.f32 %v1857, %v3570
    %v4091 = vmul.f32 %v1857, %v3571
    %v4092 = vmul.f32 %v1857, %v3572
    %v4096 = vrot.slane %v4090, 2
    %v4097 = vrot.slane %v4091, 2
    %v4098 = vsel %vm424, %v4096, %v4097
    %v4099 = vrot.slane %v4092, 2
    %v4100 = vsel %vm424, %v4097, %v4099
    %4101 = vrot.lane.b32.xlu0 %v4098, 126
    %v4102 = vpop.permute.xlu0 %4101
    %4103 = vrot.lane.b32.xlu0 %v4100, 126
    %v4104 = vpop.permute.xlu0 %4103
    %v4107 = vadd.f32 %v4031, %v4102
    %v4108 = vadd.f32 %v4032, %v4104
    %s4109 = scalar_lea.vmem %s0, 168
    %v4110 = vld [vmem:[%s4109] sm:$0xff]
    %v4111 = vld [vmem:[%s4109 + $0x8] sm:$0xff]
    %v4112 = vld [vmem:[%s4109 + $0x10] sm:$0x3]
    %v4113 = vmul.f32 %v1882, %v4110
    %v4114 = vmul.f32 %v1882, %v4111
    %v4115 = vadd.f32 %v4050, %v4113
    %v4116 = vadd.f32 %v4051, %v4114
    %v4117 = vmul.f32 %v1888, %v4110
    %v4118 = vmul.f32 %v1888, %v4111
    %v4119 = vadd.f32 %v4069, %v4117
    %v4120 = vadd.f32 %v4070, %v4118
    %v4121 = vmul.f32 %v1894, %v4110
    %v4122 = vmul.f32 %v1894, %v4111
    %v4123 = vadd.f32 %v4088, %v4121
    %v4124 = vadd.f32 %v4089, %v4122
    %v4125 = vmul.f32 %v1900, %v4110
    %v4126 = vmul.f32 %v1900, %v4111
    %v4127 = vadd.f32 %v4107, %v4125
    %v4128 = vadd.f32 %v4108, %v4126
    %v4129 = vmul.f32 %v1906, %v4110
    %v4130 = vmul.f32 %v1906, %v4111
    %4133 = vrot.lane.b32.xlu0 %v4129, 127
    %v4134 = vpop.permute.xlu0 %4133
    %4135 = vrot.lane.b32.xlu0 %v4130, 127
    %v4136 = vpop.permute.xlu0 %4135
    %v4139 = vadd.f32 %v4115, %v4134
    %v4140 = vadd.f32 %v4116, %v4136
    %v4141 = vmul.f32 %v1920, %v4110
    %v4142 = vmul.f32 %v1920, %v4111
    %4145 = vrot.lane.b32.xlu0 %v4141, 127
    %v4146 = vpop.permute.xlu0 %4145
    %4147 = vrot.lane.b32.xlu0 %v4142, 127
    %v4148 = vpop.permute.xlu0 %4147
    %v4151 = vadd.f32 %v4119, %v4146
    %v4152 = vadd.f32 %v4120, %v4148
    %v4153 = vmul.f32 %v1934, %v4110
    %v4154 = vmul.f32 %v1934, %v4111
    %4157 = vrot.lane.b32.xlu0 %v4153, 127
    %v4158 = vpop.permute.xlu0 %4157
    %4159 = vrot.lane.b32.xlu0 %v4154, 127
    %v4160 = vpop.permute.xlu0 %4159
    %v4163 = vadd.f32 %v4123, %v4158
    %v4164 = vadd.f32 %v4124, %v4160
    %v4165 = vmul.f32 %v1948, %v4110
    %v4166 = vmul.f32 %v1948, %v4111
    %4169 = vrot.lane.b32.xlu0 %v4165, 127
    %v4170 = vpop.permute.xlu0 %4169
    %4171 = vrot.lane.b32.xlu0 %v4166, 127
    %v4172 = vpop.permute.xlu0 %4171
    %v4175 = vadd.f32 %v4127, %v4170
    %v4176 = vadd.f32 %v4128, %v4172
    %v4177 = vmul.f32 %v1962, %v4110
    %v4178 = vmul.f32 %v1962, %v4111
    %4181 = vrot.lane.b32.xlu0 %v4177, 126
    %v4182 = vpop.permute.xlu0 %4181
    %4183 = vrot.lane.b32.xlu0 %v4178, 126
    %v4184 = vpop.permute.xlu0 %4183
    %v4187 = vadd.f32 %v4139, %v4182
    %v4188 = vadd.f32 %v4140, %v4184
    %v4189 = vmul.f32 %v1976, %v4110
    %v4190 = vmul.f32 %v1976, %v4111
    %4193 = vrot.lane.b32.xlu0 %v4189, 126
    %v4194 = vpop.permute.xlu0 %4193
    %4195 = vrot.lane.b32.xlu0 %v4190, 126
    %v4196 = vpop.permute.xlu0 %4195
    %v4199 = vadd.f32 %v4151, %v4194
    %v4200 = vadd.f32 %v4152, %v4196
    %v4201 = vmul.f32 %v1990, %v4110
    %v4202 = vmul.f32 %v1990, %v4111
    %4205 = vrot.lane.b32.xlu0 %v4201, 126
    %v4206 = vpop.permute.xlu0 %4205
    %4207 = vrot.lane.b32.xlu0 %v4202, 126
    %v4208 = vpop.permute.xlu0 %4207
    %v4211 = vadd.f32 %v4163, %v4206
    %v4212 = vadd.f32 %v4164, %v4208
    %v4213 = vmul.f32 %v2004, %v4110
    %v4214 = vmul.f32 %v2004, %v4111
    %4217 = vrot.lane.b32.xlu0 %v4213, 126
    %v4218 = vpop.permute.xlu0 %4217
    %4219 = vrot.lane.b32.xlu0 %v4214, 126
    %v4220 = vpop.permute.xlu0 %4219
    %v4223 = vadd.f32 %v4175, %v4218
    %v4224 = vadd.f32 %v4176, %v4220
    %v4225 = vmul.f32 %v2018, %v4110
    %v4226 = vmul.f32 %v2018, %v4111
    %v4227 = vmul.f32 %v2018, %v4112
    %v4231 = vrot.slane %v4225, 1
    %v4232 = vrot.slane %v4226, 1
    %v4233 = vsel %vm187, %v4231, %v4232
    %v4234 = vrot.slane %v4227, 1
    %v4235 = vsel %vm187, %v4232, %v4234
    %v4238 = vadd.f32 %v4187, %v4233
    %v4239 = vadd.f32 %v4188, %v4235
    %v4240 = vmul.f32 %v2035, %v4110
    %v4241 = vmul.f32 %v2035, %v4111
    %v4242 = vmul.f32 %v2035, %v4112
    %v4246 = vrot.slane %v4240, 1
    %v4247 = vrot.slane %v4241, 1
    %v4248 = vsel %vm187, %v4246, %v4247
    %v4249 = vrot.slane %v4242, 1
    %v4250 = vsel %vm187, %v4247, %v4249
    %v4253 = vadd.f32 %v4199, %v4248
    %v4254 = vadd.f32 %v4200, %v4250
    %v4255 = vmul.f32 %v2052, %v4110
    %v4256 = vmul.f32 %v2052, %v4111
    %v4257 = vmul.f32 %v2052, %v4112
    %v4261 = vrot.slane %v4255, 1
    %v4262 = vrot.slane %v4256, 1
    %v4263 = vsel %vm187, %v4261, %v4262
    %v4264 = vrot.slane %v4257, 1
    %v4265 = vsel %vm187, %v4262, %v4264
    %v4268 = vadd.f32 %v4211, %v4263
    %v4269 = vadd.f32 %v4212, %v4265
    %v4270 = vmul.f32 %v2069, %v4110
    %v4271 = vmul.f32 %v2069, %v4111
    %v4272 = vmul.f32 %v2069, %v4112
    %v4276 = vrot.slane %v4270, 1
    %v4277 = vrot.slane %v4271, 1
    %v4278 = vsel %vm187, %v4276, %v4277
    %v4279 = vrot.slane %v4272, 1
    %v4280 = vsel %vm187, %v4277, %v4279
    %v4283 = vadd.f32 %v4223, %v4278
    %v4284 = vadd.f32 %v4224, %v4280
    %v4285 = vmul.f32 %v2086, %v4110
    %v4286 = vmul.f32 %v2086, %v4111
    %v4287 = vmul.f32 %v2086, %v4112
    %v4291 = vrot.slane %v4285, 1
    %v4292 = vrot.slane %v4286, 1
    %v4293 = vsel %vm187, %v4291, %v4292
    %v4294 = vrot.slane %v4287, 1
    %v4295 = vsel %vm187, %v4292, %v4294
    %4296 = vrot.lane.b32.xlu0 %v4293, 127
    %v4297 = vpop.permute.xlu0 %4296
    %4298 = vrot.lane.b32.xlu0 %v4295, 127
    %v4299 = vpop.permute.xlu0 %4298
    %v4302 = vadd.f32 %v4238, %v4297
    %v4303 = vadd.f32 %v4239, %v4299
    %v4304 = vmul.f32 %v2107, %v4110
    %v4305 = vmul.f32 %v2107, %v4111
    %v4306 = vmul.f32 %v2107, %v4112
    %v4310 = vrot.slane %v4304, 1
    %v4311 = vrot.slane %v4305, 1
    %v4312 = vsel %vm187, %v4310, %v4311
    %v4313 = vrot.slane %v4306, 1
    %v4314 = vsel %vm187, %v4311, %v4313
    %4315 = vrot.lane.b32.xlu0 %v4312, 127
    %v4316 = vpop.permute.xlu0 %4315
    %4317 = vrot.lane.b32.xlu0 %v4314, 127
    %v4318 = vpop.permute.xlu0 %4317
    %v4321 = vadd.f32 %v4253, %v4316
    %v4322 = vadd.f32 %v4254, %v4318
    %v4323 = vmul.f32 %v2128, %v4110
    %v4324 = vmul.f32 %v2128, %v4111
    %v4325 = vmul.f32 %v2128, %v4112
    %v4329 = vrot.slane %v4323, 1
    %v4330 = vrot.slane %v4324, 1
    %v4331 = vsel %vm187, %v4329, %v4330
    %v4332 = vrot.slane %v4325, 1
    %v4333 = vsel %vm187, %v4330, %v4332
    %4334 = vrot.lane.b32.xlu0 %v4331, 127
    %v4335 = vpop.permute.xlu0 %4334
    %4336 = vrot.lane.b32.xlu0 %v4333, 127
    %v4337 = vpop.permute.xlu0 %4336
    %v4340 = vadd.f32 %v4268, %v4335
    %v4341 = vadd.f32 %v4269, %v4337
    %v4342 = vmul.f32 %v2149, %v4110
    %v4343 = vmul.f32 %v2149, %v4111
    %v4344 = vmul.f32 %v2149, %v4112
    %v4348 = vrot.slane %v4342, 1
    %v4349 = vrot.slane %v4343, 1
    %v4350 = vsel %vm187, %v4348, %v4349
    %v4351 = vrot.slane %v4344, 1
    %v4352 = vsel %vm187, %v4349, %v4351
    %4353 = vrot.lane.b32.xlu0 %v4350, 127
    %v4354 = vpop.permute.xlu0 %4353
    %4355 = vrot.lane.b32.xlu0 %v4352, 127
    %v4356 = vpop.permute.xlu0 %4355
    %v4359 = vadd.f32 %v4283, %v4354
    %v4360 = vadd.f32 %v4284, %v4356
    %v4361 = vmul.f32 %v2170, %v4110
    %v4362 = vmul.f32 %v2170, %v4111
    %v4363 = vmul.f32 %v2170, %v4112
    %v4367 = vrot.slane %v4361, 1
    %v4368 = vrot.slane %v4362, 1
    %v4369 = vsel %vm187, %v4367, %v4368
    %v4370 = vrot.slane %v4363, 1
    %v4371 = vsel %vm187, %v4368, %v4370
    %4372 = vrot.lane.b32.xlu0 %v4369, 126
    %v4373 = vpop.permute.xlu0 %4372
    %4374 = vrot.lane.b32.xlu0 %v4371, 126
    %v4375 = vpop.permute.xlu0 %4374
    %v4378 = vadd.f32 %v4302, %v4373
    %v4379 = vadd.f32 %v4303, %v4375
    %v4380 = vmul.f32 %v2191, %v4110
    %v4381 = vmul.f32 %v2191, %v4111
    %v4382 = vmul.f32 %v2191, %v4112
    %v4386 = vrot.slane %v4380, 1
    %v4387 = vrot.slane %v4381, 1
    %v4388 = vsel %vm187, %v4386, %v4387
    %v4389 = vrot.slane %v4382, 1
    %v4390 = vsel %vm187, %v4387, %v4389
    %4391 = vrot.lane.b32.xlu0 %v4388, 126
    %v4392 = vpop.permute.xlu0 %4391
    %4393 = vrot.lane.b32.xlu0 %v4390, 126
    %v4394 = vpop.permute.xlu0 %4393
    %v4397 = vadd.f32 %v4321, %v4392
    %v4398 = vadd.f32 %v4322, %v4394
    %v4399 = vmul.f32 %v2212, %v4110
    %v4400 = vmul.f32 %v2212, %v4111
    %v4401 = vmul.f32 %v2212, %v4112
    %v4405 = vrot.slane %v4399, 1
    %v4406 = vrot.slane %v4400, 1
    %v4407 = vsel %vm187, %v4405, %v4406
    %v4408 = vrot.slane %v4401, 1
    %v4409 = vsel %vm187, %v4406, %v4408
    %4410 = vrot.lane.b32.xlu0 %v4407, 126
    %v4411 = vpop.permute.xlu0 %4410
    %4412 = vrot.lane.b32.xlu0 %v4409, 126
    %v4413 = vpop.permute.xlu0 %4412
    %v4416 = vadd.f32 %v4340, %v4411
    %v4417 = vadd.f32 %v4341, %v4413
    %v4418 = vmul.f32 %v2233, %v4110
    %v4419 = vmul.f32 %v2233, %v4111
    %v4420 = vmul.f32 %v2233, %v4112
    %v4424 = vrot.slane %v4418, 1
    %v4425 = vrot.slane %v4419, 1
    %v4426 = vsel %vm187, %v4424, %v4425
    %v4427 = vrot.slane %v4420, 1
    %v4428 = vsel %vm187, %v4425, %v4427
    %4429 = vrot.lane.b32.xlu0 %v4426, 126
    %v4430 = vpop.permute.xlu0 %4429
    %4431 = vrot.lane.b32.xlu0 %v4428, 126
    %v4432 = vpop.permute.xlu0 %4431
    %v4435 = vadd.f32 %v4359, %v4430
    %v4436 = vadd.f32 %v4360, %v4432
    %v4437 = vmul.f32 %v2254, %v4110
    %v4438 = vmul.f32 %v2254, %v4111
    %v4439 = vmul.f32 %v2254, %v4112
    %v4443 = vrot.slane %v4437, 2
    %v4444 = vrot.slane %v4438, 2
    %v4445 = vsel %vm424, %v4443, %v4444
    %v4446 = vrot.slane %v4439, 2
    %v4447 = vsel %vm424, %v4444, %v4446
    %v4450 = vadd.f32 %v4378, %v4445
    %v4451 = vadd.f32 %v4379, %v4447
    %v4452 = vmul.f32 %v2271, %v4110
    %v4453 = vmul.f32 %v2271, %v4111
    %v4454 = vmul.f32 %v2271, %v4112
    %v4458 = vrot.slane %v4452, 2
    %v4459 = vrot.slane %v4453, 2
    %v4460 = vsel %vm424, %v4458, %v4459
    %v4461 = vrot.slane %v4454, 2
    %v4462 = vsel %vm424, %v4459, %v4461
    %v4465 = vadd.f32 %v4397, %v4460
    %v4466 = vadd.f32 %v4398, %v4462
    %v4467 = vmul.f32 %v2288, %v4110
    %v4468 = vmul.f32 %v2288, %v4111
    %v4469 = vmul.f32 %v2288, %v4112
    %v4473 = vrot.slane %v4467, 2
    %v4474 = vrot.slane %v4468, 2
    %v4475 = vsel %vm424, %v4473, %v4474
    %v4476 = vrot.slane %v4469, 2
    %v4477 = vsel %vm424, %v4474, %v4476
    %v4480 = vadd.f32 %v4416, %v4475
    %v4481 = vadd.f32 %v4417, %v4477
    %v4482 = vmul.f32 %v2305, %v4110
    %v4483 = vmul.f32 %v2305, %v4111
    %v4484 = vmul.f32 %v2305, %v4112
    %v4488 = vrot.slane %v4482, 2
    %v4489 = vrot.slane %v4483, 2
    %v4490 = vsel %vm424, %v4488, %v4489
    %v4491 = vrot.slane %v4484, 2
    %v4492 = vsel %vm424, %v4489, %v4491
    %v4495 = vadd.f32 %v4435, %v4490
    %v4496 = vadd.f32 %v4436, %v4492
    %v4497 = vmul.f32 %v2322, %v4110
    %v4498 = vmul.f32 %v2322, %v4111
    %v4499 = vmul.f32 %v2322, %v4112
    %v4503 = vrot.slane %v4497, 2
    %v4504 = vrot.slane %v4498, 2
    %v4505 = vsel %vm424, %v4503, %v4504
    %v4506 = vrot.slane %v4499, 2
    %v4507 = vsel %vm424, %v4504, %v4506
    %4508 = vrot.lane.b32.xlu0 %v4505, 127
    %v4509 = vpop.permute.xlu0 %4508
    %4510 = vrot.lane.b32.xlu0 %v4507, 127
    %v4511 = vpop.permute.xlu0 %4510
    %v4514 = vadd.f32 %v4450, %v4509
    %v4515 = vadd.f32 %v4451, %v4511
    %v4516 = vmul.f32 %v2343, %v4110
    %v4517 = vmul.f32 %v2343, %v4111
    %v4518 = vmul.f32 %v2343, %v4112
    %v4522 = vrot.slane %v4516, 2
    %v4523 = vrot.slane %v4517, 2
    %v4524 = vsel %vm424, %v4522, %v4523
    %v4525 = vrot.slane %v4518, 2
    %v4526 = vsel %vm424, %v4523, %v4525
    %4527 = vrot.lane.b32.xlu0 %v4524, 127
    %v4528 = vpop.permute.xlu0 %4527
    %4529 = vrot.lane.b32.xlu0 %v4526, 127
    %v4530 = vpop.permute.xlu0 %4529
    %v4533 = vadd.f32 %v4465, %v4528
    %v4534 = vadd.f32 %v4466, %v4530
    %v4535 = vmul.f32 %v2364, %v4110
    %v4536 = vmul.f32 %v2364, %v4111
    %v4537 = vmul.f32 %v2364, %v4112
    %v4541 = vrot.slane %v4535, 2
    %v4542 = vrot.slane %v4536, 2
    %v4543 = vsel %vm424, %v4541, %v4542
    %v4544 = vrot.slane %v4537, 2
    %v4545 = vsel %vm424, %v4542, %v4544
    %4546 = vrot.lane.b32.xlu0 %v4543, 127
    %v4547 = vpop.permute.xlu0 %4546
    %4548 = vrot.lane.b32.xlu0 %v4545, 127
    %v4549 = vpop.permute.xlu0 %4548
    %v4552 = vadd.f32 %v4480, %v4547
    %v4553 = vadd.f32 %v4481, %v4549
    %v4554 = vmul.f32 %v2385, %v4110
    %v4555 = vmul.f32 %v2385, %v4111
    %v4556 = vmul.f32 %v2385, %v4112
    %v4560 = vrot.slane %v4554, 2
    %v4561 = vrot.slane %v4555, 2
    %v4562 = vsel %vm424, %v4560, %v4561
    %v4563 = vrot.slane %v4556, 2
    %v4564 = vsel %vm424, %v4561, %v4563
    %4565 = vrot.lane.b32.xlu0 %v4562, 127
    %v4566 = vpop.permute.xlu0 %4565
    %4567 = vrot.lane.b32.xlu0 %v4564, 127
    %v4568 = vpop.permute.xlu0 %4567
    %v4571 = vadd.f32 %v4495, %v4566
    %v4572 = vadd.f32 %v4496, %v4568
    %v4573 = vmul.f32 %v2406, %v4110
    %v4574 = vmul.f32 %v2406, %v4111
    %v4575 = vmul.f32 %v2406, %v4112
    %v4579 = vrot.slane %v4573, 2
    %v4580 = vrot.slane %v4574, 2
    %v4581 = vsel %vm424, %v4579, %v4580
    %v4582 = vrot.slane %v4575, 2
    %v4583 = vsel %vm424, %v4580, %v4582
    %4584 = vrot.lane.b32.xlu0 %v4581, 126
    %v4585 = vpop.permute.xlu0 %4584
    %4586 = vrot.lane.b32.xlu0 %v4583, 126
    %v4587 = vpop.permute.xlu0 %4586
    %v4590 = vadd.f32 %v4514, %v4585
    %v4591 = vadd.f32 %v4515, %v4587
    %v4592 = vmul.f32 %v2427, %v4110
    %v4593 = vmul.f32 %v2427, %v4111
    %v4594 = vmul.f32 %v2427, %v4112
    %v4598 = vrot.slane %v4592, 2
    %v4599 = vrot.slane %v4593, 2
    %v4600 = vsel %vm424, %v4598, %v4599
    %v4601 = vrot.slane %v4594, 2
    %v4602 = vsel %vm424, %v4599, %v4601
    %4603 = vrot.lane.b32.xlu0 %v4600, 126
    %v4604 = vpop.permute.xlu0 %4603
    %4605 = vrot.lane.b32.xlu0 %v4602, 126
    %v4606 = vpop.permute.xlu0 %4605
    %v4609 = vadd.f32 %v4533, %v4604
    %v4610 = vadd.f32 %v4534, %v4606
    %v4611 = vmul.f32 %v2448, %v4110
    %v4612 = vmul.f32 %v2448, %v4111
    %v4613 = vmul.f32 %v2448, %v4112
    %v4617 = vrot.slane %v4611, 2
    %v4618 = vrot.slane %v4612, 2
    %v4619 = vsel %vm424, %v4617, %v4618
    %v4620 = vrot.slane %v4613, 2
    %v4621 = vsel %vm424, %v4618, %v4620
    %4622 = vrot.lane.b32.xlu0 %v4619, 126
    %v4623 = vpop.permute.xlu0 %4622
    %4624 = vrot.lane.b32.xlu0 %v4621, 126
    %v4625 = vpop.permute.xlu0 %4624
    %v4628 = vadd.f32 %v4552, %v4623
    %v4629 = vadd.f32 %v4553, %v4625
    %v4630 = vmul.f32 %v2469, %v4110
    %v4631 = vmul.f32 %v2469, %v4111
    %v4632 = vmul.f32 %v2469, %v4112
    %v4636 = vrot.slane %v4630, 2
    %v4637 = vrot.slane %v4631, 2
    %v4638 = vsel %vm424, %v4636, %v4637
    %v4639 = vrot.slane %v4632, 2
    %v4640 = vsel %vm424, %v4637, %v4639
    %4641 = vrot.lane.b32.xlu0 %v4638, 126
    %v4642 = vpop.permute.xlu0 %4641
    %4643 = vrot.lane.b32.xlu0 %v4640, 126
    %v4644 = vpop.permute.xlu0 %4643
    %v4647 = vadd.f32 %v4571, %v4642
    %v4648 = vadd.f32 %v4572, %v4644
    %s4649 = sld [smem:[#allocation5]]
    %v4650 = vstv %s4649
    %v4651 = vadd.f32 %v2424, %v4650
    %v4652 = vadd.f32 %v2425, %v4650
    %v4653 = vadd.f32 %v4590, %v4650
    %v4654 = vadd.f32 %v4591, %v4650
    %vm4655 = vcmask 130048
    %v4656 = vsel %vm4655, %v4651, 0.0
    %4657 = vadd.xlane.f32.xlu0 %v4656
    %v4658 = vpop.xlane.xlu0 %4657
    %v4659 = vsel %vm4655, %v4652, 0.0
    %4660 = vadd.xlane.f32.xlu0 %v4659
    %v4661 = vpop.xlane.xlu0 %4660
    %v4662 = vadd.f32 %v4658, %v4661
    %v4663 = vrot.slane %v4662, 4
    %v4664 = vadd.f32 %v4662, %v4663
    %v4665 = vrot.slane %v4664, 2
    %v4666 = vadd.f32 %v4664, %v4665
    %v4667 = vrot.slane %v4666, 1
    %v4668 = vadd.f32 %v4666, %v4667
    %v4669 = vadd.f32 %v4668, 0.0
    %v4670 = vsel %vm4655, %v4653, 0.0
    %4671 = vadd.xlane.f32.xlu0 %v4670
    %v4672 = vpop.xlane.xlu0 %4671
    %v4673 = vsel %vm4655, %v4654, 0.0
    %4674 = vadd.xlane.f32.xlu0 %v4673
    %v4675 = vpop.xlane.xlu0 %4674
    %v4676 = vadd.f32 %v4672, %v4675
    %v4677 = vrot.slane %v4676, 4
    %v4678 = vadd.f32 %v4676, %v4677
    %v4679 = vrot.slane %v4678, 2
    %v4680 = vadd.f32 %v4678, %v4679
    %v4681 = vrot.slane %v4680, 1
    %v4682 = vadd.f32 %v4680, %v4681
    %v4683 = vadd.f32 %v4669, %v4682
    %v4684 = vmul.f32 %v4683, 0.001953125
    %v4685 = vsub.f32 %v4651, %v4684
    %v4686 = vsub.f32 %v4652, %v4684
    %v4687 = vsub.f32 %v4653, %v4684
    %v4688 = vsub.f32 %v4654, %v4684
    %v4689 = vmul.f32 %v4685, %v4685
    %v4690 = vmul.f32 %v4686, %v4686
    %v4691 = vsel %vm4655, %v4689, 0.0
    %4692 = vadd.xlane.f32.xlu0 %v4691
    %v4693 = vpop.xlane.xlu0 %4692
    %v4694 = vsel %vm4655, %v4690, 0.0
    %4695 = vadd.xlane.f32.xlu0 %v4694
    %v4696 = vpop.xlane.xlu0 %4695
    %v4697 = vadd.f32 %v4693, %v4696
    %v4698 = vrot.slane %v4697, 4
    %v4699 = vadd.f32 %v4697, %v4698
    %v4700 = vrot.slane %v4699, 2
    %v4701 = vadd.f32 %v4699, %v4700
    %v4702 = vrot.slane %v4701, 1
    %v4703 = vadd.f32 %v4701, %v4702
    %v4704 = vadd.f32 %v4703, 0.0
    %v4705 = vmul.f32 %v4687, %v4687
    %v4706 = vmul.f32 %v4688, %v4688
    %v4707 = vsel %vm4655, %v4705, 0.0
    %4708 = vadd.xlane.f32.xlu0 %v4707
    %v4709 = vpop.xlane.xlu0 %4708
    %v4710 = vsel %vm4655, %v4706, 0.0
    %4711 = vadd.xlane.f32.xlu0 %v4710
    %v4712 = vpop.xlane.xlu0 %4711
    %v4713 = vadd.f32 %v4709, %v4712
    %v4714 = vrot.slane %v4713, 4
    %v4715 = vadd.f32 %v4713, %v4714
    %v4716 = vrot.slane %v4715, 2
    %v4717 = vadd.f32 %v4715, %v4716
    %v4718 = vrot.slane %v4717, 1
    %v4719 = vadd.f32 %v4717, %v4718
    %v4720 = vadd.f32 %v4704, %v4719
    %v4721 = vmul.f32 %v4720, 0.001953125
    %v4722 = vadd.f32 %v4721, 1e-05
    %v4723 = vrsqrt.pop %v4722
    %v4724 = vmul.f32 %v4685, %v4723
    %v4725 = vmul.f32 %v4686, %v4723
    %v4726 = vmax.f32 %v4724, 0.0
    %v4727 = vmax.f32 %v4725, 0.0
    %4728 = vst.msk [vmem:[#allocation7] sm:$0xff] %vm4655, %v4726
    %4729 = vst.msk [vmem:[#allocation7 + $0x8] sm:$0xff] %vm4655, %v4727
    %v4730 = vmul.f32 %v4687, %v4723
    %v4731 = vmul.f32 %v4688, %v4723
    %v4732 = vmax.f32 %v4730, 0.0
    %v4733 = vmax.f32 %v4731, 0.0
    %s4734 = scalar_lea.vmem [#allocation7], 64
    %4735 = vst.msk [vmem:[%s4734] sm:$0xff] %vm4655, %v4732
    %4736 = vst.msk [vmem:[%s4734 + $0x8] sm:$0xff] %vm4655, %v4733
    %s4737 = sld [smem:[#allocation5 + $0x1]]
    %v4738 = vstv %s4737
    %v4739 = vadd.f32 %v2445, %v4738
    %v4740 = vadd.f32 %v2446, %v4738
    %v4741 = vadd.f32 %v4609, %v4738
    %v4742 = vadd.f32 %v4610, %v4738
    %v4743 = vsel %vm4655, %v4739, 0.0
    %4744 = vadd.xlane.f32.xlu0 %v4743
    %v4745 = vpop.xlane.xlu0 %4744
    %v4746 = vsel %vm4655, %v4740, 0.0
    %4747 = vadd.xlane.f32.xlu0 %v4746
    %v4748 = vpop.xlane.xlu0 %4747
    %v4749 = vadd.f32 %v4745, %v4748
    %v4750 = vrot.slane %v4749, 4
    %v4751 = vadd.f32 %v4749, %v4750
    %v4752 = vrot.slane %v4751, 2
    %v4753 = vadd.f32 %v4751, %v4752
    %v4754 = vrot.slane %v4753, 1
    %v4755 = vadd.f32 %v4753, %v4754
    %v4756 = vadd.f32 %v4755, 0.0
    %v4757 = vsel %vm4655, %v4741, 0.0
    %4758 = vadd.xlane.f32.xlu0 %v4757
    %v4759 = vpop.xlane.xlu0 %4758
    %v4760 = vsel %vm4655, %v4742, 0.0
    %4761 = vadd.xlane.f32.xlu0 %v4760
    %v4762 = vpop.xlane.xlu0 %4761
    %v4763 = vadd.f32 %v4759, %v4762
    %v4764 = vrot.slane %v4763, 4
    %v4765 = vadd.f32 %v4763, %v4764
    %v4766 = vrot.slane %v4765, 2
    %v4767 = vadd.f32 %v4765, %v4766
    %v4768 = vrot.slane %v4767, 1
    %v4769 = vadd.f32 %v4767, %v4768
    %v4770 = vadd.f32 %v4756, %v4769
    %v4771 = vmul.f32 %v4770, 0.001953125
    %v4772 = vsub.f32 %v4739, %v4771
    %v4773 = vsub.f32 %v4740, %v4771
    %v4774 = vsub.f32 %v4741, %v4771
    %v4775 = vsub.f32 %v4742, %v4771
    %v4776 = vmul.f32 %v4772, %v4772
    %v4777 = vmul.f32 %v4773, %v4773
    %v4778 = vsel %vm4655, %v4776, 0.0
    %4779 = vadd.xlane.f32.xlu0 %v4778
    %v4780 = vpop.xlane.xlu0 %4779
    %v4781 = vsel %vm4655, %v4777, 0.0
    %4782 = vadd.xlane.f32.xlu0 %v4781
    %v4783 = vpop.xlane.xlu0 %4782
    %v4784 = vadd.f32 %v4780, %v4783
    %v4785 = vrot.slane %v4784, 4
    %v4786 = vadd.f32 %v4784, %v4785
    %v4787 = vrot.slane %v4786, 2
    %v4788 = vadd.f32 %v4786, %v4787
    %v4789 = vrot.slane %v4788, 1
    %v4790 = vadd.f32 %v4788, %v4789
    %v4791 = vadd.f32 %v4790, 0.0
    %v4792 = vmul.f32 %v4774, %v4774
    %v4793 = vmul.f32 %v4775, %v4775
    %v4794 = vsel %vm4655, %v4792, 0.0
    %4795 = vadd.xlane.f32.xlu0 %v4794
    %v4796 = vpop.xlane.xlu0 %4795
    %v4797 = vsel %vm4655, %v4793, 0.0
    %4798 = vadd.xlane.f32.xlu0 %v4797
    %v4799 = vpop.xlane.xlu0 %4798
    %v4800 = vadd.f32 %v4796, %v4799
    %v4801 = vrot.slane %v4800, 4
    %v4802 = vadd.f32 %v4800, %v4801
    %v4803 = vrot.slane %v4802, 2
    %v4804 = vadd.f32 %v4802, %v4803
    %v4805 = vrot.slane %v4804, 1
    %v4806 = vadd.f32 %v4804, %v4805
    %v4807 = vadd.f32 %v4791, %v4806
    %v4808 = vmul.f32 %v4807, 0.001953125
    %v4809 = vadd.f32 %v4808, 1e-05
    %v4810 = vrsqrt.pop %v4809
    %v4811 = vmul.f32 %v4772, %v4810
    %v4812 = vmul.f32 %v4773, %v4810
    %v4813 = vmax.f32 %v4811, 0.0
    %v4814 = vmax.f32 %v4812, 0.0
    %s4815 = scalar_lea.vmem [#allocation7], 16
    %4816 = vst.msk [vmem:[%s4815] sm:$0xff] %vm4655, %v4813
    %4817 = vst.msk [vmem:[%s4815 + $0x8] sm:$0xff] %vm4655, %v4814
    %v4818 = vmul.f32 %v4774, %v4810
    %v4819 = vmul.f32 %v4775, %v4810
    %v4820 = vmax.f32 %v4818, 0.0
    %v4821 = vmax.f32 %v4819, 0.0
    %s4822 = scalar_lea.vmem [#allocation7], 80
    %4823 = vst.msk [vmem:[%s4822] sm:$0xff] %vm4655, %v4820
    %4824 = vst.msk [vmem:[%s4822 + $0x8] sm:$0xff] %vm4655, %v4821
    %s4825 = sld [smem:[#allocation5 + $0x2]]
    %v4826 = vstv %s4825
    %v4827 = vadd.f32 %v2466, %v4826
    %v4828 = vadd.f32 %v2467, %v4826
    %v4829 = vadd.f32 %v4628, %v4826
    %v4830 = vadd.f32 %v4629, %v4826
    %v4831 = vsel %vm4655, %v4827, 0.0
    %4832 = vadd.xlane.f32.xlu0 %v4831
    %v4833 = vpop.xlane.xlu0 %4832
    %v4834 = vsel %vm4655, %v4828, 0.0
    %4835 = vadd.xlane.f32.xlu0 %v4834
    %v4836 = vpop.xlane.xlu0 %4835
    %v4837 = vadd.f32 %v4833, %v4836
    %v4838 = vrot.slane %v4837, 4
    %v4839 = vadd.f32 %v4837, %v4838
    %v4840 = vrot.slane %v4839, 2
    %v4841 = vadd.f32 %v4839, %v4840
    %v4842 = vrot.slane %v4841, 1
    %v4843 = vadd.f32 %v4841, %v4842
    %v4844 = vadd.f32 %v4843, 0.0
    %v4845 = vsel %vm4655, %v4829, 0.0
    %4846 = vadd.xlane.f32.xlu0 %v4845
    %v4847 = vpop.xlane.xlu0 %4846
    %v4848 = vsel %vm4655, %v4830, 0.0
    %4849 = vadd.xlane.f32.xlu0 %v4848
    %v4850 = vpop.xlane.xlu0 %4849
    %v4851 = vadd.f32 %v4847, %v4850
    %v4852 = vrot.slane %v4851, 4
    %v4853 = vadd.f32 %v4851, %v4852
    %v4854 = vrot.slane %v4853, 2
    %v4855 = vadd.f32 %v4853, %v4854
    %v4856 = vrot.slane %v4855, 1
    %v4857 = vadd.f32 %v4855, %v4856
    %v4858 = vadd.f32 %v4844, %v4857
    %v4859 = vmul.f32 %v4858, 0.001953125
    %v4860 = vsub.f32 %v4827, %v4859
    %v4861 = vsub.f32 %v4828, %v4859
    %v4862 = vsub.f32 %v4829, %v4859
    %v4863 = vsub.f32 %v4830, %v4859
    %v4864 = vmul.f32 %v4860, %v4860
    %v4865 = vmul.f32 %v4861, %v4861
    %v4866 = vsel %vm4655, %v4864, 0.0
    %4867 = vadd.xlane.f32.xlu0 %v4866
    %v4868 = vpop.xlane.xlu0 %4867
    %v4869 = vsel %vm4655, %v4865, 0.0
    %4870 = vadd.xlane.f32.xlu0 %v4869
    %v4871 = vpop.xlane.xlu0 %4870
    %v4872 = vadd.f32 %v4868, %v4871
    %v4873 = vrot.slane %v4872, 4
    %v4874 = vadd.f32 %v4872, %v4873
    %v4875 = vrot.slane %v4874, 2
    %v4876 = vadd.f32 %v4874, %v4875
    %v4877 = vrot.slane %v4876, 1
    %v4878 = vadd.f32 %v4876, %v4877
    %v4879 = vadd.f32 %v4878, 0.0
    %v4880 = vmul.f32 %v4862, %v4862
    %v4881 = vmul.f32 %v4863, %v4863
    %v4882 = vsel %vm4655, %v4880, 0.0
    %4883 = vadd.xlane.f32.xlu0 %v4882
    %v4884 = vpop.xlane.xlu0 %4883
    %v4885 = vsel %vm4655, %v4881, 0.0
    %4886 = vadd.xlane.f32.xlu0 %v4885
    %v4887 = vpop.xlane.xlu0 %4886
    %v4888 = vadd.f32 %v4884, %v4887
    %v4889 = vrot.slane %v4888, 4
    %v4890 = vadd.f32 %v4888, %v4889
    %v4891 = vrot.slane %v4890, 2
    %v4892 = vadd.f32 %v4890, %v4891
    %v4893 = vrot.slane %v4892, 1
    %v4894 = vadd.f32 %v4892, %v4893
    %v4895 = vadd.f32 %v4879, %v4894
    %v4896 = vmul.f32 %v4895, 0.001953125
    %v4897 = vadd.f32 %v4896, 1e-05
    %v4898 = vrsqrt.pop %v4897
    %v4899 = vmul.f32 %v4860, %v4898
    %v4900 = vmul.f32 %v4861, %v4898
    %v4901 = vmax.f32 %v4899, 0.0
    %v4902 = vmax.f32 %v4900, 0.0
    %s4903 = scalar_lea.vmem [#allocation7], 32
    %4904 = vst.msk [vmem:[%s4903] sm:$0xff] %vm4655, %v4901
    %4905 = vst.msk [vmem:[%s4903 + $0x8] sm:$0xff] %vm4655, %v4902
    %v4906 = vmul.f32 %v4862, %v4898
    %v4907 = vmul.f32 %v4863, %v4898
    %v4908 = vmax.f32 %v4906, 0.0
    %v4909 = vmax.f32 %v4907, 0.0
    %s4910 = scalar_lea.vmem [#allocation7], 96
    %4911 = vst.msk [vmem:[%s4910] sm:$0xff] %vm4655, %v4908
    %4912 = vst.msk [vmem:[%s4910 + $0x8] sm:$0xff] %vm4655, %v4909
    %s4913 = sld [smem:[#allocation5 + $0x3]]
    %v4914 = vstv %s4913
    %v4915 = vadd.f32 %v2487, %v4914
    %v4916 = vadd.f32 %v2488, %v4914
    %v4917 = vadd.f32 %v4647, %v4914
    %v4918 = vadd.f32 %v4648, %v4914
    %v4919 = vsel %vm4655, %v4915, 0.0
    %4920 = vadd.xlane.f32.xlu0 %v4919
    %v4921 = vpop.xlane.xlu0 %4920
    %v4922 = vsel %vm4655, %v4916, 0.0
    %4923 = vadd.xlane.f32.xlu0 %v4922
    %v4924 = vpop.xlane.xlu0 %4923
    %v4925 = vadd.f32 %v4921, %v4924
    %v4926 = vrot.slane %v4925, 4
    %v4927 = vadd.f32 %v4925, %v4926
    %v4928 = vrot.slane %v4927, 2
    %v4929 = vadd.f32 %v4927, %v4928
    %v4930 = vrot.slane %v4929, 1
    %v4931 = vadd.f32 %v4929, %v4930
    %v4932 = vadd.f32 %v4931, 0.0
    %v4933 = vsel %vm4655, %v4917, 0.0
    %4934 = vadd.xlane.f32.xlu0 %v4933
    %v4935 = vpop.xlane.xlu0 %4934
    %v4936 = vsel %vm4655, %v4918, 0.0
    %4937 = vadd.xlane.f32.xlu0 %v4936
    %v4938 = vpop.xlane.xlu0 %4937
    %v4939 = vadd.f32 %v4935, %v4938
    %v4940 = vrot.slane %v4939, 4
    %v4941 = vadd.f32 %v4939, %v4940
    %v4942 = vrot.slane %v4941, 2
    %v4943 = vadd.f32 %v4941, %v4942
    %v4944 = vrot.slane %v4943, 1
    %v4945 = vadd.f32 %v4943, %v4944
    %v4946 = vadd.f32 %v4932, %v4945
    %v4947 = vmul.f32 %v4946, 0.001953125
    %v4948 = vsub.f32 %v4915, %v4947
    %v4949 = vsub.f32 %v4916, %v4947
    %v4950 = vsub.f32 %v4917, %v4947
    %v4951 = vsub.f32 %v4918, %v4947
    %v4952 = vmul.f32 %v4948, %v4948
    %v4953 = vmul.f32 %v4949, %v4949
    %v4954 = vsel %vm4655, %v4952, 0.0
    %4955 = vadd.xlane.f32.xlu0 %v4954
    %v4956 = vpop.xlane.xlu0 %4955
    %v4957 = vsel %vm4655, %v4953, 0.0
    %4958 = vadd.xlane.f32.xlu0 %v4957
    %v4959 = vpop.xlane.xlu0 %4958
    %v4960 = vadd.f32 %v4956, %v4959
    %v4961 = vrot.slane %v4960, 4
    %v4962 = vadd.f32 %v4960, %v4961
    %v4963 = vrot.slane %v4962, 2
    %v4964 = vadd.f32 %v4962, %v4963
    %v4965 = vrot.slane %v4964, 1
    %v4966 = vadd.f32 %v4964, %v4965
    %v4967 = vadd.f32 %v4966, 0.0
    %v4968 = vmul.f32 %v4950, %v4950
    %v4969 = vmul.f32 %v4951, %v4951
    %v4970 = vsel %vm4655, %v4968, 0.0
    %4971 = vadd.xlane.f32.xlu0 %v4970
    %v4972 = vpop.xlane.xlu0 %4971
    %v4973 = vsel %vm4655, %v4969, 0.0
    %4974 = vadd.xlane.f32.xlu0 %v4973
    %v4975 = vpop.xlane.xlu0 %4974
    %v4976 = vadd.f32 %v4972, %v4975
    %v4977 = vrot.slane %v4976, 4
    %v4978 = vadd.f32 %v4976, %v4977
    %v4979 = vrot.slane %v4978, 2
    %v4980 = vadd.f32 %v4978, %v4979
    %v4981 = vrot.slane %v4980, 1
    %v4982 = vadd.f32 %v4980, %v4981
    %v4983 = vadd.f32 %v4967, %v4982
    %v4984 = vmul.f32 %v4983, 0.001953125
    %v4985 = vadd.f32 %v4984, 1e-05
    %v4986 = vrsqrt.pop %v4985
    %v4987 = vmul.f32 %v4948, %v4986
    %v4988 = vmul.f32 %v4949, %v4986
    %v4989 = vmax.f32 %v4987, 0.0
    %v4990 = vmax.f32 %v4988, 0.0
    %s4991 = scalar_lea.vmem [#allocation7], 48
    %4992 = vst.msk [vmem:[%s4991] sm:$0xff] %vm4655, %v4989
    %4993 = vst.msk [vmem:[%s4991 + $0x8] sm:$0xff] %vm4655, %v4990
    %v4994 = vmul.f32 %v4950, %v4986
    %v4995 = vmul.f32 %v4951, %v4986
    %v4996 = vmax.f32 %v4994, 0.0
    %v4997 = vmax.f32 %v4995, 0.0
    %s4998 = scalar_lea.vmem [#allocation7], 112
    %4999 = vst.msk [vmem:[%s4998] sm:$0xff] %vm4655, %v4996
    %5000 = vst.msk [vmem:[%s4998 + $0x8] sm:$0xff] %vm4655, %v4997
    // Predicated region
    $region22: #{tpu_custom_call.1} parent=1 // pred_check
      _
    $region23: #{tpu_custom_call.1} parent=1 // pred_check_branch
      %5002 = sbr.rel (0) target = $region25
    $region24: #{tpu_custom_call.1} parent=1 // pred_region
      %s5004 = ssub.s32 2048, 2048
      %5005 = vsyncadd [#allocation3], %s5004
      %s5006 = sshll.u32 [#allocation7], 4
      %s5007 = int_to_ptr.vmem [resolvable:$true] %s5006
      %5012 = dma.vmem_to_hbm [thread:$0]  %s5007, 2048, %s3, [#allocation3], 128, 128, 8
    $region25: #{tpu_custom_call.1} parent=1 // pred_fallthru
      _
    // Predicated region
    $region26: #{tpu_custom_call.1} parent=1 // pred_check
      _
    $region27: #{tpu_custom_call.1} parent=1 // pred_check_branch
      %5014 = sbr.rel (0) target = $region29
    $region28: #{tpu_custom_call.1} parent=1 // pred_region
      %5015 = dma.done [#allocation3], 2048
    $region29: #{tpu_custom_call.1} parent=1 // pred_fallthru
      _
    %5016 = vsyncpa [#allocation3], 1
    %5017 = vsyncpa [#allocation4], 1
    %5018 = vsyncpa [#allocation6], 1

</llo_original>
